<compile_context>
chip_gen: v6e
topology: v6e:2x2x1
jax: 0.10.0
libtpu: 0.0.40
codegen_flags: <defaults>
</compile_context>

<pallas_src>
import functools

import jax
import jax.numpy as jnp
from jax import lax
from jax.experimental import pallas as pl
from jax.experimental.pallas import tpu as pltpu


def block_kernel(x_pad_ref, dw_w_ref, dw_b_ref,
                 ln_g_ref, ln_b_ref, w1_ref, b1_ref, w2_ref, b2_ref,
                 o_ref, *, TH, W, C, eps):
    # x_pad_ref: (1, H+6, W+6, C)  zero-padded NHWC image, resident across slabs
    # o_ref:     (1, TH, W, C)     output row slab
    i = pl.program_id(1)
    row0 = pl.multiple_of(i * TH, TH)

    dw_w = dw_w_ref[...]            # (49, C) depthwise 7x7 weights
    dw_b = dw_b_ref[0, :]           # (C,)

    # ---- depthwise 7x7 conv, padding=3 ----
    # kh slice hoisted (leading-dim slice of the resident block is cheap);
    # the 7 kw windows move only along the sublane (W) axis within that slab.
    acc = jnp.zeros((TH, W, C), jnp.float32)
    for kh in range(7):
        rows = x_pad_ref[0, pl.ds(row0 + kh, TH), :, :]     # (TH, W+6, C)
        for kw in range(7):
            acc = acc + rows[:, kw:kw + W, :] * dw_w[kh * 7 + kw, :]
    acc = acc + dw_b

    # ---- LayerNorm over channels (biased variance, PyTorch semantics) ----
    mean = jnp.mean(acc, axis=-1, keepdims=True)
    var = jnp.mean((acc - mean) ** 2, axis=-1, keepdims=True)
    xn = (acc - mean) * lax.rsqrt(var + eps)
    xn = xn * ln_g_ref[0, :] + ln_b_ref[0, :]

    # ---- FFN: per-pixel 1x1 convs as bf16 MXU matmuls with f32 accumulation ----
    xf = xn.reshape(TH * W, C).astype(jnp.bfloat16)
    h = jnp.dot(xf, w1_ref[...], preferred_element_type=jnp.float32) + b1_ref[0, :]
    # exact (erf) GELU in f32 to match nn.GELU() default
    h = 0.5 * h * (1.0 + lax.erf(h * 0.7071067811865476))
    y = jnp.dot(h.astype(jnp.bfloat16), w2_ref[...],
                preferred_element_type=jnp.float32) + b2_ref[0, :]
    y = y.reshape(TH, W, C)

    # ---- residual: interior of the padded tile (no separate residual input) ----
    res_rows = x_pad_ref[0, pl.ds(row0 + 3, TH), :, :]      # (TH, W+6, C)
    res = res_rows[:, 3:3 + W, :]                           # (TH, W,   C)

    o_ref[0] = res + y


def block_forward(x_nchw, params, *, eps=1e-6, tile_h=8):
    dw_w, dw_b, ln_g, ln_b, w1, b1, w2, b2 = params
    B, C, H, W = x_nchw.shape
    HID = w1.shape[1]

    TH = tile_h if (H % tile_h == 0) else H
    n_slabs = H // TH

    # glue: NCHW -> NHWC + spatial zero padding (pad=3 for the 7x7 conv);
    # this is the only copy of the activations shipped to the kernel.
    x = jnp.transpose(x_nchw, (0, 2, 3, 1)).astype(jnp.float32)   # (B,H,W,C)
    x_pad = jnp.pad(x, ((0, 0), (3, 3), (3, 3), (0, 0)))

    # ship the FFN weights in bf16 (halves weight DMA; MXU runs bf16)
    w1b = w1.astype(jnp.bfloat16)
    w2b = w2.astype(jnp.bfloat16)

    kern = functools.partial(block_kernel, TH=TH, W=W, C=C, eps=eps)
    out_nhwc = pl.pallas_call(
        kern,
        out_shape=jax.ShapeDtypeStruct((B, H, W, C), jnp.float32),
        grid=(B, n_slabs),
        in_specs=[
            # padded image: constant block index over the slab axis -> loaded
            # once per image and kept resident while slabs iterate.
            pl.BlockSpec((1, H + 6, W + 6, C), lambda b, i: (b, 0, 0, 0)),
            pl.BlockSpec((49, C), lambda b, i: (0, 0)),
            pl.BlockSpec((1, C), lambda b, i: (0, 0)),
            pl.BlockSpec((1, C), lambda b, i: (0, 0)),
            pl.BlockSpec((1, C), lambda b, i: (0, 0)),
            pl.BlockSpec((C, HID), lambda b, i: (0, 0)),
            pl.BlockSpec((1, HID), lambda b, i: (0, 0)),
            pl.BlockSpec((HID, C), lambda b, i: (0, 0)),
            pl.BlockSpec((1, C), lambda b, i: (0, 0)),
        ],
        out_specs=pl.BlockSpec((1, TH, W, C), lambda b, i: (b, i, 0, 0)),
        compiler_params=pltpu.CompilerParams(
            dimension_semantics=("parallel", "parallel"),
            vmem_limit_bytes=48 * 1024 * 1024),
    )(x_pad, dw_w, dw_b, ln_g, ln_b, w1b, b1, w2b, b2)

    return jnp.transpose(out_nhwc, (0, 3, 1, 2))


def ref_forward(x_nchw, params, *, eps=1e-6):
    """Pure-JAX f32 reference for correctness checking."""
    dw_w, dw_b, ln_g, ln_b, w1, b1, w2, b2 = params
    x = jnp.transpose(x_nchw, (0, 2, 3, 1)).astype(jnp.float32)
    B, H, W, C = x.shape
    xp = jnp.pad(x, ((0, 0), (3, 3), (3, 3), (0, 0)))
    w77 = dw_w.reshape(7, 7, C)
    acc = jnp.zeros_like(x)
    for kh in range(7):
        for kw in range(7):
            acc = acc + xp[:, kh:kh + H, kw:kw + W, :] * w77[kh, kw]
    acc = acc + dw_b[0]
    mean = acc.mean(-1, keepdims=True)
    var = ((acc - mean) ** 2).mean(-1, keepdims=True)
    xn = (acc - mean) / jnp.sqrt(var + eps) * ln_g[0] + ln_b[0]
    h = xn @ w1 + b1[0]
    h = jax.nn.gelu(h, approximate=False)
    y = h @ w2 + b2[0]
    return jnp.transpose(x + y, (0, 3, 1, 2))


def init_params(key, d_model, hidden_size):
    ks = jax.random.split(key, 6)
    dw_w = 0.1 * jax.random.normal(ks[0], (49, d_model), jnp.float32)      # (7*7, C)
    dw_b = 0.1 * jax.random.normal(ks[1], (1, d_model), jnp.float32)
    ln_g = jnp.ones((1, d_model), jnp.float32)
    ln_b = jnp.zeros((1, d_model), jnp.float32)
    w1 = 0.1 * jax.random.normal(ks[2], (d_model, hidden_size), jnp.float32)
    b1 = 0.1 * jax.random.normal(ks[3], (1, hidden_size), jnp.float32)
    w2 = 0.1 * jax.random.normal(ks[4], (hidden_size, d_model), jnp.float32)
    b2 = 0.1 * jax.random.normal(ks[5], (1, d_model), jnp.float32)
    return (dw_w, dw_b, ln_g, ln_b, w1, b1, w2, b2)


if __name__ == "__main__":
    B, C, H, W = 2, 32, 16, 16
    HID = 4 * C

    key = jax.random.PRNGKey(0)
    k_x, k_p = jax.random.split(key)
    x = jax.random.normal(k_x, (B, C, H, W), jnp.float32)   # NCHW, like PyTorch
    params = init_params(k_p, C, HID)

    out = jax.block_until_ready(block_forward(x, params))
    ref = jax.block_until_ready(ref_forward(x, params))

    assert out.shape == (B, C, H, W)
    # bf16 MXU matmuls in the kernel vs f32 reference -> loosened tolerance
    assert jnp.max(jnp.abs(out - ref)) < 3e-2, "mismatch vs. JAX reference"
    print("KERNEL_OK")
</pallas_src>

<mosaic_0001>
module attributes {stable_mosaic.version = 11 : i64} {
  func.func @block_kernel(%arg0: i32, %arg1: i32, %arg2: memref<1x22x22x32xf32, #tpu.memory_space<vmem>>, %arg3: memref<49x32xf32, #tpu.memory_space<vmem>>, %arg4: memref<1x32xf32, #tpu.memory_space<vmem>>, %arg5: memref<1x32xf32, #tpu.memory_space<vmem>>, %arg6: memref<1x32xf32, #tpu.memory_space<vmem>>, %arg7: memref<32x128xbf16, #tpu.memory_space<vmem>>, %arg8: memref<1x128xf32, #tpu.memory_space<vmem>>, %arg9: memref<128x32xbf16, #tpu.memory_space<vmem>>, %arg10: memref<1x32xf32, #tpu.memory_space<vmem>>, %arg11: memref<1x8x16x32xf32, #tpu.memory_space<vmem>>) attributes {dimension_semantics = [#tpu.dimension_semantics<parallel>, #tpu.dimension_semantics<parallel>], iteration_bounds = array<i64: 2, 2>, scalar_prefetch = 0 : i64, scratch_operands = 0 : i64, tpu.core_type = #tpu.core_type<tc>, window_params = [{transform_indices = @transform_0, window_bounds = array<i64: 1, 22, 22, 32>}, {pipeline_mode = #tpu.pipeline_mode<synchronous>, transform_indices = @transform_1, window_bounds = array<i64: 49, 32>}, {pipeline_mode = #tpu.pipeline_mode<synchronous>, transform_indices = @transform_2, window_bounds = array<i64: 1, 32>}, {pipeline_mode = #tpu.pipeline_mode<synchronous>, transform_indices = @transform_3, window_bounds = array<i64: 1, 32>}, {pipeline_mode = #tpu.pipeline_mode<synchronous>, transform_indices = @transform_4, window_bounds = array<i64: 1, 32>}, {pipeline_mode = #tpu.pipeline_mode<synchronous>, transform_indices = @transform_5, window_bounds = array<i64: 32, 128>}, {pipeline_mode = #tpu.pipeline_mode<synchronous>, transform_indices = @transform_6, window_bounds = array<i64: 1, 128>}, {pipeline_mode = #tpu.pipeline_mode<synchronous>, transform_indices = @transform_7, window_bounds = array<i64: 128, 32>}, {pipeline_mode = #tpu.pipeline_mode<synchronous>, transform_indices = @transform_8, window_bounds = array<i64: 1, 32>}, {transform_indices = @transform_9, window_bounds = array<i64: 1, 8, 16, 32>}]} {
    %c8_i32 = arith.constant 8 : i32
    %0 = arith.muli %arg1, %c8_i32 : i32
    %1 = tpu.assume_multiple %0, 8 : i32
    %c0 = arith.constant 0 : index
    %c0_0 = arith.constant 0 : index
    %2 = vector.load %arg3[%c0, %c0_0] : memref<49x32xf32, #tpu.memory_space<vmem>>, vector<49x32xf32>
    %c0_1 = arith.constant 0 : index
    %c0_2 = arith.constant 0 : index
    %3 = vector.load %arg4[%c0_1, %c0_2] : memref<1x32xf32, #tpu.memory_space<vmem>>, vector<1x32xf32>
    %4 = vector.shape_cast %3 : vector<1x32xf32> to vector<32xf32>
    %cst = arith.constant 0.000000e+00 : f32
    %5 = vector.broadcast %cst : f32 to vector<8x16x32xf32>
    %c0_i32 = arith.constant 0 : i32
    %6 = arith.addi %1, %c0_i32 : i32
    %c0_3 = arith.constant 0 : index
    %7 = arith.index_cast %6 : i32 to index
    %c0_4 = arith.constant 0 : index
    %c0_5 = arith.constant 0 : index
    %8 = vector.load %arg2[%c0_3, %7, %c0_4, %c0_5] : memref<1x22x22x32xf32, #tpu.memory_space<vmem>>, vector<1x8x22x32xf32>
    %9 = vector.shape_cast %8 : vector<1x8x22x32xf32> to vector<8x22x32xf32>
    %10 = vector.extract_strided_slice %9 {offsets = [0, 0, 0], sizes = [8, 16, 32], strides = [1, 1, 1]} : vector<8x22x32xf32> to vector<8x16x32xf32>
    %11 = vector.extract_strided_slice %2 {offsets = [0, 0], sizes = [1, 32], strides = [1, 1]} : vector<49x32xf32> to vector<1x32xf32>
    %12 = vector.shape_cast %11 : vector<1x32xf32> to vector<32xf32>
    %13 = vector.shape_cast %12 : vector<32xf32> to vector<1x1x32xf32>
    %14 = vector.broadcast %13 : vector<1x1x32xf32> to vector<8x16x32xf32>
    %15 = arith.mulf %10, %14 : vector<8x16x32xf32>
    %16 = arith.addf %5, %15 : vector<8x16x32xf32>
    %17 = vector.extract_strided_slice %9 {offsets = [0, 1, 0], sizes = [8, 16, 32], strides = [1, 1, 1]} : vector<8x22x32xf32> to vector<8x16x32xf32>
    %18 = vector.extract_strided_slice %2 {offsets = [1, 0], sizes = [1, 32], strides = [1, 1]} : vector<49x32xf32> to vector<1x32xf32>
    %19 = vector.shape_cast %18 : vector<1x32xf32> to vector<32xf32>
    %20 = vector.shape_cast %19 : vector<32xf32> to vector<1x1x32xf32>
    %21 = vector.broadcast %20 : vector<1x1x32xf32> to vector<8x16x32xf32>
    %22 = arith.mulf %17, %21 : vector<8x16x32xf32>
    %23 = arith.addf %16, %22 : vector<8x16x32xf32>
    %24 = vector.extract_strided_slice %9 {offsets = [0, 2, 0], sizes = [8, 16, 32], strides = [1, 1, 1]} : vector<8x22x32xf32> to vector<8x16x32xf32>
    %25 = vector.extract_strided_slice %2 {offsets = [2, 0], sizes = [1, 32], strides = [1, 1]} : vector<49x32xf32> to vector<1x32xf32>
    %26 = vector.shape_cast %25 : vector<1x32xf32> to vector<32xf32>
    %27 = vector.shape_cast %26 : vector<32xf32> to vector<1x1x32xf32>
    %28 = vector.broadcast %27 : vector<1x1x32xf32> to vector<8x16x32xf32>
    %29 = arith.mulf %24, %28 : vector<8x16x32xf32>
    %30 = arith.addf %23, %29 : vector<8x16x32xf32>
    %31 = vector.extract_strided_slice %9 {offsets = [0, 3, 0], sizes = [8, 16, 32], strides = [1, 1, 1]} : vector<8x22x32xf32> to vector<8x16x32xf32>
    %32 = vector.extract_strided_slice %2 {offsets = [3, 0], sizes = [1, 32], strides = [1, 1]} : vector<49x32xf32> to vector<1x32xf32>
    %33 = vector.shape_cast %32 : vector<1x32xf32> to vector<32xf32>
    %34 = vector.shape_cast %33 : vector<32xf32> to vector<1x1x32xf32>
    %35 = vector.broadcast %34 : vector<1x1x32xf32> to vector<8x16x32xf32>
    %36 = arith.mulf %31, %35 : vector<8x16x32xf32>
    %37 = arith.addf %30, %36 : vector<8x16x32xf32>
    %38 = vector.extract_strided_slice %9 {offsets = [0, 4, 0], sizes = [8, 16, 32], strides = [1, 1, 1]} : vector<8x22x32xf32> to vector<8x16x32xf32>
    %39 = vector.extract_strided_slice %2 {offsets = [4, 0], sizes = [1, 32], strides = [1, 1]} : vector<49x32xf32> to vector<1x32xf32>
    %40 = vector.shape_cast %39 : vector<1x32xf32> to vector<32xf32>
    %41 = vector.shape_cast %40 : vector<32xf32> to vector<1x1x32xf32>
    %42 = vector.broadcast %41 : vector<1x1x32xf32> to vector<8x16x32xf32>
    %43 = arith.mulf %38, %42 : vector<8x16x32xf32>
    %44 = arith.addf %37, %43 : vector<8x16x32xf32>
    %45 = vector.extract_strided_slice %9 {offsets = [0, 5, 0], sizes = [8, 16, 32], strides = [1, 1, 1]} : vector<8x22x32xf32> to vector<8x16x32xf32>
    %46 = vector.extract_strided_slice %2 {offsets = [5, 0], sizes = [1, 32], strides = [1, 1]} : vector<49x32xf32> to vector<1x32xf32>
    %47 = vector.shape_cast %46 : vector<1x32xf32> to vector<32xf32>
    %48 = vector.shape_cast %47 : vector<32xf32> to vector<1x1x32xf32>
    %49 = vector.broadcast %48 : vector<1x1x32xf32> to vector<8x16x32xf32>
    %50 = arith.mulf %45, %49 : vector<8x16x32xf32>
    %51 = arith.addf %44, %50 : vector<8x16x32xf32>
    %52 = vector.extract_strided_slice %9 {offsets = [0, 6, 0], sizes = [8, 16, 32], strides = [1, 1, 1]} : vector<8x22x32xf32> to vector<8x16x32xf32>
    %53 = vector.extract_strided_slice %2 {offsets = [6, 0], sizes = [1, 32], strides = [1, 1]} : vector<49x32xf32> to vector<1x32xf32>
    %54 = vector.shape_cast %53 : vector<1x32xf32> to vector<32xf32>
    %55 = vector.shape_cast %54 : vector<32xf32> to vector<1x1x32xf32>
    %56 = vector.broadcast %55 : vector<1x1x32xf32> to vector<8x16x32xf32>
    %57 = arith.mulf %52, %56 : vector<8x16x32xf32>
    %58 = arith.addf %51, %57 : vector<8x16x32xf32>
    %c1_i32 = arith.constant 1 : i32
    %59 = arith.addi %1, %c1_i32 : i32
    %c0_6 = arith.constant 0 : index
    %60 = arith.index_cast %59 : i32 to index
    %c0_7 = arith.constant 0 : index
    %c0_8 = arith.constant 0 : index
    %61 = vector.load %arg2[%c0_6, %60, %c0_7, %c0_8] : memref<1x22x22x32xf32, #tpu.memory_space<vmem>>, vector<1x8x22x32xf32>
    %62 = vector.shape_cast %61 : vector<1x8x22x32xf32> to vector<8x22x32xf32>
    %63 = vector.extract_strided_slice %62 {offsets = [0, 0, 0], sizes = [8, 16, 32], strides = [1, 1, 1]} : vector<8x22x32xf32> to vector<8x16x32xf32>
    %64 = vector.extract_strided_slice %2 {offsets = [7, 0], sizes = [1, 32], strides = [1, 1]} : vector<49x32xf32> to vector<1x32xf32>
    %65 = vector.shape_cast %64 : vector<1x32xf32> to vector<32xf32>
    %66 = vector.shape_cast %65 : vector<32xf32> to vector<1x1x32xf32>
    %67 = vector.broadcast %66 : vector<1x1x32xf32> to vector<8x16x32xf32>
    %68 = arith.mulf %63, %67 : vector<8x16x32xf32>
    %69 = arith.addf %58, %68 : vector<8x16x32xf32>
    %70 = vector.extract_strided_slice %62 {offsets = [0, 1, 0], sizes = [8, 16, 32], strides = [1, 1, 1]} : vector<8x22x32xf32> to vector<8x16x32xf32>
    %71 = vector.extract_strided_slice %2 {offsets = [8, 0], sizes = [1, 32], strides = [1, 1]} : vector<49x32xf32> to vector<1x32xf32>
    %72 = vector.shape_cast %71 : vector<1x32xf32> to vector<32xf32>
    %73 = vector.shape_cast %72 : vector<32xf32> to vector<1x1x32xf32>
    %74 = vector.broadcast %73 : vector<1x1x32xf32> to vector<8x16x32xf32>
    %75 = arith.mulf %70, %74 : vector<8x16x32xf32>
    %76 = arith.addf %69, %75 : vector<8x16x32xf32>
    %77 = vector.extract_strided_slice %62 {offsets = [0, 2, 0], sizes = [8, 16, 32], strides = [1, 1, 1]} : vector<8x22x32xf32> to vector<8x16x32xf32>
    %78 = vector.extract_strided_slice %2 {offsets = [9, 0], sizes = [1, 32], strides = [1, 1]} : vector<49x32xf32> to vector<1x32xf32>
    %79 = vector.shape_cast %78 : vector<1x32xf32> to vector<32xf32>
    %80 = vector.shape_cast %79 : vector<32xf32> to vector<1x1x32xf32>
    %81 = vector.broadcast %80 : vector<1x1x32xf32> to vector<8x16x32xf32>
    %82 = arith.mulf %77, %81 : vector<8x16x32xf32>
    %83 = arith.addf %76, %82 : vector<8x16x32xf32>
    %84 = vector.extract_strided_slice %62 {offsets = [0, 3, 0], sizes = [8, 16, 32], strides = [1, 1, 1]} : vector<8x22x32xf32> to vector<8x16x32xf32>
    %85 = vector.extract_strided_slice %2 {offsets = [10, 0], sizes = [1, 32], strides = [1, 1]} : vector<49x32xf32> to vector<1x32xf32>
    %86 = vector.shape_cast %85 : vector<1x32xf32> to vector<32xf32>
    %87 = vector.shape_cast %86 : vector<32xf32> to vector<1x1x32xf32>
    %88 = vector.broadcast %87 : vector<1x1x32xf32> to vector<8x16x32xf32>
    %89 = arith.mulf %84, %88 : vector<8x16x32xf32>
    %90 = arith.addf %83, %89 : vector<8x16x32xf32>
    %91 = vector.extract_strided_slice %62 {offsets = [0, 4, 0], sizes = [8, 16, 32], strides = [1, 1, 1]} : vector<8x22x32xf32> to vector<8x16x32xf32>
    %92 = vector.extract_strided_slice %2 {offsets = [11, 0], sizes = [1, 32], strides = [1, 1]} : vector<49x32xf32> to vector<1x32xf32>
    %93 = vector.shape_cast %92 : vector<1x32xf32> to vector<32xf32>
    %94 = vector.shape_cast %93 : vector<32xf32> to vector<1x1x32xf32>
    %95 = vector.broadcast %94 : vector<1x1x32xf32> to vector<8x16x32xf32>
    %96 = arith.mulf %91, %95 : vector<8x16x32xf32>
    %97 = arith.addf %90, %96 : vector<8x16x32xf32>
    %98 = vector.extract_strided_slice %62 {offsets = [0, 5, 0], sizes = [8, 16, 32], strides = [1, 1, 1]} : vector<8x22x32xf32> to vector<8x16x32xf32>
    %99 = vector.extract_strided_slice %2 {offsets = [12, 0], sizes = [1, 32], strides = [1, 1]} : vector<49x32xf32> to vector<1x32xf32>
    %100 = vector.shape_cast %99 : vector<1x32xf32> to vector<32xf32>
    %101 = vector.shape_cast %100 : vector<32xf32> to vector<1x1x32xf32>
    %102 = vector.broadcast %101 : vector<1x1x32xf32> to vector<8x16x32xf32>
    %103 = arith.mulf %98, %102 : vector<8x16x32xf32>
    %104 = arith.addf %97, %103 : vector<8x16x32xf32>
    %105 = vector.extract_strided_slice %62 {offsets = [0, 6, 0], sizes = [8, 16, 32], strides = [1, 1, 1]} : vector<8x22x32xf32> to vector<8x16x32xf32>
    %106 = vector.extract_strided_slice %2 {offsets = [13, 0], sizes = [1, 32], strides = [1, 1]} : vector<49x32xf32> to vector<1x32xf32>
    %107 = vector.shape_cast %106 : vector<1x32xf32> to vector<32xf32>
    %108 = vector.shape_cast %107 : vector<32xf32> to vector<1x1x32xf32>
    %109 = vector.broadcast %108 : vector<1x1x32xf32> to vector<8x16x32xf32>
    %110 = arith.mulf %105, %109 : vector<8x16x32xf32>
    %111 = arith.addf %104, %110 : vector<8x16x32xf32>
    %c2_i32 = arith.constant 2 : i32
    %112 = arith.addi %1, %c2_i32 : i32
    %c0_9 = arith.constant 0 : index
    %113 = arith.index_cast %112 : i32 to index
    %c0_10 = arith.constant 0 : index
    %c0_11 = arith.constant 0 : index
    %114 = vector.load %arg2[%c0_9, %113, %c0_10, %c0_11] : memref<1x22x22x32xf32, #tpu.memory_space<vmem>>, vector<1x8x22x32xf32>
    %115 = vector.shape_cast %114 : vector<1x8x22x32xf32> to vector<8x22x32xf32>
    %116 = vector.extract_strided_slice %115 {offsets = [0, 0, 0], sizes = [8, 16, 32], strides = [1, 1, 1]} : vector<8x22x32xf32> to vector<8x16x32xf32>
    %117 = vector.extract_strided_slice %2 {offsets = [14, 0], sizes = [1, 32], strides = [1, 1]} : vector<49x32xf32> to vector<1x32xf32>
    %118 = vector.shape_cast %117 : vector<1x32xf32> to vector<32xf32>
    %119 = vector.shape_cast %118 : vector<32xf32> to vector<1x1x32xf32>
    %120 = vector.broadcast %119 : vector<1x1x32xf32> to vector<8x16x32xf32>
    %121 = arith.mulf %116, %120 : vector<8x16x32xf32>
    %122 = arith.addf %111, %121 : vector<8x16x32xf32>
    %123 = vector.extract_strided_slice %115 {offsets = [0, 1, 0], sizes = [8, 16, 32], strides = [1, 1, 1]} : vector<8x22x32xf32> to vector<8x16x32xf32>
    %124 = vector.extract_strided_slice %2 {offsets = [15, 0], sizes = [1, 32], strides = [1, 1]} : vector<49x32xf32> to vector<1x32xf32>
    %125 = vector.shape_cast %124 : vector<1x32xf32> to vector<32xf32>
    %126 = vector.shape_cast %125 : vector<32xf32> to vector<1x1x32xf32>
    %127 = vector.broadcast %126 : vector<1x1x32xf32> to vector<8x16x32xf32>
    %128 = arith.mulf %123, %127 : vector<8x16x32xf32>
    %129 = arith.addf %122, %128 : vector<8x16x32xf32>
    %130 = vector.extract_strided_slice %115 {offsets = [0, 2, 0], sizes = [8, 16, 32], strides = [1, 1, 1]} : vector<8x22x32xf32> to vector<8x16x32xf32>
    %131 = vector.extract_strided_slice %2 {offsets = [16, 0], sizes = [1, 32], strides = [1, 1]} : vector<49x32xf32> to vector<1x32xf32>
    %132 = vector.shape_cast %131 : vector<1x32xf32> to vector<32xf32>
    %133 = vector.shape_cast %132 : vector<32xf32> to vector<1x1x32xf32>
    %134 = vector.broadcast %133 : vector<1x1x32xf32> to vector<8x16x32xf32>
    %135 = arith.mulf %130, %134 : vector<8x16x32xf32>
    %136 = arith.addf %129, %135 : vector<8x16x32xf32>
    %137 = vector.extract_strided_slice %115 {offsets = [0, 3, 0], sizes = [8, 16, 32], strides = [1, 1, 1]} : vector<8x22x32xf32> to vector<8x16x32xf32>
    %138 = vector.extract_strided_slice %2 {offsets = [17, 0], sizes = [1, 32], strides = [1, 1]} : vector<49x32xf32> to vector<1x32xf32>
    %139 = vector.shape_cast %138 : vector<1x32xf32> to vector<32xf32>
    %140 = vector.shape_cast %139 : vector<32xf32> to vector<1x1x32xf32>
    %141 = vector.broadcast %140 : vector<1x1x32xf32> to vector<8x16x32xf32>
    %142 = arith.mulf %137, %141 : vector<8x16x32xf32>
    %143 = arith.addf %136, %142 : vector<8x16x32xf32>
    %144 = vector.extract_strided_slice %115 {offsets = [0, 4, 0], sizes = [8, 16, 32], strides = [1, 1, 1]} : vector<8x22x32xf32> to vector<8x16x32xf32>
    %145 = vector.extract_strided_slice %2 {offsets = [18, 0], sizes = [1, 32], strides = [1, 1]} : vector<49x32xf32> to vector<1x32xf32>
    %146 = vector.shape_cast %145 : vector<1x32xf32> to vector<32xf32>
    %147 = vector.shape_cast %146 : vector<32xf32> to vector<1x1x32xf32>
    %148 = vector.broadcast %147 : vector<1x1x32xf32> to vector<8x16x32xf32>
    %149 = arith.mulf %144, %148 : vector<8x16x32xf32>
    %150 = arith.addf %143, %149 : vector<8x16x32xf32>
    %151 = vector.extract_strided_slice %115 {offsets = [0, 5, 0], sizes = [8, 16, 32], strides = [1, 1, 1]} : vector<8x22x32xf32> to vector<8x16x32xf32>
    %152 = vector.extract_strided_slice %2 {offsets = [19, 0], sizes = [1, 32], strides = [1, 1]} : vector<49x32xf32> to vector<1x32xf32>
    %153 = vector.shape_cast %152 : vector<1x32xf32> to vector<32xf32>
    %154 = vector.shape_cast %153 : vector<32xf32> to vector<1x1x32xf32>
    %155 = vector.broadcast %154 : vector<1x1x32xf32> to vector<8x16x32xf32>
    %156 = arith.mulf %151, %155 : vector<8x16x32xf32>
    %157 = arith.addf %150, %156 : vector<8x16x32xf32>
    %158 = vector.extract_strided_slice %115 {offsets = [0, 6, 0], sizes = [8, 16, 32], strides = [1, 1, 1]} : vector<8x22x32xf32> to vector<8x16x32xf32>
    %159 = vector.extract_strided_slice %2 {offsets = [20, 0], sizes = [1, 32], strides = [1, 1]} : vector<49x32xf32> to vector<1x32xf32>
    %160 = vector.shape_cast %159 : vector<1x32xf32> to vector<32xf32>
    %161 = vector.shape_cast %160 : vector<32xf32> to vector<1x1x32xf32>
    %162 = vector.broadcast %161 : vector<1x1x32xf32> to vector<8x16x32xf32>
    %163 = arith.mulf %158, %162 : vector<8x16x32xf32>
    %164 = arith.addf %157, %163 : vector<8x16x32xf32>
    %c3_i32 = arith.constant 3 : i32
    %165 = arith.addi %1, %c3_i32 : i32
    %c0_12 = arith.constant 0 : index
    %166 = arith.index_cast %165 : i32 to index
    %c0_13 = arith.constant 0 : index
    %c0_14 = arith.constant 0 : index
    %167 = vector.load %arg2[%c0_12, %166, %c0_13, %c0_14] : memref<1x22x22x32xf32, #tpu.memory_space<vmem>>, vector<1x8x22x32xf32>
    %168 = vector.shape_cast %167 : vector<1x8x22x32xf32> to vector<8x22x32xf32>
    %169 = vector.extract_strided_slice %168 {offsets = [0, 0, 0], sizes = [8, 16, 32], strides = [1, 1, 1]} : vector<8x22x32xf32> to vector<8x16x32xf32>
    %170 = vector.extract_strided_slice %2 {offsets = [21, 0], sizes = [1, 32], strides = [1, 1]} : vector<49x32xf32> to vector<1x32xf32>
    %171 = vector.shape_cast %170 : vector<1x32xf32> to vector<32xf32>
    %172 = vector.shape_cast %171 : vector<32xf32> to vector<1x1x32xf32>
    %173 = vector.broadcast %172 : vector<1x1x32xf32> to vector<8x16x32xf32>
    %174 = arith.mulf %169, %173 : vector<8x16x32xf32>
    %175 = arith.addf %164, %174 : vector<8x16x32xf32>
    %176 = vector.extract_strided_slice %168 {offsets = [0, 1, 0], sizes = [8, 16, 32], strides = [1, 1, 1]} : vector<8x22x32xf32> to vector<8x16x32xf32>
    %177 = vector.extract_strided_slice %2 {offsets = [22, 0], sizes = [1, 32], strides = [1, 1]} : vector<49x32xf32> to vector<1x32xf32>
    %178 = vector.shape_cast %177 : vector<1x32xf32> to vector<32xf32>
    %179 = vector.shape_cast %178 : vector<32xf32> to vector<1x1x32xf32>
    %180 = vector.broadcast %179 : vector<1x1x32xf32> to vector<8x16x32xf32>
    %181 = arith.mulf %176, %180 : vector<8x16x32xf32>
    %182 = arith.addf %175, %181 : vector<8x16x32xf32>
    %183 = vector.extract_strided_slice %168 {offsets = [0, 2, 0], sizes = [8, 16, 32], strides = [1, 1, 1]} : vector<8x22x32xf32> to vector<8x16x32xf32>
    %184 = vector.extract_strided_slice %2 {offsets = [23, 0], sizes = [1, 32], strides = [1, 1]} : vector<49x32xf32> to vector<1x32xf32>
    %185 = vector.shape_cast %184 : vector<1x32xf32> to vector<32xf32>
    %186 = vector.shape_cast %185 : vector<32xf32> to vector<1x1x32xf32>
    %187 = vector.broadcast %186 : vector<1x1x32xf32> to vector<8x16x32xf32>
    %188 = arith.mulf %183, %187 : vector<8x16x32xf32>
    %189 = arith.addf %182, %188 : vector<8x16x32xf32>
    %190 = vector.extract_strided_slice %168 {offsets = [0, 3, 0], sizes = [8, 16, 32], strides = [1, 1, 1]} : vector<8x22x32xf32> to vector<8x16x32xf32>
    %191 = vector.extract_strided_slice %2 {offsets = [24, 0], sizes = [1, 32], strides = [1, 1]} : vector<49x32xf32> to vector<1x32xf32>
    %192 = vector.shape_cast %191 : vector<1x32xf32> to vector<32xf32>
    %193 = vector.shape_cast %192 : vector<32xf32> to vector<1x1x32xf32>
    %194 = vector.broadcast %193 : vector<1x1x32xf32> to vector<8x16x32xf32>
    %195 = arith.mulf %190, %194 : vector<8x16x32xf32>
    %196 = arith.addf %189, %195 : vector<8x16x32xf32>
    %197 = vector.extract_strided_slice %168 {offsets = [0, 4, 0], sizes = [8, 16, 32], strides = [1, 1, 1]} : vector<8x22x32xf32> to vector<8x16x32xf32>
    %198 = vector.extract_strided_slice %2 {offsets = [25, 0], sizes = [1, 32], strides = [1, 1]} : vector<49x32xf32> to vector<1x32xf32>
    %199 = vector.shape_cast %198 : vector<1x32xf32> to vector<32xf32>
    %200 = vector.shape_cast %199 : vector<32xf32> to vector<1x1x32xf32>
    %201 = vector.broadcast %200 : vector<1x1x32xf32> to vector<8x16x32xf32>
    %202 = arith.mulf %197, %201 : vector<8x16x32xf32>
    %203 = arith.addf %196, %202 : vector<8x16x32xf32>
    %204 = vector.extract_strided_slice %168 {offsets = [0, 5, 0], sizes = [8, 16, 32], strides = [1, 1, 1]} : vector<8x22x32xf32> to vector<8x16x32xf32>
    %205 = vector.extract_strided_slice %2 {offsets = [26, 0], sizes = [1, 32], strides = [1, 1]} : vector<49x32xf32> to vector<1x32xf32>
    %206 = vector.shape_cast %205 : vector<1x32xf32> to vector<32xf32>
    %207 = vector.shape_cast %206 : vector<32xf32> to vector<1x1x32xf32>
    %208 = vector.broadcast %207 : vector<1x1x32xf32> to vector<8x16x32xf32>
    %209 = arith.mulf %204, %208 : vector<8x16x32xf32>
    %210 = arith.addf %203, %209 : vector<8x16x32xf32>
    %211 = vector.extract_strided_slice %168 {offsets = [0, 6, 0], sizes = [8, 16, 32], strides = [1, 1, 1]} : vector<8x22x32xf32> to vector<8x16x32xf32>
    %212 = vector.extract_strided_slice %2 {offsets = [27, 0], sizes = [1, 32], strides = [1, 1]} : vector<49x32xf32> to vector<1x32xf32>
    %213 = vector.shape_cast %212 : vector<1x32xf32> to vector<32xf32>
    %214 = vector.shape_cast %213 : vector<32xf32> to vector<1x1x32xf32>
    %215 = vector.broadcast %214 : vector<1x1x32xf32> to vector<8x16x32xf32>
    %216 = arith.mulf %211, %215 : vector<8x16x32xf32>
    %217 = arith.addf %210, %216 : vector<8x16x32xf32>
    %c4_i32 = arith.constant 4 : i32
    %218 = arith.addi %1, %c4_i32 : i32
    %c0_15 = arith.constant 0 : index
    %219 = arith.index_cast %218 : i32 to index
    %c0_16 = arith.constant 0 : index
    %c0_17 = arith.constant 0 : index
    %220 = vector.load %arg2[%c0_15, %219, %c0_16, %c0_17] : memref<1x22x22x32xf32, #tpu.memory_space<vmem>>, vector<1x8x22x32xf32>
    %221 = vector.shape_cast %220 : vector<1x8x22x32xf32> to vector<8x22x32xf32>
    %222 = vector.extract_strided_slice %221 {offsets = [0, 0, 0], sizes = [8, 16, 32], strides = [1, 1, 1]} : vector<8x22x32xf32> to vector<8x16x32xf32>
    %223 = vector.extract_strided_slice %2 {offsets = [28, 0], sizes = [1, 32], strides = [1, 1]} : vector<49x32xf32> to vector<1x32xf32>
    %224 = vector.shape_cast %223 : vector<1x32xf32> to vector<32xf32>
    %225 = vector.shape_cast %224 : vector<32xf32> to vector<1x1x32xf32>
    %226 = vector.broadcast %225 : vector<1x1x32xf32> to vector<8x16x32xf32>
    %227 = arith.mulf %222, %226 : vector<8x16x32xf32>
    %228 = arith.addf %217, %227 : vector<8x16x32xf32>
    %229 = vector.extract_strided_slice %221 {offsets = [0, 1, 0], sizes = [8, 16, 32], strides = [1, 1, 1]} : vector<8x22x32xf32> to vector<8x16x32xf32>
    %230 = vector.extract_strided_slice %2 {offsets = [29, 0], sizes = [1, 32], strides = [1, 1]} : vector<49x32xf32> to vector<1x32xf32>
    %231 = vector.shape_cast %230 : vector<1x32xf32> to vector<32xf32>
    %232 = vector.shape_cast %231 : vector<32xf32> to vector<1x1x32xf32>
    %233 = vector.broadcast %232 : vector<1x1x32xf32> to vector<8x16x32xf32>
    %234 = arith.mulf %229, %233 : vector<8x16x32xf32>
    %235 = arith.addf %228, %234 : vector<8x16x32xf32>
    %236 = vector.extract_strided_slice %221 {offsets = [0, 2, 0], sizes = [8, 16, 32], strides = [1, 1, 1]} : vector<8x22x32xf32> to vector<8x16x32xf32>
    %237 = vector.extract_strided_slice %2 {offsets = [30, 0], sizes = [1, 32], strides = [1, 1]} : vector<49x32xf32> to vector<1x32xf32>
    %238 = vector.shape_cast %237 : vector<1x32xf32> to vector<32xf32>
    %239 = vector.shape_cast %238 : vector<32xf32> to vector<1x1x32xf32>
    %240 = vector.broadcast %239 : vector<1x1x32xf32> to vector<8x16x32xf32>
    %241 = arith.mulf %236, %240 : vector<8x16x32xf32>
    %242 = arith.addf %235, %241 : vector<8x16x32xf32>
    %243 = vector.extract_strided_slice %221 {offsets = [0, 3, 0], sizes = [8, 16, 32], strides = [1, 1, 1]} : vector<8x22x32xf32> to vector<8x16x32xf32>
    %244 = vector.extract_strided_slice %2 {offsets = [31, 0], sizes = [1, 32], strides = [1, 1]} : vector<49x32xf32> to vector<1x32xf32>
    %245 = vector.shape_cast %244 : vector<1x32xf32> to vector<32xf32>
    %246 = vector.shape_cast %245 : vector<32xf32> to vector<1x1x32xf32>
    %247 = vector.broadcast %246 : vector<1x1x32xf32> to vector<8x16x32xf32>
    %248 = arith.mulf %243, %247 : vector<8x16x32xf32>
    %249 = arith.addf %242, %248 : vector<8x16x32xf32>
    %250 = vector.extract_strided_slice %221 {offsets = [0, 4, 0], sizes = [8, 16, 32], strides = [1, 1, 1]} : vector<8x22x32xf32> to vector<8x16x32xf32>
    %251 = vector.extract_strided_slice %2 {offsets = [32, 0], sizes = [1, 32], strides = [1, 1]} : vector<49x32xf32> to vector<1x32xf32>
    %252 = vector.shape_cast %251 : vector<1x32xf32> to vector<32xf32>
    %253 = vector.shape_cast %252 : vector<32xf32> to vector<1x1x32xf32>
    %254 = vector.broadcast %253 : vector<1x1x32xf32> to vector<8x16x32xf32>
    %255 = arith.mulf %250, %254 : vector<8x16x32xf32>
    %256 = arith.addf %249, %255 : vector<8x16x32xf32>
    %257 = vector.extract_strided_slice %221 {offsets = [0, 5, 0], sizes = [8, 16, 32], strides = [1, 1, 1]} : vector<8x22x32xf32> to vector<8x16x32xf32>
    %258 = vector.extract_strided_slice %2 {offsets = [33, 0], sizes = [1, 32], strides = [1, 1]} : vector<49x32xf32> to vector<1x32xf32>
    %259 = vector.shape_cast %258 : vector<1x32xf32> to vector<32xf32>
    %260 = vector.shape_cast %259 : vector<32xf32> to vector<1x1x32xf32>
    %261 = vector.broadcast %260 : vector<1x1x32xf32> to vector<8x16x32xf32>
    %262 = arith.mulf %257, %261 : vector<8x16x32xf32>
    %263 = arith.addf %256, %262 : vector<8x16x32xf32>
    %264 = vector.extract_strided_slice %221 {offsets = [0, 6, 0], sizes = [8, 16, 32], strides = [1, 1, 1]} : vector<8x22x32xf32> to vector<8x16x32xf32>
    %265 = vector.extract_strided_slice %2 {offsets = [34, 0], sizes = [1, 32], strides = [1, 1]} : vector<49x32xf32> to vector<1x32xf32>
    %266 = vector.shape_cast %265 : vector<1x32xf32> to vector<32xf32>
    %267 = vector.shape_cast %266 : vector<32xf32> to vector<1x1x32xf32>
    %268 = vector.broadcast %267 : vector<1x1x32xf32> to vector<8x16x32xf32>
    %269 = arith.mulf %264, %268 : vector<8x16x32xf32>
    %270 = arith.addf %263, %269 : vector<8x16x32xf32>
    %c5_i32 = arith.constant 5 : i32
    %271 = arith.addi %1, %c5_i32 : i32
    %c0_18 = arith.constant 0 : index
    %272 = arith.index_cast %271 : i32 to index
    %c0_19 = arith.constant 0 : index
    %c0_20 = arith.constant 0 : index
    %273 = vector.load %arg2[%c0_18, %272, %c0_19, %c0_20] : memref<1x22x22x32xf32, #tpu.memory_space<vmem>>, vector<1x8x22x32xf32>
    %274 = vector.shape_cast %273 : vector<1x8x22x32xf32> to vector<8x22x32xf32>
    %275 = vector.extract_strided_slice %274 {offsets = [0, 0, 0], sizes = [8, 16, 32], strides = [1, 1, 1]} : vector<8x22x32xf32> to vector<8x16x32xf32>
    %276 = vector.extract_strided_slice %2 {offsets = [35, 0], sizes = [1, 32], strides = [1, 1]} : vector<49x32xf32> to vector<1x32xf32>
    %277 = vector.shape_cast %276 : vector<1x32xf32> to vector<32xf32>
    %278 = vector.shape_cast %277 : vector<32xf32> to vector<1x1x32xf32>
    %279 = vector.broadcast %278 : vector<1x1x32xf32> to vector<8x16x32xf32>
    %280 = arith.mulf %275, %279 : vector<8x16x32xf32>
    %281 = arith.addf %270, %280 : vector<8x16x32xf32>
    %282 = vector.extract_strided_slice %274 {offsets = [0, 1, 0], sizes = [8, 16, 32], strides = [1, 1, 1]} : vector<8x22x32xf32> to vector<8x16x32xf32>
    %283 = vector.extract_strided_slice %2 {offsets = [36, 0], sizes = [1, 32], strides = [1, 1]} : vector<49x32xf32> to vector<1x32xf32>
    %284 = vector.shape_cast %283 : vector<1x32xf32> to vector<32xf32>
    %285 = vector.shape_cast %284 : vector<32xf32> to vector<1x1x32xf32>
    %286 = vector.broadcast %285 : vector<1x1x32xf32> to vector<8x16x32xf32>
    %287 = arith.mulf %282, %286 : vector<8x16x32xf32>
    %288 = arith.addf %281, %287 : vector<8x16x32xf32>
    %289 = vector.extract_strided_slice %274 {offsets = [0, 2, 0], sizes = [8, 16, 32], strides = [1, 1, 1]} : vector<8x22x32xf32> to vector<8x16x32xf32>
    %290 = vector.extract_strided_slice %2 {offsets = [37, 0], sizes = [1, 32], strides = [1, 1]} : vector<49x32xf32> to vector<1x32xf32>
    %291 = vector.shape_cast %290 : vector<1x32xf32> to vector<32xf32>
    %292 = vector.shape_cast %291 : vector<32xf32> to vector<1x1x32xf32>
    %293 = vector.broadcast %292 : vector<1x1x32xf32> to vector<8x16x32xf32>
    %294 = arith.mulf %289, %293 : vector<8x16x32xf32>
    %295 = arith.addf %288, %294 : vector<8x16x32xf32>
    %296 = vector.extract_strided_slice %274 {offsets = [0, 3, 0], sizes = [8, 16, 32], strides = [1, 1, 1]} : vector<8x22x32xf32> to vector<8x16x32xf32>
    %297 = vector.extract_strided_slice %2 {offsets = [38, 0], sizes = [1, 32], strides = [1, 1]} : vector<49x32xf32> to vector<1x32xf32>
    %298 = vector.shape_cast %297 : vector<1x32xf32> to vector<32xf32>
    %299 = vector.shape_cast %298 : vector<32xf32> to vector<1x1x32xf32>
    %300 = vector.broadcast %299 : vector<1x1x32xf32> to vector<8x16x32xf32>
    %301 = arith.mulf %296, %300 : vector<8x16x32xf32>
    %302 = arith.addf %295, %301 : vector<8x16x32xf32>
    %303 = vector.extract_strided_slice %274 {offsets = [0, 4, 0], sizes = [8, 16, 32], strides = [1, 1, 1]} : vector<8x22x32xf32> to vector<8x16x32xf32>
    %304 = vector.extract_strided_slice %2 {offsets = [39, 0], sizes = [1, 32], strides = [1, 1]} : vector<49x32xf32> to vector<1x32xf32>
    %305 = vector.shape_cast %304 : vector<1x32xf32> to vector<32xf32>
    %306 = vector.shape_cast %305 : vector<32xf32> to vector<1x1x32xf32>
    %307 = vector.broadcast %306 : vector<1x1x32xf32> to vector<8x16x32xf32>
    %308 = arith.mulf %303, %307 : vector<8x16x32xf32>
    %309 = arith.addf %302, %308 : vector<8x16x32xf32>
    %310 = vector.extract_strided_slice %274 {offsets = [0, 5, 0], sizes = [8, 16, 32], strides = [1, 1, 1]} : vector<8x22x32xf32> to vector<8x16x32xf32>
    %311 = vector.extract_strided_slice %2 {offsets = [40, 0], sizes = [1, 32], strides = [1, 1]} : vector<49x32xf32> to vector<1x32xf32>
    %312 = vector.shape_cast %311 : vector<1x32xf32> to vector<32xf32>
    %313 = vector.shape_cast %312 : vector<32xf32> to vector<1x1x32xf32>
    %314 = vector.broadcast %313 : vector<1x1x32xf32> to vector<8x16x32xf32>
    %315 = arith.mulf %310, %314 : vector<8x16x32xf32>
    %316 = arith.addf %309, %315 : vector<8x16x32xf32>
    %317 = vector.extract_strided_slice %274 {offsets = [0, 6, 0], sizes = [8, 16, 32], strides = [1, 1, 1]} : vector<8x22x32xf32> to vector<8x16x32xf32>
    %318 = vector.extract_strided_slice %2 {offsets = [41, 0], sizes = [1, 32], strides = [1, 1]} : vector<49x32xf32> to vector<1x32xf32>
    %319 = vector.shape_cast %318 : vector<1x32xf32> to vector<32xf32>
    %320 = vector.shape_cast %319 : vector<32xf32> to vector<1x1x32xf32>
    %321 = vector.broadcast %320 : vector<1x1x32xf32> to vector<8x16x32xf32>
    %322 = arith.mulf %317, %321 : vector<8x16x32xf32>
    %323 = arith.addf %316, %322 : vector<8x16x32xf32>
    %c6_i32 = arith.constant 6 : i32
    %324 = arith.addi %1, %c6_i32 : i32
    %c0_21 = arith.constant 0 : index
    %325 = arith.index_cast %324 : i32 to index
    %c0_22 = arith.constant 0 : index
    %c0_23 = arith.constant 0 : index
    %326 = vector.load %arg2[%c0_21, %325, %c0_22, %c0_23] : memref<1x22x22x32xf32, #tpu.memory_space<vmem>>, vector<1x8x22x32xf32>
    %327 = vector.shape_cast %326 : vector<1x8x22x32xf32> to vector<8x22x32xf32>
    %328 = vector.extract_strided_slice %327 {offsets = [0, 0, 0], sizes = [8, 16, 32], strides = [1, 1, 1]} : vector<8x22x32xf32> to vector<8x16x32xf32>
    %329 = vector.extract_strided_slice %2 {offsets = [42, 0], sizes = [1, 32], strides = [1, 1]} : vector<49x32xf32> to vector<1x32xf32>
    %330 = vector.shape_cast %329 : vector<1x32xf32> to vector<32xf32>
    %331 = vector.shape_cast %330 : vector<32xf32> to vector<1x1x32xf32>
    %332 = vector.broadcast %331 : vector<1x1x32xf32> to vector<8x16x32xf32>
    %333 = arith.mulf %328, %332 : vector<8x16x32xf32>
    %334 = arith.addf %323, %333 : vector<8x16x32xf32>
    %335 = vector.extract_strided_slice %327 {offsets = [0, 1, 0], sizes = [8, 16, 32], strides = [1, 1, 1]} : vector<8x22x32xf32> to vector<8x16x32xf32>
    %336 = vector.extract_strided_slice %2 {offsets = [43, 0], sizes = [1, 32], strides = [1, 1]} : vector<49x32xf32> to vector<1x32xf32>
    %337 = vector.shape_cast %336 : vector<1x32xf32> to vector<32xf32>
    %338 = vector.shape_cast %337 : vector<32xf32> to vector<1x1x32xf32>
    %339 = vector.broadcast %338 : vector<1x1x32xf32> to vector<8x16x32xf32>
    %340 = arith.mulf %335, %339 : vector<8x16x32xf32>
    %341 = arith.addf %334, %340 : vector<8x16x32xf32>
    %342 = vector.extract_strided_slice %327 {offsets = [0, 2, 0], sizes = [8, 16, 32], strides = [1, 1, 1]} : vector<8x22x32xf32> to vector<8x16x32xf32>
    %343 = vector.extract_strided_slice %2 {offsets = [44, 0], sizes = [1, 32], strides = [1, 1]} : vector<49x32xf32> to vector<1x32xf32>
    %344 = vector.shape_cast %343 : vector<1x32xf32> to vector<32xf32>
    %345 = vector.shape_cast %344 : vector<32xf32> to vector<1x1x32xf32>
    %346 = vector.broadcast %345 : vector<1x1x32xf32> to vector<8x16x32xf32>
    %347 = arith.mulf %342, %346 : vector<8x16x32xf32>
    %348 = arith.addf %341, %347 : vector<8x16x32xf32>
    %349 = vector.extract_strided_slice %327 {offsets = [0, 3, 0], sizes = [8, 16, 32], strides = [1, 1, 1]} : vector<8x22x32xf32> to vector<8x16x32xf32>
    %350 = vector.extract_strided_slice %2 {offsets = [45, 0], sizes = [1, 32], strides = [1, 1]} : vector<49x32xf32> to vector<1x32xf32>
    %351 = vector.shape_cast %350 : vector<1x32xf32> to vector<32xf32>
    %352 = vector.shape_cast %351 : vector<32xf32> to vector<1x1x32xf32>
    %353 = vector.broadcast %352 : vector<1x1x32xf32> to vector<8x16x32xf32>
    %354 = arith.mulf %349, %353 : vector<8x16x32xf32>
    %355 = arith.addf %348, %354 : vector<8x16x32xf32>
    %356 = vector.extract_strided_slice %327 {offsets = [0, 4, 0], sizes = [8, 16, 32], strides = [1, 1, 1]} : vector<8x22x32xf32> to vector<8x16x32xf32>
    %357 = vector.extract_strided_slice %2 {offsets = [46, 0], sizes = [1, 32], strides = [1, 1]} : vector<49x32xf32> to vector<1x32xf32>
    %358 = vector.shape_cast %357 : vector<1x32xf32> to vector<32xf32>
    %359 = vector.shape_cast %358 : vector<32xf32> to vector<1x1x32xf32>
    %360 = vector.broadcast %359 : vector<1x1x32xf32> to vector<8x16x32xf32>
    %361 = arith.mulf %356, %360 : vector<8x16x32xf32>
    %362 = arith.addf %355, %361 : vector<8x16x32xf32>
    %363 = vector.extract_strided_slice %327 {offsets = [0, 5, 0], sizes = [8, 16, 32], strides = [1, 1, 1]} : vector<8x22x32xf32> to vector<8x16x32xf32>
    %364 = vector.extract_strided_slice %2 {offsets = [47, 0], sizes = [1, 32], strides = [1, 1]} : vector<49x32xf32> to vector<1x32xf32>
    %365 = vector.shape_cast %364 : vector<1x32xf32> to vector<32xf32>
    %366 = vector.shape_cast %365 : vector<32xf32> to vector<1x1x32xf32>
    %367 = vector.broadcast %366 : vector<1x1x32xf32> to vector<8x16x32xf32>
    %368 = arith.mulf %363, %367 : vector<8x16x32xf32>
    %369 = arith.addf %362, %368 : vector<8x16x32xf32>
    %370 = vector.extract_strided_slice %327 {offsets = [0, 6, 0], sizes = [8, 16, 32], strides = [1, 1, 1]} : vector<8x22x32xf32> to vector<8x16x32xf32>
    %371 = vector.extract_strided_slice %2 {offsets = [48, 0], sizes = [1, 32], strides = [1, 1]} : vector<49x32xf32> to vector<1x32xf32>
    %372 = vector.shape_cast %371 : vector<1x32xf32> to vector<32xf32>
    %373 = vector.shape_cast %372 : vector<32xf32> to vector<1x1x32xf32>
    %374 = vector.broadcast %373 : vector<1x1x32xf32> to vector<8x16x32xf32>
    %375 = arith.mulf %370, %374 : vector<8x16x32xf32>
    %376 = arith.addf %369, %375 : vector<8x16x32xf32>
    %377 = vector.shape_cast %4 : vector<32xf32> to vector<1x1x32xf32>
    %378 = vector.broadcast %377 : vector<1x1x32xf32> to vector<8x16x32xf32>
    %379 = arith.addf %376, %378 : vector<8x16x32xf32>
    %cst_24 = arith.constant dense<0.000000e+00> : vector<8x16xf32>
    %380 = vector.multi_reduction <add>, %379, %cst_24 [2] : vector<8x16x32xf32> to vector<8x16xf32>
    %381 = vector.shape_cast %380 : vector<8x16xf32> to vector<8x16x1xf32>
    %cst_25 = arith.constant 3.200000e+01 : f32
    %382 = vector.broadcast %cst_25 : f32 to vector<8x16x1xf32>
    %383 = arith.divf %381, %382 : vector<8x16x1xf32>
    %384 = vector.broadcast %383 : vector<8x16x1xf32> to vector<8x16x32xf32>
    %385 = arith.subf %379, %384 : vector<8x16x32xf32>
    %386 = arith.mulf %385, %385 : vector<8x16x32xf32>
    %cst_26 = arith.constant dense<0.000000e+00> : vector<8x16xf32>
    %387 = vector.multi_reduction <add>, %386, %cst_26 [2] : vector<8x16x32xf32> to vector<8x16xf32>
    %388 = vector.shape_cast %387 : vector<8x16xf32> to vector<8x16x1xf32>
    %cst_27 = arith.constant 3.200000e+01 : f32
    %389 = vector.broadcast %cst_27 : f32 to vector<8x16x1xf32>
    %390 = arith.divf %388, %389 : vector<8x16x1xf32>
    %391 = vector.broadcast %383 : vector<8x16x1xf32> to vector<8x16x32xf32>
    %392 = arith.subf %379, %391 : vector<8x16x32xf32>
    %cst_28 = arith.constant 9.99999997E-7 : f32
    %393 = vector.broadcast %cst_28 : f32 to vector<8x16x1xf32>
    %394 = arith.addf %390, %393 : vector<8x16x1xf32>
    %395 = math.rsqrt %394 : vector<8x16x1xf32>
    %396 = vector.broadcast %395 : vector<8x16x1xf32> to vector<8x16x32xf32>
    %397 = arith.mulf %392, %396 : vector<8x16x32xf32>
    %c0_29 = arith.constant 0 : index
    %c0_30 = arith.constant 0 : index
    %398 = vector.load %arg5[%c0_29, %c0_30] : memref<1x32xf32, #tpu.memory_space<vmem>>, vector<1x32xf32>
    %399 = vector.shape_cast %398 : vector<1x32xf32> to vector<32xf32>
    %400 = vector.shape_cast %399 : vector<32xf32> to vector<1x1x32xf32>
    %401 = vector.broadcast %400 : vector<1x1x32xf32> to vector<8x16x32xf32>
    %402 = arith.mulf %397, %401 : vector<8x16x32xf32>
    %c0_31 = arith.constant 0 : index
    %c0_32 = arith.constant 0 : index
    %403 = vector.load %arg6[%c0_31, %c0_32] : memref<1x32xf32, #tpu.memory_space<vmem>>, vector<1x32xf32>
    %404 = vector.shape_cast %403 : vector<1x32xf32> to vector<32xf32>
    %405 = vector.shape_cast %404 : vector<32xf32> to vector<1x1x32xf32>
    %406 = vector.broadcast %405 : vector<1x1x32xf32> to vector<8x16x32xf32>
    %407 = arith.addf %402, %406 : vector<8x16x32xf32>
    %408 = vector.shape_cast %407 : vector<8x16x32xf32> to vector<128x32xf32>
    %409 = arith.truncf %408 : vector<128x32xf32> to vector<128x32xbf16>
    %c0_33 = arith.constant 0 : index
    %c0_34 = arith.constant 0 : index
    %410 = vector.load %arg7[%c0_33, %c0_34] : memref<32x128xbf16, #tpu.memory_space<vmem>>, vector<32x128xbf16>
    %cst_35 = arith.constant dense<0.000000e+00> : vector<128x128xf32>
    %411 = tpu.matmul %409, %410, %cst_35 {dimension_numbers = #tpu.dot_dimension_numbers<[1], [0], [0], [1], [0, 0, 1, 1], [], []>} : vector<128x32xbf16>, vector<32x128xbf16>, vector<128x128xf32> -> vector<128x128xf32>
    %c0_36 = arith.constant 0 : index
    %c0_37 = arith.constant 0 : index
    %412 = vector.load %arg8[%c0_36, %c0_37] : memref<1x128xf32, #tpu.memory_space<vmem>>, vector<1x128xf32>
    %413 = vector.shape_cast %412 : vector<1x128xf32> to vector<128xf32>
    %414 = vector.shape_cast %413 : vector<128xf32> to vector<1x128xf32>
    %415 = vector.broadcast %414 : vector<1x128xf32> to vector<128x128xf32>
    %416 = arith.addf %411, %415 : vector<128x128xf32>
    %cst_38 = arith.constant 5.000000e-01 : f32
    %417 = vector.broadcast %cst_38 : f32 to vector<128x128xf32>
    %418 = arith.mulf %417, %416 : vector<128x128xf32>
    %cst_39 = arith.constant 0.707106769 : f32
    %419 = vector.broadcast %cst_39 : f32 to vector<128x128xf32>
    %420 = arith.mulf %416, %419 : vector<128x128xf32>
    %421 = math.erf %420 : vector<128x128xf32>
    %cst_40 = arith.constant 1.000000e+00 : f32
    %422 = vector.broadcast %cst_40 : f32 to vector<128x128xf32>
    %423 = arith.addf %422, %421 : vector<128x128xf32>
    %424 = arith.mulf %418, %423 : vector<128x128xf32>
    %425 = arith.truncf %424 : vector<128x128xf32> to vector<128x128xbf16>
    %c0_41 = arith.constant 0 : index
    %c0_42 = arith.constant 0 : index
    %426 = vector.load %arg9[%c0_41, %c0_42] : memref<128x32xbf16, #tpu.memory_space<vmem>>, vector<128x32xbf16>
    %cst_43 = arith.constant dense<0.000000e+00> : vector<128x32xf32>
    %427 = tpu.matmul %425, %426, %cst_43 {dimension_numbers = #tpu.dot_dimension_numbers<[1], [0], [0], [1], [0, 0, 1, 1], [], []>} : vector<128x128xbf16>, vector<128x32xbf16>, vector<128x32xf32> -> vector<128x32xf32>
    %c0_44 = arith.constant 0 : index
    %c0_45 = arith.constant 0 : index
    %428 = vector.load %arg10[%c0_44, %c0_45] : memref<1x32xf32, #tpu.memory_space<vmem>>, vector<1x32xf32>
    %429 = vector.shape_cast %428 : vector<1x32xf32> to vector<32xf32>
    %430 = vector.shape_cast %429 : vector<32xf32> to vector<1x32xf32>
    %431 = vector.broadcast %430 : vector<1x32xf32> to vector<128x32xf32>
    %432 = arith.addf %427, %431 : vector<128x32xf32>
    %433 = vector.shape_cast %432 : vector<128x32xf32> to vector<8x16x32xf32>
    %c3_i32_46 = arith.constant 3 : i32
    %434 = arith.addi %1, %c3_i32_46 : i32
    %c0_47 = arith.constant 0 : index
    %435 = arith.index_cast %434 : i32 to index
    %c0_48 = arith.constant 0 : index
    %c0_49 = arith.constant 0 : index
    %436 = vector.load %arg2[%c0_47, %435, %c0_48, %c0_49] : memref<1x22x22x32xf32, #tpu.memory_space<vmem>>, vector<1x8x22x32xf32>
    %437 = vector.shape_cast %436 : vector<1x8x22x32xf32> to vector<8x22x32xf32>
    %438 = vector.extract_strided_slice %437 {offsets = [0, 3, 0], sizes = [8, 16, 32], strides = [1, 1, 1]} : vector<8x22x32xf32> to vector<8x16x32xf32>
    %439 = arith.addf %438, %433 : vector<8x16x32xf32>
    %c0_50 = arith.constant 0 : index
    %c0_51 = arith.constant 0 : index
    %c0_52 = arith.constant 0 : index
    %c0_53 = arith.constant 0 : index
    %440 = vector.load %arg11[%c0_50, %c0_51, %c0_52, %c0_53] : memref<1x8x16x32xf32, #tpu.memory_space<vmem>>, vector<1x8x16x32xf32>
    %441 = vector.shape_cast %440 : vector<1x8x16x32xf32> to vector<8x16x32xf32>
    %442 = vector.shape_cast %439 : vector<8x16x32xf32> to vector<1x8x16x32xf32>
    tpu.vector_store %arg11[%c0_50, %c0_51, %c0_52, %c0_53], %442 {strides = array<i32>} : memref<1x8x16x32xf32, #tpu.memory_space<vmem>>, vector<1x8x16x32xf32>,
    return
  }
  func.func @transform_0(%arg0: i32, %arg1: i32) -> (i32, i32, i32, i32) {
    %c0_i32 = arith.constant 0 : i32
    %c0_i32_0 = arith.constant 0 : i32
    %c0_i32_1 = arith.constant 0 : i32
    %c0_i32_2 = arith.constant 0 : i32
    return %arg0, %c0_i32, %c0_i32_0, %c0_i32_1 : i32, i32, i32, i32
  }
  func.func @transform_1(%arg0: i32, %arg1: i32) -> (i32, i32) {
    %c0_i32 = arith.constant 0 : i32
    %c0_i32_0 = arith.constant 0 : i32
    %c0_i32_1 = arith.constant 0 : i32
    return %c0_i32, %c0_i32_0 : i32, i32
  }
  func.func @transform_2(%arg0: i32, %arg1: i32) -> (i32, i32) {
    %c0_i32 = arith.constant 0 : i32
    %c0_i32_0 = arith.constant 0 : i32
    %c0_i32_1 = arith.constant 0 : i32
    return %c0_i32, %c0_i32_0 : i32, i32
  }
  func.func @transform_3(%arg0: i32, %arg1: i32) -> (i32, i32) {
    %c0_i32 = arith.constant 0 : i32
    %c0_i32_0 = arith.constant 0 : i32
    %c0_i32_1 = arith.constant 0 : i32
    return %c0_i32, %c0_i32_0 : i32, i32
  }
  func.func @transform_4(%arg0: i32, %arg1: i32) -> (i32, i32) {
    %c0_i32 = arith.constant 0 : i32
    %c0_i32_0 = arith.constant 0 : i32
    %c0_i32_1 = arith.constant 0 : i32
    return %c0_i32, %c0_i32_0 : i32, i32
  }
  func.func @transform_5(%arg0: i32, %arg1: i32) -> (i32, i32) {
    %c0_i32 = arith.constant 0 : i32
    %c0_i32_0 = arith.constant 0 : i32
    %c0_i32_1 = arith.constant 0 : i32
    return %c0_i32, %c0_i32_0 : i32, i32
  }
  func.func @transform_6(%arg0: i32, %arg1: i32) -> (i32, i32) {
    %c0_i32 = arith.constant 0 : i32
    %c0_i32_0 = arith.constant 0 : i32
    %c0_i32_1 = arith.constant 0 : i32
    return %c0_i32, %c0_i32_0 : i32, i32
  }
  func.func @transform_7(%arg0: i32, %arg1: i32) -> (i32, i32) {
    %c0_i32 = arith.constant 0 : i32
    %c0_i32_0 = arith.constant 0 : i32
    %c0_i32_1 = arith.constant 0 : i32
    return %c0_i32, %c0_i32_0 : i32, i32
  }
  func.func @transform_8(%arg0: i32, %arg1: i32) -> (i32, i32) {
    %c0_i32 = arith.constant 0 : i32
    %c0_i32_0 = arith.constant 0 : i32
    %c0_i32_1 = arith.constant 0 : i32
    return %c0_i32, %c0_i32_0 : i32, i32
  }
  func.func @transform_9(%arg0: i32, %arg1: i32) -> (i32, i32, i32, i32) {
    %c0_i32 = arith.constant 0 : i32
    %c0_i32_0 = arith.constant 0 : i32
    %c0_i32_1 = arith.constant 0 : i32
    return %arg0, %arg1, %c0_i32, %c0_i32_0 : i32, i32, i32, i32
  }
}

</mosaic_0001>

<llo_original>
// kernel: tpu_custom_call.1
$region0: #{tpu_custom_call.1}
  #allocation0 [shape = 'u32[]', space=smem, size = 0x4, offset = 0x4, fixed_abs, tag = 'smem constant byte address 0x4 - core index']
  #allocation1 [shape = 'u32[144,128]{1,0:T(1,128)}', space=vmem, size = 0x12000, scoped, tag = 'internal scratch']
  %s0 = inlined_call_operand.vmem [shape: f32[2,22,22,32], index: 0, kind: input, shape index: {}]
  %s1 = inlined_call_operand.vmem [shape: f32[49,32], index: 1, kind: input, shape index: {}]
  %s2 = inlined_call_operand.vmem [shape: f32[1,32], index: 2, kind: input, shape index: {}]
  %s3 = inlined_call_operand.vmem [shape: f32[1,32], index: 3, kind: input, shape index: {}]
  %s4 = inlined_call_operand.vmem [shape: f32[1,32], index: 4, kind: input, shape index: {}]
  %s5 = inlined_call_operand.vmem [shape: bf16[32,128], index: 5, kind: input, shape index: {}]
  %s6 = inlined_call_operand.vmem [shape: f32[1,128], index: 6, kind: input, shape index: {}]
  %s7 = inlined_call_operand.vmem [shape: bf16[128,32], index: 7, kind: input, shape index: {}]
  %s8 = inlined_call_operand.vmem [shape: f32[1,32], index: 8, kind: input, shape index: {}]
  %s9 = inlined_call_operand.hbm [shape: f32[2,16,16,32], index: 9, kind: output, shape index: {}]
  %s10 = sld [smem:[#allocation0]]
  $region69: #{tpu_custom_call.1} parent=0
    _
  %s12 = ssub.s32 1, %s10
  %s13 = scalar_select 0, %s12, %s10
  $region1: #{tpu_custom_call.1} parent=0
    #allocation2 [shape = 'u8[131072]{0}', space=vmem, size = 0x20000, scoped, tag = 'output window, operand 0']
    #allocation3 [shape = 's32[2]{0}', space=sflag, size = 0x8, scoped, tag = 'scoped memory for tpu_custom_call.1']
    %14 = vsyncpa [#allocation3], 0
    %s15 = scalar_lea.sflag [#allocation3], 1
    %16 = vsyncpa %s15, 0
    loop: start=0, step=1, limit=6
    $region2: #{tpu_custom_call.1} parent=1 // loop_pre_header
      _
    $region3: #{tpu_custom_call.1} parent=1 // loop_header
      %s18 = sphi 0, %s22
      %p19 = scmp.ge.s32.totalorder %s18, 6
      %s25 = sphi 0, %s37
      %s26 = sphi 0, %s33
      %s27 = sphi 0, %s25
      %s28 = sphi 0, %s26
      %s29 = sphi 0, %s27
      %s30 = sphi 0, %s28
      %s40 = sphi 0, %s42
      %s43 = sphi 0, %s40
      %s44 = sphi 0, %s43
      %s60 = sphi 0, %s44
      %s64 = sphi 0, %s64
      %s66 = sphi 0, %s64
      %s67 = sphi 0, %s66
      %s81 = sphi 0, %s67
      %s85 = sphi 0, %s85
      %s87 = sphi 0, %s85
      %s88 = sphi 0, %s87
      %s102 = sphi 0, %s88
      %s106 = sphi 0, %s106
      %s108 = sphi 0, %s106
      %s109 = sphi 0, %s108
      %s123 = sphi 0, %s109
      %s127 = sphi 0, %s127
      %s129 = sphi 0, %s127
      %s130 = sphi 0, %s129
      %s144 = sphi 0, %s130
      %s148 = sphi 0, %s148
      %s150 = sphi 0, %s148
      %s151 = sphi 0, %s150
      %s165 = sphi 0, %s151
      %s169 = sphi 0, %s169
      %s171 = sphi 0, %s169
      %s172 = sphi 0, %s171
      %s186 = sphi 0, %s172
      %s190 = sphi 0, %s190
      %s192 = sphi 0, %s190
      %s193 = sphi 0, %s192
      %s207 = sphi 0, %s193
      %s211 = sphi 0, %s211
      %s213 = sphi 0, %s211
      %s214 = sphi 0, %s213
      %s228 = sphi 0, %s214
      %s236 = sphi 0, %s238
      %s239 = sphi 0, %s236
      %s240 = sphi 0, %s239
      %s256 = sphi 0, %s240
    $region4: #{tpu_custom_call.1} parent=1 // loop_header_branch
      %21 = sbr.rel (%p19) target = $region8
    $region5: #{tpu_custom_call.1} parent=1 // loop_body
      %s23 = ssub.s32 %s18, 1
      %s24 = ssub.s32 %s18, 2
      %s31 = sadd.s32 1, %s26
      %p32 = scmp.ge.s32.totalorder %s31, 2
      %s33 = scalar_select %p32, 0, %s31
      %s34 = sadd.s32 1, %s25
      %s35 = scalar_select %p32, %s34, %s25
      %p36 = scmp.ge.s32.totalorder %s35, 2
      %s37 = scalar_select %p36, 0, %s35
      %s38 = ssub.s32 %s25, %s37
      %p39 = scmp.eq.s32.totalorder %s38, 0
      %s41 = sadd.s32 %s40, 1
      %s42 = scalar_select %p39, %s40, %s41
      %p45 = pneg %p39
      %p46 = scmp.eq.s32.totalorder %s18, 3
      %p47 = por %p45, %p46
      %p48 = scmp.ne.s32.totalorder %s40, %s43
      %p49 = scmp.eq.s32.totalorder %s18, 0
      %p50 = por %p48, %p49
      %p51 = scmp.ne.s32.totalorder %s40, %s43
      %p52 = scmp.eq.s32.totalorder %s23, 3
      %p53 = por %p51, %p52
      %p54 = scmp.ne.s32.totalorder %s43, %s44
      %p55 = scmp.eq.s32.totalorder %s23, 0
      %p56 = por %p54, %p55
      %p57 = scmp.ne.s32.totalorder %s43, %s44
      %p58 = scmp.eq.s32.totalorder %s24, 3
      %p59 = por %p57, %p58
      %p61 = scmp.ne.s32.totalorder %s44, %s60
      %p62 = scmp.eq.s32.totalorder %s24, 0
      %p63 = por %p61, %p62
      %s65 = sadd.s32 %s64, 1
      %p68 = scmp.eq.s32.totalorder %s18, 3
      %p69 = scmp.ne.s32.totalorder %s64, %s66
      %p70 = scmp.eq.s32.totalorder %s18, 0
      %p71 = por %p69, %p70
      %p72 = scmp.ne.s32.totalorder %s64, %s66
      %p73 = scmp.eq.s32.totalorder %s23, 3
      %p74 = por %p72, %p73
      %p75 = scmp.ne.s32.totalorder %s66, %s67
      %p76 = scmp.eq.s32.totalorder %s23, 0
      %p77 = por %p75, %p76
      %p78 = scmp.ne.s32.totalorder %s66, %s67
      %p79 = scmp.eq.s32.totalorder %s24, 3
      %p80 = por %p78, %p79
      %p82 = scmp.ne.s32.totalorder %s67, %s81
      %p83 = scmp.eq.s32.totalorder %s24, 0
      %p84 = por %p82, %p83
      %s86 = sadd.s32 %s85, 1
      %p89 = scmp.eq.s32.totalorder %s18, 3
      %p90 = scmp.ne.s32.totalorder %s85, %s87
      %p91 = scmp.eq.s32.totalorder %s18, 0
      %p92 = por %p90, %p91
      %p93 = scmp.ne.s32.totalorder %s85, %s87
      %p94 = scmp.eq.s32.totalorder %s23, 3
      %p95 = por %p93, %p94
      %p96 = scmp.ne.s32.totalorder %s87, %s88
      %p97 = scmp.eq.s32.totalorder %s23, 0
      %p98 = por %p96, %p97
      %p99 = scmp.ne.s32.totalorder %s87, %s88
      %p100 = scmp.eq.s32.totalorder %s24, 3
      %p101 = por %p99, %p100
      %p103 = scmp.ne.s32.totalorder %s88, %s102
      %p104 = scmp.eq.s32.totalorder %s24, 0
      %p105 = por %p103, %p104
      %s107 = sadd.s32 %s106, 1
      %p110 = scmp.eq.s32.totalorder %s18, 3
      %p111 = scmp.ne.s32.totalorder %s106, %s108
      %p112 = scmp.eq.s32.totalorder %s18, 0
      %p113 = por %p111, %p112
      %p114 = scmp.ne.s32.totalorder %s106, %s108
      %p115 = scmp.eq.s32.totalorder %s23, 3
      %p116 = por %p114, %p115
      %p117 = scmp.ne.s32.totalorder %s108, %s109
      %p118 = scmp.eq.s32.totalorder %s23, 0
      %p119 = por %p117, %p118
      %p120 = scmp.ne.s32.totalorder %s108, %s109
      %p121 = scmp.eq.s32.totalorder %s24, 3
      %p122 = por %p120, %p121
      %p124 = scmp.ne.s32.totalorder %s109, %s123
      %p125 = scmp.eq.s32.totalorder %s24, 0
      %p126 = por %p124, %p125
      %s128 = sadd.s32 %s127, 1
      %p131 = scmp.eq.s32.totalorder %s18, 3
      %p132 = scmp.ne.s32.totalorder %s127, %s129
      %p133 = scmp.eq.s32.totalorder %s18, 0
      %p134 = por %p132, %p133
      %p135 = scmp.ne.s32.totalorder %s127, %s129
      %p136 = scmp.eq.s32.totalorder %s23, 3
      %p137 = por %p135, %p136
      %p138 = scmp.ne.s32.totalorder %s129, %s130
      %p139 = scmp.eq.s32.totalorder %s23, 0
      %p140 = por %p138, %p139
      %p141 = scmp.ne.s32.totalorder %s129, %s130
      %p142 = scmp.eq.s32.totalorder %s24, 3
      %p143 = por %p141, %p142
      %p145 = scmp.ne.s32.totalorder %s130, %s144
      %p146 = scmp.eq.s32.totalorder %s24, 0
      %p147 = por %p145, %p146
      %s149 = sadd.s32 %s148, 1
      %p152 = scmp.eq.s32.totalorder %s18, 3
      %p153 = scmp.ne.s32.totalorder %s148, %s150
      %p154 = scmp.eq.s32.totalorder %s18, 0
      %p155 = por %p153, %p154
      %p156 = scmp.ne.s32.totalorder %s148, %s150
      %p157 = scmp.eq.s32.totalorder %s23, 3
      %p158 = por %p156, %p157
      %p159 = scmp.ne.s32.totalorder %s150, %s151
      %p160 = scmp.eq.s32.totalorder %s23, 0
      %p161 = por %p159, %p160
      %p162 = scmp.ne.s32.totalorder %s150, %s151
      %p163 = scmp.eq.s32.totalorder %s24, 3
      %p164 = por %p162, %p163
      %p166 = scmp.ne.s32.totalorder %s151, %s165
      %p167 = scmp.eq.s32.totalorder %s24, 0
      %p168 = por %p166, %p167
      %s170 = sadd.s32 %s169, 1
      %p173 = scmp.eq.s32.totalorder %s18, 3
      %p174 = scmp.ne.s32.totalorder %s169, %s171
      %p175 = scmp.eq.s32.totalorder %s18, 0
      %p176 = por %p174, %p175
      %p177 = scmp.ne.s32.totalorder %s169, %s171
      %p178 = scmp.eq.s32.totalorder %s23, 3
      %p179 = por %p177, %p178
      %p180 = scmp.ne.s32.totalorder %s171, %s172
      %p181 = scmp.eq.s32.totalorder %s23, 0
      %p182 = por %p180, %p181
      %p183 = scmp.ne.s32.totalorder %s171, %s172
      %p184 = scmp.eq.s32.totalorder %s24, 3
      %p185 = por %p183, %p184
      %p187 = scmp.ne.s32.totalorder %s172, %s186
      %p188 = scmp.eq.s32.totalorder %s24, 0
      %p189 = por %p187, %p188
      %s191 = sadd.s32 %s190, 1
      %p194 = scmp.eq.s32.totalorder %s18, 3
      %p195 = scmp.ne.s32.totalorder %s190, %s192
      %p196 = scmp.eq.s32.totalorder %s18, 0
      %p197 = por %p195, %p196
      %p198 = scmp.ne.s32.totalorder %s190, %s192
      %p199 = scmp.eq.s32.totalorder %s23, 3
      %p200 = por %p198, %p199
      %p201 = scmp.ne.s32.totalorder %s192, %s193
      %p202 = scmp.eq.s32.totalorder %s23, 0
      %p203 = por %p201, %p202
      %p204 = scmp.ne.s32.totalorder %s192, %s193
      %p205 = scmp.eq.s32.totalorder %s24, 3
      %p206 = por %p204, %p205
      %p208 = scmp.ne.s32.totalorder %s193, %s207
      %p209 = scmp.eq.s32.totalorder %s24, 0
      %p210 = por %p208, %p209
      %s212 = sadd.s32 %s211, 1
      %p215 = scmp.eq.s32.totalorder %s18, 3
      %p216 = scmp.ne.s32.totalorder %s211, %s213
      %p217 = scmp.eq.s32.totalorder %s18, 0
      %p218 = por %p216, %p217
      %p219 = scmp.ne.s32.totalorder %s211, %s213
      %p220 = scmp.eq.s32.totalorder %s23, 3
      %p221 = por %p219, %p220
      %p222 = scmp.ne.s32.totalorder %s213, %s214
      %p223 = scmp.eq.s32.totalorder %s23, 0
      %p224 = por %p222, %p223
      %p225 = scmp.ne.s32.totalorder %s213, %s214
      %p226 = scmp.eq.s32.totalorder %s24, 3
      %p227 = por %p225, %p226
      %p229 = scmp.ne.s32.totalorder %s214, %s228
      %p230 = scmp.eq.s32.totalorder %s24, 0
      %p231 = por %p229, %p230
      %s232 = ssub.s32 %s25, %s37
      %s233 = ssub.s32 %s26, %s33
      %s234 = sor.u32 %s232, %s233
      %p235 = scmp.eq.s32.totalorder %s234, 0
      %s237 = sadd.s32 %s236, 1
      %s238 = scalar_select %p235, %s236, %s237
      %p241 = pneg %p235
      %p242 = scmp.eq.s32.totalorder %s18, 3
      %p243 = por %p241, %p242
      %p244 = scmp.ne.s32.totalorder %s236, %s239
      %p245 = scmp.eq.s32.totalorder %s18, 0
      %p246 = por %p244, %p245
      %p247 = scmp.ne.s32.totalorder %s236, %s239
      %p248 = scmp.eq.s32.totalorder %s23, 3
      %p249 = por %p247, %p248
      %p250 = scmp.ne.s32.totalorder %s239, %s240
      %p251 = scmp.eq.s32.totalorder %s23, 0
      %p252 = por %p250, %p251
      %p253 = scmp.ne.s32.totalorder %s239, %s240
      %p254 = scmp.eq.s32.totalorder %s24, 3
      %p255 = por %p253, %p254
      %p257 = scmp.ne.s32.totalorder %s240, %s256
      %p258 = scmp.eq.s32.totalorder %s24, 0
      %p259 = por %p257, %p258
      %p260 = scmp.le.s32.totalorder 1, %s18
      %p261 = scmp.lt.s32.totalorder %s18, 5
      %p262 = pnand %p260, %p261
      %p263 = pneg %p262
      // Predicated region
      $region9: #{tpu_custom_call.1} parent=5 // pred_check
        _
      $region10: #{tpu_custom_call.1} parent=5 // pred_check_branch
        %265 = sbr.rel (%p262) target = $region12
      $region11: #{tpu_custom_call.1} parent=5 // pred_region
        %s266 = ssub.s32 %s18, 1
        // Predicated region
        $region13: #{tpu_custom_call.1} parent=11 // pred_check
          %p267 = pneg %p77
        $region14: #{tpu_custom_call.1} parent=11 // pred_check_branch
          %269 = sbr.rel (%p267) target = $region16
        $region15: #{tpu_custom_call.1} parent=11 // pred_region
          _
        $region16: #{tpu_custom_call.1} parent=11 // pred_fallthru
          _
        // Predicated region
        $region17: #{tpu_custom_call.1} parent=11 // pred_check
          %p270 = pneg %p98
        $region18: #{tpu_custom_call.1} parent=11 // pred_check_branch
          %272 = sbr.rel (%p270) target = $region20
        $region19: #{tpu_custom_call.1} parent=11 // pred_region
          _
        $region20: #{tpu_custom_call.1} parent=11 // pred_fallthru
          _
        // Predicated region
        $region21: #{tpu_custom_call.1} parent=11 // pred_check
          %p273 = pneg %p119
        $region22: #{tpu_custom_call.1} parent=11 // pred_check_branch
          %275 = sbr.rel (%p273) target = $region24
        $region23: #{tpu_custom_call.1} parent=11 // pred_region
          _
        $region24: #{tpu_custom_call.1} parent=11 // pred_fallthru
          _
        // Predicated region
        $region25: #{tpu_custom_call.1} parent=11 // pred_check
          %p276 = pneg %p140
        $region26: #{tpu_custom_call.1} parent=11 // pred_check_branch
          %278 = sbr.rel (%p276) target = $region28
        $region27: #{tpu_custom_call.1} parent=11 // pred_region
          _
        $region28: #{tpu_custom_call.1} parent=11 // pred_fallthru
          _
        // Predicated region
        $region29: #{tpu_custom_call.1} parent=11 // pred_check
          %p279 = pneg %p161
        $region30: #{tpu_custom_call.1} parent=11 // pred_check_branch
          %281 = sbr.rel (%p279) target = $region32
        $region31: #{tpu_custom_call.1} parent=11 // pred_region
          _
        $region32: #{tpu_custom_call.1} parent=11 // pred_fallthru
          _
        // Predicated region
        $region33: #{tpu_custom_call.1} parent=11 // pred_check
          %p282 = pneg %p182
        $region34: #{tpu_custom_call.1} parent=11 // pred_check_branch
          %284 = sbr.rel (%p282) target = $region36
        $region35: #{tpu_custom_call.1} parent=11 // pred_region
          _
        $region36: #{tpu_custom_call.1} parent=11 // pred_fallthru
          _
        // Predicated region
        $region37: #{tpu_custom_call.1} parent=11 // pred_check
          %p285 = pneg %p203
        $region38: #{tpu_custom_call.1} parent=11 // pred_check_branch
          %287 = sbr.rel (%p285) target = $region40
        $region39: #{tpu_custom_call.1} parent=11 // pred_region
          _
        $region40: #{tpu_custom_call.1} parent=11 // pred_fallthru
          _
        // Predicated region
        $region41: #{tpu_custom_call.1} parent=11 // pred_check
          %p288 = pneg %p224
        $region42: #{tpu_custom_call.1} parent=11 // pred_check_branch
          %290 = sbr.rel (%p288) target = $region44
        $region43: #{tpu_custom_call.1} parent=11 // pred_region
          _
        $region44: #{tpu_custom_call.1} parent=11 // pred_fallthru
          _
      $region12: #{tpu_custom_call.1} parent=5 // pred_fallthru
        _
      %p291 = scmp.lt.s32.totalorder %s18, 4
      // Predicated region
      $region45: #{tpu_custom_call.1} parent=5 // pred_check
        %p292 = pneg %p291
      $region46: #{tpu_custom_call.1} parent=5 // pred_check_branch
        %294 = sbr.rel (%p292) target = $region48
      $region47: #{tpu_custom_call.1} parent=5 // pred_region
        // Predicated region
        $region49: #{tpu_custom_call.1} parent=47 // pred_check
          %p295 = pneg %p50
        $region50: #{tpu_custom_call.1} parent=47 // pred_check_branch
          %297 = sbr.rel (%p295) target = $region52
        $region51: #{tpu_custom_call.1} parent=47 // pred_region
          %p298 = scmp.lt.s32.totalorder %s25, 1
          %s299 = scalar_select %p298, %s25, 1
          %s300 = smul.addr %s299, 66
          %s301 = smul.addr %s300, 8
          %s302 = scalar_lea.vmem %s0, %s301
        $region52: #{tpu_custom_call.1} parent=47 // pred_fallthru
          _
      $region48: #{tpu_custom_call.1} parent=5 // pred_fallthru
        _
      %p303 = scmp.le.s32.totalorder 1, %s18
      %p304 = scmp.lt.s32.totalorder %s18, 5
      %p305 = pnand %p303, %p304
      %p306 = pneg %p305
      // Predicated region
      $region53: #{tpu_custom_call.1} parent=5 // pred_check
        _
      $region54: #{tpu_custom_call.1} parent=5 // pred_check_branch
        %308 = sbr.rel (%p305) target = $region56
      $region55: #{tpu_custom_call.1} parent=5 // pred_region
        %s309 = ssub.s32 %s18, 1
        %p310 = scmp.lt.s32.totalorder %s27, 1
        %s311 = scalar_select %p310, %s27, 1
        %s312 = smul.addr %s311, 66
        %s313 = smul.addr %s312, 8
        %s314 = scalar_lea.vmem %s0, %s313
        %p315 = pneg %p56
        %p316 = pneg %p53
        %p317 = pneg %p77
        %p318 = pneg %p74
        %p319 = pneg %p98
        %p320 = pneg %p95
        %p321 = pneg %p119
        %p322 = pneg %p116
        %p323 = pneg %p140
        %p324 = pneg %p137
        %p325 = pneg %p161
        %p326 = pneg %p158
        %p327 = pneg %p182
        %p328 = pneg %p179
        %p329 = pneg %p203
        %p330 = pneg %p200
        %p331 = pneg %p224
        %p332 = pneg %p221
        %p333 = pneg %p252
        %p334 = pneg %p249
        %s335 = sand.u32 %s239, 1
        %s336 = scalar_lea.sflag [#allocation3], %s335
        %s337 = sand.u32 %s239, 1
        %s338 = smul.addr %s337, 128
        %s339 = scalar_lea.vmem [#allocation2], %s338
        %p340 = scmp.lt.s32.totalorder %s27, 1
        %s341 = scalar_select %p340, %s27, 1
        %s342 = smul.addr %s341, 66
        %s343 = smul.addr %s342, 8
        %s344 = scalar_lea.vmem %s0, %s343
        %s345 = smul.u32 8, %s28
        %s347 = smul.u32 %s28, 8
        %v348 = vld [vmem:[%s1] sm:$0xff]
        %v349 = vld [vmem:[%s1 + $0x8] sm:$0xff]
        %v350 = vld [vmem:[%s1 + $0x10] sm:$0xff]
        %v351 = vld [vmem:[%s1 + $0x18] sm:$0xff]
        %v352 = vld [vmem:[%s1 + $0x20] sm:$0xff]
        %v353 = vld [vmem:[%s1 + $0x28] sm:$0xff]
        %v354 = vld [vmem:[%s1 + $0x30] sm:$0x1]
        %v355 = vld [vmem:[%s2] sm:$0x1]
        %s356 = smul.u32 %s347, 24
        %s357 = scalar_lea.vmem %s344, %s356
        %v358 = vld [vmem:[%s357] sm:$0xff]
        %v359 = vld [vmem:[%s357 + $0x8] sm:$0xff]
        %v360 = vld [vmem:[%s357 + $0x10] sm:$0x3f]
        %v361 = vld [vmem:[%s357 + $0x18] sm:$0xff]
        %v362 = vld [vmem:[%s357 + $0x20] sm:$0xff]
        %v363 = vld [vmem:[%s357 + $0x28] sm:$0x3f]
        %v364 = vld [vmem:[%s357 + $0x30] sm:$0xff]
        %v365 = vld [vmem:[%s357 + $0x38] sm:$0xff]
        %v366 = vld [vmem:[%s357 + $0x40] sm:$0x3f]
        %v367 = vld [vmem:[%s357 + $0x48] sm:$0xff]
        %v368 = vld [vmem:[%s357 + $0x50] sm:$0xff]
        %v369 = vld [vmem:[%s357 + $0x58] sm:$0x3f]
        %v370 = vld [vmem:[%s357 + $0x60] sm:$0xff]
        %v371 = vld [vmem:[%s357 + $0x68] sm:$0xff]
        %v372 = vld [vmem:[%s357 + $0x70] sm:$0x3f]
        %v373 = vld [vmem:[%s357 + $0x78] sm:$0xff]
        %v374 = vld [vmem:[%s357 + $0x80] sm:$0xff]
        %v375 = vld [vmem:[%s357 + $0x88] sm:$0x3f]
        %v376 = vld [vmem:[%s357 + $0x90] sm:$0xff]
        %v377 = vld [vmem:[%s357 + $0x98] sm:$0xff]
        %v378 = vld [vmem:[%s357 + $0xa0] sm:$0x3f]
        %v379 = vld [vmem:[%s357 + $0xa8] sm:$0xff]
        %v380 = vld [vmem:[%s357 + $0xb0] sm:$0xff]
        %v381 = vld [vmem:[%s357 + $0xb8] sm:$0x3f]
        %v382 = vlaneseq
        %v383 = vshrl.u32 %v382, 7
        %v384 = vsub.s32 0, %v383
        %v385 = vrot.slane %v348, %v384
        %v386 = vmul.f32 %v358, %v385
        %v387 = vmul.f32 %v359, %v385
        %v388 = vmul.f32 %v361, %v385
        %v389 = vmul.f32 %v362, %v385
        %v390 = vmul.f32 %v364, %v385
        %v391 = vmul.f32 %v365, %v385
        %v392 = vmul.f32 %v367, %v385
        %v393 = vmul.f32 %v368, %v385
        %v394 = vmul.f32 %v370, %v385
        %v395 = vmul.f32 %v371, %v385
        %v396 = vmul.f32 %v373, %v385
        %v397 = vmul.f32 %v374, %v385
        %v398 = vmul.f32 %v376, %v385
        %v399 = vmul.f32 %v377, %v385
        %v400 = vmul.f32 %v379, %v385
        %v401 = vmul.f32 %v380, %v385
        %v402 = vadd.f32 %v386, 0.0
        %v403 = vadd.f32 %v387, 0.0
        %v404 = vadd.f32 %v388, 0.0
        %v405 = vadd.f32 %v389, 0.0
        %v406 = vadd.f32 %v390, 0.0
        %v407 = vadd.f32 %v391, 0.0
        %v408 = vadd.f32 %v392, 0.0
        %v409 = vadd.f32 %v393, 0.0
        %v410 = vadd.f32 %v394, 0.0
        %v411 = vadd.f32 %v395, 0.0
        %v412 = vadd.f32 %v396, 0.0
        %v413 = vadd.f32 %v397, 0.0
        %v414 = vadd.f32 %v398, 0.0
        %v415 = vadd.f32 %v399, 0.0
        %v416 = vadd.f32 %v400, 0.0
        %v417 = vadd.f32 %v401, 0.0
        %v418 = vlaneseq
        %v419 = vshrl.u32 %v418, 7
        %v420 = vsub.s32 1, %v419
        %v421 = vrot.slane %v348, %v420
        %v422 = vmul.f32 %v358, %v421
        %v423 = vmul.f32 %v359, %v421
        %v424 = vmul.f32 %v360, %v421
        %v425 = vmul.f32 %v361, %v421
        %v426 = vmul.f32 %v362, %v421
        %v427 = vmul.f32 %v363, %v421
        %v428 = vmul.f32 %v364, %v421
        %v429 = vmul.f32 %v365, %v421
        %v430 = vmul.f32 %v366, %v421
        %v431 = vmul.f32 %v367, %v421
        %v432 = vmul.f32 %v368, %v421
        %v433 = vmul.f32 %v369, %v421
        %v434 = vmul.f32 %v370, %v421
        %v435 = vmul.f32 %v371, %v421
        %v436 = vmul.f32 %v372, %v421
        %v437 = vmul.f32 %v373, %v421
        %v438 = vmul.f32 %v374, %v421
        %v439 = vmul.f32 %v375, %v421
        %v440 = vmul.f32 %v376, %v421
        %v441 = vmul.f32 %v377, %v421
        %v442 = vmul.f32 %v378, %v421
        %v443 = vmul.f32 %v379, %v421
        %v444 = vmul.f32 %v380, %v421
        %v445 = vmul.f32 %v381, %v421
        %vm470 = vcmask 1046528
        %v471 = vrot.slane %v422, 1
        %v472 = vrot.slane %v423, 1
        %v473 = vsel %vm470, %v471, %v472
        %v474 = vrot.slane %v424, 1
        %v475 = vsel %vm470, %v472, %v474
        %v476 = vrot.slane %v425, 1
        %v477 = vrot.slane %v426, 1
        %v478 = vsel %vm470, %v476, %v477
        %v479 = vrot.slane %v427, 1
        %v480 = vsel %vm470, %v477, %v479
        %v481 = vrot.slane %v428, 1
        %v482 = vrot.slane %v429, 1
        %v483 = vsel %vm470, %v481, %v482
        %v484 = vrot.slane %v430, 1
        %v485 = vsel %vm470, %v482, %v484
        %v486 = vrot.slane %v431, 1
        %v487 = vrot.slane %v432, 1
        %v488 = vsel %vm470, %v486, %v487
        %v489 = vrot.slane %v433, 1
        %v490 = vsel %vm470, %v487, %v489
        %v491 = vrot.slane %v434, 1
        %v492 = vrot.slane %v435, 1
        %v493 = vsel %vm470, %v491, %v492
        %v494 = vrot.slane %v436, 1
        %v495 = vsel %vm470, %v492, %v494
        %v496 = vrot.slane %v437, 1
        %v497 = vrot.slane %v438, 1
        %v498 = vsel %vm470, %v496, %v497
        %v499 = vrot.slane %v439, 1
        %v500 = vsel %vm470, %v497, %v499
        %v501 = vrot.slane %v440, 1
        %v502 = vrot.slane %v441, 1
        %v503 = vsel %vm470, %v501, %v502
        %v504 = vrot.slane %v442, 1
        %v505 = vsel %vm470, %v502, %v504
        %v506 = vrot.slane %v443, 1
        %v507 = vrot.slane %v444, 1
        %v508 = vsel %vm470, %v506, %v507
        %v509 = vrot.slane %v445, 1
        %v510 = vsel %vm470, %v507, %v509
        %v527 = vadd.f32 %v402, %v473
        %v528 = vadd.f32 %v403, %v475
        %v529 = vadd.f32 %v404, %v478
        %v530 = vadd.f32 %v405, %v480
        %v531 = vadd.f32 %v406, %v483
        %v532 = vadd.f32 %v407, %v485
        %v533 = vadd.f32 %v408, %v488
        %v534 = vadd.f32 %v409, %v490
        %v535 = vadd.f32 %v410, %v493
        %v536 = vadd.f32 %v411, %v495
        %v537 = vadd.f32 %v412, %v498
        %v538 = vadd.f32 %v413, %v500
        %v539 = vadd.f32 %v414, %v503
        %v540 = vadd.f32 %v415, %v505
        %v541 = vadd.f32 %v416, %v508
        %v542 = vadd.f32 %v417, %v510
        %v543 = vlaneseq
        %v544 = vshrl.u32 %v543, 7
        %v545 = vsub.s32 2, %v544
        %v546 = vrot.slane %v348, %v545
        %v547 = vmul.f32 %v358, %v546
        %v548 = vmul.f32 %v359, %v546
        %v549 = vmul.f32 %v360, %v546
        %v550 = vmul.f32 %v361, %v546
        %v551 = vmul.f32 %v362, %v546
        %v552 = vmul.f32 %v363, %v546
        %v553 = vmul.f32 %v364, %v546
        %v554 = vmul.f32 %v365, %v546
        %v555 = vmul.f32 %v366, %v546
        %v556 = vmul.f32 %v367, %v546
        %v557 = vmul.f32 %v368, %v546
        %v558 = vmul.f32 %v369, %v546
        %v559 = vmul.f32 %v370, %v546
        %v560 = vmul.f32 %v371, %v546
        %v561 = vmul.f32 %v372, %v546
        %v562 = vmul.f32 %v373, %v546
        %v563 = vmul.f32 %v374, %v546
        %v564 = vmul.f32 %v375, %v546
        %v565 = vmul.f32 %v376, %v546
        %v566 = vmul.f32 %v377, %v546
        %v567 = vmul.f32 %v378, %v546
        %v568 = vmul.f32 %v379, %v546
        %v569 = vmul.f32 %v380, %v546
        %v570 = vmul.f32 %v381, %v546
        %vm595 = vcmask 1045504
        %v596 = vrot.slane %v547, 2
        %v597 = vrot.slane %v548, 2
        %v598 = vsel %vm595, %v596, %v597
        %v599 = vrot.slane %v549, 2
        %v600 = vsel %vm595, %v597, %v599
        %v601 = vrot.slane %v550, 2
        %v602 = vrot.slane %v551, 2
        %v603 = vsel %vm595, %v601, %v602
        %v604 = vrot.slane %v552, 2
        %v605 = vsel %vm595, %v602, %v604
        %v606 = vrot.slane %v553, 2
        %v607 = vrot.slane %v554, 2
        %v608 = vsel %vm595, %v606, %v607
        %v609 = vrot.slane %v555, 2
        %v610 = vsel %vm595, %v607, %v609
        %v611 = vrot.slane %v556, 2
        %v612 = vrot.slane %v557, 2
        %v613 = vsel %vm595, %v611, %v612
        %v614 = vrot.slane %v558, 2
        %v615 = vsel %vm595, %v612, %v614
        %v616 = vrot.slane %v559, 2
        %v617 = vrot.slane %v560, 2
        %v618 = vsel %vm595, %v616, %v617
        %v619 = vrot.slane %v561, 2
        %v620 = vsel %vm595, %v617, %v619
        %v621 = vrot.slane %v562, 2
        %v622 = vrot.slane %v563, 2
        %v623 = vsel %vm595, %v621, %v622
        %v624 = vrot.slane %v564, 2
        %v625 = vsel %vm595, %v622, %v624
        %v626 = vrot.slane %v565, 2
        %v627 = vrot.slane %v566, 2
        %v628 = vsel %vm595, %v626, %v627
        %v629 = vrot.slane %v567, 2
        %v630 = vsel %vm595, %v627, %v629
        %v631 = vrot.slane %v568, 2
        %v632 = vrot.slane %v569, 2
        %v633 = vsel %vm595, %v631, %v632
        %v634 = vrot.slane %v570, 2
        %v635 = vsel %vm595, %v632, %v634
        %v652 = vadd.f32 %v527, %v598
        %v653 = vadd.f32 %v528, %v600
        %v654 = vadd.f32 %v529, %v603
        %v655 = vadd.f32 %v530, %v605
        %v656 = vadd.f32 %v531, %v608
        %v657 = vadd.f32 %v532, %v610
        %v658 = vadd.f32 %v533, %v613
        %v659 = vadd.f32 %v534, %v615
        %v660 = vadd.f32 %v535, %v618
        %v661 = vadd.f32 %v536, %v620
        %v662 = vadd.f32 %v537, %v623
        %v663 = vadd.f32 %v538, %v625
        %v664 = vadd.f32 %v539, %v628
        %v665 = vadd.f32 %v540, %v630
        %v666 = vadd.f32 %v541, %v633
        %v667 = vadd.f32 %v542, %v635
        %v668 = vlaneseq
        %v669 = vshrl.u32 %v668, 7
        %v670 = vsub.s32 3, %v669
        %v671 = vrot.slane %v348, %v670
        %v672 = vmul.f32 %v358, %v671
        %v673 = vmul.f32 %v359, %v671
        %v674 = vmul.f32 %v360, %v671
        %v675 = vmul.f32 %v361, %v671
        %v676 = vmul.f32 %v362, %v671
        %v677 = vmul.f32 %v363, %v671
        %v678 = vmul.f32 %v364, %v671
        %v679 = vmul.f32 %v365, %v671
        %v680 = vmul.f32 %v366, %v671
        %v681 = vmul.f32 %v367, %v671
        %v682 = vmul.f32 %v368, %v671
        %v683 = vmul.f32 %v369, %v671
        %v684 = vmul.f32 %v370, %v671
        %v685 = vmul.f32 %v371, %v671
        %v686 = vmul.f32 %v372, %v671
        %v687 = vmul.f32 %v373, %v671
        %v688 = vmul.f32 %v374, %v671
        %v689 = vmul.f32 %v375, %v671
        %v690 = vmul.f32 %v376, %v671
        %v691 = vmul.f32 %v377, %v671
        %v692 = vmul.f32 %v378, %v671
        %v693 = vmul.f32 %v379, %v671
        %v694 = vmul.f32 %v380, %v671
        %v695 = vmul.f32 %v381, %v671
        %vm720 = vcmask 1044480
        %v721 = vrot.slane %v672, 3
        %v722 = vrot.slane %v673, 3
        %v723 = vsel %vm720, %v721, %v722
        %v724 = vrot.slane %v674, 3
        %v725 = vsel %vm720, %v722, %v724
        %v726 = vrot.slane %v675, 3
        %v727 = vrot.slane %v676, 3
        %v728 = vsel %vm720, %v726, %v727
        %v729 = vrot.slane %v677, 3
        %v730 = vsel %vm720, %v727, %v729
        %v731 = vrot.slane %v678, 3
        %v732 = vrot.slane %v679, 3
        %v733 = vsel %vm720, %v731, %v732
        %v734 = vrot.slane %v680, 3
        %v735 = vsel %vm720, %v732, %v734
        %v736 = vrot.slane %v681, 3
        %v737 = vrot.slane %v682, 3
        %v738 = vsel %vm720, %v736, %v737
        %v739 = vrot.slane %v683, 3
        %v740 = vsel %vm720, %v737, %v739
        %v741 = vrot.slane %v684, 3
        %v742 = vrot.slane %v685, 3
        %v743 = vsel %vm720, %v741, %v742
        %v744 = vrot.slane %v686, 3
        %v745 = vsel %vm720, %v742, %v744
        %v746 = vrot.slane %v687, 3
        %v747 = vrot.slane %v688, 3
        %v748 = vsel %vm720, %v746, %v747
        %v749 = vrot.slane %v689, 3
        %v750 = vsel %vm720, %v747, %v749
        %v751 = vrot.slane %v690, 3
        %v752 = vrot.slane %v691, 3
        %v753 = vsel %vm720, %v751, %v752
        %v754 = vrot.slane %v692, 3
        %v755 = vsel %vm720, %v752, %v754
        %v756 = vrot.slane %v693, 3
        %v757 = vrot.slane %v694, 3
        %v758 = vsel %vm720, %v756, %v757
        %v759 = vrot.slane %v695, 3
        %v760 = vsel %vm720, %v757, %v759
        %v777 = vadd.f32 %v652, %v723
        %v778 = vadd.f32 %v653, %v725
        %v779 = vadd.f32 %v654, %v728
        %v780 = vadd.f32 %v655, %v730
        %v781 = vadd.f32 %v656, %v733
        %v782 = vadd.f32 %v657, %v735
        %v783 = vadd.f32 %v658, %v738
        %v784 = vadd.f32 %v659, %v740
        %v785 = vadd.f32 %v660, %v743
        %v786 = vadd.f32 %v661, %v745
        %v787 = vadd.f32 %v662, %v748
        %v788 = vadd.f32 %v663, %v750
        %v789 = vadd.f32 %v664, %v753
        %v790 = vadd.f32 %v665, %v755
        %v791 = vadd.f32 %v666, %v758
        %v792 = vadd.f32 %v667, %v760
        %v793 = vlaneseq
        %v794 = vshrl.u32 %v793, 7
        %v795 = vsub.s32 4, %v794
        %v796 = vrot.slane %v348, %v795
        %v797 = vmul.f32 %v358, %v796
        %v798 = vmul.f32 %v359, %v796
        %v799 = vmul.f32 %v360, %v796
        %v800 = vmul.f32 %v361, %v796
        %v801 = vmul.f32 %v362, %v796
        %v802 = vmul.f32 %v363, %v796
        %v803 = vmul.f32 %v364, %v796
        %v804 = vmul.f32 %v365, %v796
        %v805 = vmul.f32 %v366, %v796
        %v806 = vmul.f32 %v367, %v796
        %v807 = vmul.f32 %v368, %v796
        %v808 = vmul.f32 %v369, %v796
        %v809 = vmul.f32 %v370, %v796
        %v810 = vmul.f32 %v371, %v796
        %v811 = vmul.f32 %v372, %v796
        %v812 = vmul.f32 %v373, %v796
        %v813 = vmul.f32 %v374, %v796
        %v814 = vmul.f32 %v375, %v796
        %v815 = vmul.f32 %v376, %v796
        %v816 = vmul.f32 %v377, %v796
        %v817 = vmul.f32 %v378, %v796
        %v818 = vmul.f32 %v379, %v796
        %v819 = vmul.f32 %v380, %v796
        %v820 = vmul.f32 %v381, %v796
        %vm845 = vcmask 1043456
        %v846 = vrot.slane %v797, 4
        %v847 = vrot.slane %v798, 4
        %v848 = vsel %vm845, %v846, %v847
        %v849 = vrot.slane %v799, 4
        %v850 = vsel %vm845, %v847, %v849
        %v851 = vrot.slane %v800, 4
        %v852 = vrot.slane %v801, 4
        %v853 = vsel %vm845, %v851, %v852
        %v854 = vrot.slane %v802, 4
        %v855 = vsel %vm845, %v852, %v854
        %v856 = vrot.slane %v803, 4
        %v857 = vrot.slane %v804, 4
        %v858 = vsel %vm845, %v856, %v857
        %v859 = vrot.slane %v805, 4
        %v860 = vsel %vm845, %v857, %v859
        %v861 = vrot.slane %v806, 4
        %v862 = vrot.slane %v807, 4
        %v863 = vsel %vm845, %v861, %v862
        %v864 = vrot.slane %v808, 4
        %v865 = vsel %vm845, %v862, %v864
        %v866 = vrot.slane %v809, 4
        %v867 = vrot.slane %v810, 4
        %v868 = vsel %vm845, %v866, %v867
        %v869 = vrot.slane %v811, 4
        %v870 = vsel %vm845, %v867, %v869
        %v871 = vrot.slane %v812, 4
        %v872 = vrot.slane %v813, 4
        %v873 = vsel %vm845, %v871, %v872
        %v874 = vrot.slane %v814, 4
        %v875 = vsel %vm845, %v872, %v874
        %v876 = vrot.slane %v815, 4
        %v877 = vrot.slane %v816, 4
        %v878 = vsel %vm845, %v876, %v877
        %v879 = vrot.slane %v817, 4
        %v880 = vsel %vm845, %v877, %v879
        %v881 = vrot.slane %v818, 4
        %v882 = vrot.slane %v819, 4
        %v883 = vsel %vm845, %v881, %v882
        %v884 = vrot.slane %v820, 4
        %v885 = vsel %vm845, %v882, %v884
        %v902 = vadd.f32 %v777, %v848
        %v903 = vadd.f32 %v778, %v850
        %v904 = vadd.f32 %v779, %v853
        %v905 = vadd.f32 %v780, %v855
        %v906 = vadd.f32 %v781, %v858
        %v907 = vadd.f32 %v782, %v860
        %v908 = vadd.f32 %v783, %v863
        %v909 = vadd.f32 %v784, %v865
        %v910 = vadd.f32 %v785, %v868
        %v911 = vadd.f32 %v786, %v870
        %v912 = vadd.f32 %v787, %v873
        %v913 = vadd.f32 %v788, %v875
        %v914 = vadd.f32 %v789, %v878
        %v915 = vadd.f32 %v790, %v880
        %v916 = vadd.f32 %v791, %v883
        %v917 = vadd.f32 %v792, %v885
        %v918 = vlaneseq
        %v919 = vshrl.u32 %v918, 7
        %v920 = vsub.s32 5, %v919
        %v921 = vrot.slane %v348, %v920
        %v922 = vmul.f32 %v358, %v921
        %v923 = vmul.f32 %v359, %v921
        %v924 = vmul.f32 %v360, %v921
        %v925 = vmul.f32 %v361, %v921
        %v926 = vmul.f32 %v362, %v921
        %v927 = vmul.f32 %v363, %v921
        %v928 = vmul.f32 %v364, %v921
        %v929 = vmul.f32 %v365, %v921
        %v930 = vmul.f32 %v366, %v921
        %v931 = vmul.f32 %v367, %v921
        %v932 = vmul.f32 %v368, %v921
        %v933 = vmul.f32 %v369, %v921
        %v934 = vmul.f32 %v370, %v921
        %v935 = vmul.f32 %v371, %v921
        %v936 = vmul.f32 %v372, %v921
        %v937 = vmul.f32 %v373, %v921
        %v938 = vmul.f32 %v374, %v921
        %v939 = vmul.f32 %v375, %v921
        %v940 = vmul.f32 %v376, %v921
        %v941 = vmul.f32 %v377, %v921
        %v942 = vmul.f32 %v378, %v921
        %v943 = vmul.f32 %v379, %v921
        %v944 = vmul.f32 %v380, %v921
        %v945 = vmul.f32 %v381, %v921
        %vm970 = vcmask 1042432
        %v971 = vrot.slane %v922, 5
        %v972 = vrot.slane %v923, 5
        %v973 = vsel %vm970, %v971, %v972
        %v974 = vrot.slane %v924, 5
        %v975 = vsel %vm970, %v972, %v974
        %v976 = vrot.slane %v925, 5
        %v977 = vrot.slane %v926, 5
        %v978 = vsel %vm970, %v976, %v977
        %v979 = vrot.slane %v927, 5
        %v980 = vsel %vm970, %v977, %v979
        %v981 = vrot.slane %v928, 5
        %v982 = vrot.slane %v929, 5
        %v983 = vsel %vm970, %v981, %v982
        %v984 = vrot.slane %v930, 5
        %v985 = vsel %vm970, %v982, %v984
        %v986 = vrot.slane %v931, 5
        %v987 = vrot.slane %v932, 5
        %v988 = vsel %vm970, %v986, %v987
        %v989 = vrot.slane %v933, 5
        %v990 = vsel %vm970, %v987, %v989
        %v991 = vrot.slane %v934, 5
        %v992 = vrot.slane %v935, 5
        %v993 = vsel %vm970, %v991, %v992
        %v994 = vrot.slane %v936, 5
        %v995 = vsel %vm970, %v992, %v994
        %v996 = vrot.slane %v937, 5
        %v997 = vrot.slane %v938, 5
        %v998 = vsel %vm970, %v996, %v997
        %v999 = vrot.slane %v939, 5
        %v1000 = vsel %vm970, %v997, %v999
        %v1001 = vrot.slane %v940, 5
        %v1002 = vrot.slane %v941, 5
        %v1003 = vsel %vm970, %v1001, %v1002
        %v1004 = vrot.slane %v942, 5
        %v1005 = vsel %vm970, %v1002, %v1004
        %v1006 = vrot.slane %v943, 5
        %v1007 = vrot.slane %v944, 5
        %v1008 = vsel %vm970, %v1006, %v1007
        %v1009 = vrot.slane %v945, 5
        %v1010 = vsel %vm970, %v1007, %v1009
        %v1027 = vadd.f32 %v902, %v973
        %v1028 = vadd.f32 %v903, %v975
        %v1029 = vadd.f32 %v904, %v978
        %v1030 = vadd.f32 %v905, %v980
        %v1031 = vadd.f32 %v906, %v983
        %v1032 = vadd.f32 %v907, %v985
        %v1033 = vadd.f32 %v908, %v988
        %v1034 = vadd.f32 %v909, %v990
        %v1035 = vadd.f32 %v910, %v993
        %v1036 = vadd.f32 %v911, %v995
        %v1037 = vadd.f32 %v912, %v998
        %v1038 = vadd.f32 %v913, %v1000
        %v1039 = vadd.f32 %v914, %v1003
        %v1040 = vadd.f32 %v915, %v1005
        %v1041 = vadd.f32 %v916, %v1008
        %v1042 = vadd.f32 %v917, %v1010
        %v1043 = vlaneseq
        %v1044 = vshrl.u32 %v1043, 7
        %v1045 = vsub.s32 6, %v1044
        %v1046 = vrot.slane %v348, %v1045
        %v1047 = vmul.f32 %v358, %v1046
        %v1048 = vmul.f32 %v359, %v1046
        %v1049 = vmul.f32 %v360, %v1046
        %v1050 = vmul.f32 %v361, %v1046
        %v1051 = vmul.f32 %v362, %v1046
        %v1052 = vmul.f32 %v363, %v1046
        %v1053 = vmul.f32 %v364, %v1046
        %v1054 = vmul.f32 %v365, %v1046
        %v1055 = vmul.f32 %v366, %v1046
        %v1056 = vmul.f32 %v367, %v1046
        %v1057 = vmul.f32 %v368, %v1046
        %v1058 = vmul.f32 %v369, %v1046
        %v1059 = vmul.f32 %v370, %v1046
        %v1060 = vmul.f32 %v371, %v1046
        %v1061 = vmul.f32 %v372, %v1046
        %v1062 = vmul.f32 %v373, %v1046
        %v1063 = vmul.f32 %v374, %v1046
        %v1064 = vmul.f32 %v375, %v1046
        %v1065 = vmul.f32 %v376, %v1046
        %v1066 = vmul.f32 %v377, %v1046
        %v1067 = vmul.f32 %v378, %v1046
        %v1068 = vmul.f32 %v379, %v1046
        %v1069 = vmul.f32 %v380, %v1046
        %v1070 = vmul.f32 %v381, %v1046
        %vm1095 = vcmask 1041408
        %v1096 = vrot.slane %v1047, 6
        %v1097 = vrot.slane %v1048, 6
        %v1098 = vsel %vm1095, %v1096, %v1097
        %v1099 = vrot.slane %v1049, 6
        %v1100 = vsel %vm1095, %v1097, %v1099
        %v1101 = vrot.slane %v1050, 6
        %v1102 = vrot.slane %v1051, 6
        %v1103 = vsel %vm1095, %v1101, %v1102
        %v1104 = vrot.slane %v1052, 6
        %v1105 = vsel %vm1095, %v1102, %v1104
        %v1106 = vrot.slane %v1053, 6
        %v1107 = vrot.slane %v1054, 6
        %v1108 = vsel %vm1095, %v1106, %v1107
        %v1109 = vrot.slane %v1055, 6
        %v1110 = vsel %vm1095, %v1107, %v1109
        %v1111 = vrot.slane %v1056, 6
        %v1112 = vrot.slane %v1057, 6
        %v1113 = vsel %vm1095, %v1111, %v1112
        %v1114 = vrot.slane %v1058, 6
        %v1115 = vsel %vm1095, %v1112, %v1114
        %v1116 = vrot.slane %v1059, 6
        %v1117 = vrot.slane %v1060, 6
        %v1118 = vsel %vm1095, %v1116, %v1117
        %v1119 = vrot.slane %v1061, 6
        %v1120 = vsel %vm1095, %v1117, %v1119
        %v1121 = vrot.slane %v1062, 6
        %v1122 = vrot.slane %v1063, 6
        %v1123 = vsel %vm1095, %v1121, %v1122
        %v1124 = vrot.slane %v1064, 6
        %v1125 = vsel %vm1095, %v1122, %v1124
        %v1126 = vrot.slane %v1065, 6
        %v1127 = vrot.slane %v1066, 6
        %v1128 = vsel %vm1095, %v1126, %v1127
        %v1129 = vrot.slane %v1067, 6
        %v1130 = vsel %vm1095, %v1127, %v1129
        %v1131 = vrot.slane %v1068, 6
        %v1132 = vrot.slane %v1069, 6
        %v1133 = vsel %vm1095, %v1131, %v1132
        %v1134 = vrot.slane %v1070, 6
        %v1135 = vsel %vm1095, %v1132, %v1134
        %v1152 = vadd.f32 %v1027, %v1098
        %v1153 = vadd.f32 %v1028, %v1100
        %v1154 = vadd.f32 %v1029, %v1103
        %v1155 = vadd.f32 %v1030, %v1105
        %v1156 = vadd.f32 %v1031, %v1108
        %v1157 = vadd.f32 %v1032, %v1110
        %v1158 = vadd.f32 %v1033, %v1113
        %v1159 = vadd.f32 %v1034, %v1115
        %v1160 = vadd.f32 %v1035, %v1118
        %v1161 = vadd.f32 %v1036, %v1120
        %v1162 = vadd.f32 %v1037, %v1123
        %v1163 = vadd.f32 %v1038, %v1125
        %v1164 = vadd.f32 %v1039, %v1128
        %v1165 = vadd.f32 %v1040, %v1130
        %v1166 = vadd.f32 %v1041, %v1133
        %v1167 = vadd.f32 %v1042, %v1135
        %s1168 = sadd.s32 %s347, 1
        %s1169 = smul.u32 %s1168, 24
        %s1170 = scalar_lea.vmem %s344, %s1169
        %v1171 = vld [vmem:[%s1170] sm:$0xff]
        %v1172 = vld [vmem:[%s1170 + $0x8] sm:$0xff]
        %v1173 = vld [vmem:[%s1170 + $0x10] sm:$0x3f]
        %v1174 = vld [vmem:[%s1170 + $0x18] sm:$0xff]
        %v1175 = vld [vmem:[%s1170 + $0x20] sm:$0xff]
        %v1176 = vld [vmem:[%s1170 + $0x28] sm:$0x3f]
        %v1177 = vld [vmem:[%s1170 + $0x30] sm:$0xff]
        %v1178 = vld [vmem:[%s1170 + $0x38] sm:$0xff]
        %v1179 = vld [vmem:[%s1170 + $0x40] sm:$0x3f]
        %v1180 = vld [vmem:[%s1170 + $0x48] sm:$0xff]
        %v1181 = vld [vmem:[%s1170 + $0x50] sm:$0xff]
        %v1182 = vld [vmem:[%s1170 + $0x58] sm:$0x3f]
        %v1183 = vld [vmem:[%s1170 + $0x60] sm:$0xff]
        %v1184 = vld [vmem:[%s1170 + $0x68] sm:$0xff]
        %v1185 = vld [vmem:[%s1170 + $0x70] sm:$0x3f]
        %v1186 = vld [vmem:[%s1170 + $0x78] sm:$0xff]
        %v1187 = vld [vmem:[%s1170 + $0x80] sm:$0xff]
        %v1188 = vld [vmem:[%s1170 + $0x88] sm:$0x3f]
        %v1189 = vld [vmem:[%s1170 + $0x90] sm:$0xff]
        %v1190 = vld [vmem:[%s1170 + $0x98] sm:$0xff]
        %v1191 = vld [vmem:[%s1170 + $0xa0] sm:$0x3f]
        %v1192 = vld [vmem:[%s1170 + $0xa8] sm:$0xff]
        %v1193 = vld [vmem:[%s1170 + $0xb0] sm:$0xff]
        %v1194 = vld [vmem:[%s1170 + $0xb8] sm:$0x3f]
        %v1195 = vlaneseq
        %v1196 = vshrl.u32 %v1195, 7
        %v1197 = vsub.s32 7, %v1196
        %v1198 = vrot.slane %v348, %v1197
        %v1199 = vmul.f32 %v1171, %v1198
        %v1200 = vmul.f32 %v1172, %v1198
        %v1201 = vmul.f32 %v1174, %v1198
        %v1202 = vmul.f32 %v1175, %v1198
        %v1203 = vmul.f32 %v1177, %v1198
        %v1204 = vmul.f32 %v1178, %v1198
        %v1205 = vmul.f32 %v1180, %v1198
        %v1206 = vmul.f32 %v1181, %v1198
        %v1207 = vmul.f32 %v1183, %v1198
        %v1208 = vmul.f32 %v1184, %v1198
        %v1209 = vmul.f32 %v1186, %v1198
        %v1210 = vmul.f32 %v1187, %v1198
        %v1211 = vmul.f32 %v1189, %v1198
        %v1212 = vmul.f32 %v1190, %v1198
        %v1213 = vmul.f32 %v1192, %v1198
        %v1214 = vmul.f32 %v1193, %v1198
        %v1215 = vadd.f32 %v1152, %v1199
        %v1216 = vadd.f32 %v1153, %v1200
        %v1217 = vadd.f32 %v1154, %v1201
        %v1218 = vadd.f32 %v1155, %v1202
        %v1219 = vadd.f32 %v1156, %v1203
        %v1220 = vadd.f32 %v1157, %v1204
        %v1221 = vadd.f32 %v1158, %v1205
        %v1222 = vadd.f32 %v1159, %v1206
        %v1223 = vadd.f32 %v1160, %v1207
        %v1224 = vadd.f32 %v1161, %v1208
        %v1225 = vadd.f32 %v1162, %v1209
        %v1226 = vadd.f32 %v1163, %v1210
        %v1227 = vadd.f32 %v1164, %v1211
        %v1228 = vadd.f32 %v1165, %v1212
        %v1229 = vadd.f32 %v1166, %v1213
        %v1230 = vadd.f32 %v1167, %v1214
        %v1231 = vlaneseq
        %v1232 = vshrl.u32 %v1231, 7
        %v1233 = vsub.s32 0, %v1232
        %v1234 = vrot.slane %v349, %v1233
        %v1235 = vmul.f32 %v1171, %v1234
        %v1236 = vmul.f32 %v1172, %v1234
        %v1237 = vmul.f32 %v1173, %v1234
        %v1238 = vmul.f32 %v1174, %v1234
        %v1239 = vmul.f32 %v1175, %v1234
        %v1240 = vmul.f32 %v1176, %v1234
        %v1241 = vmul.f32 %v1177, %v1234
        %v1242 = vmul.f32 %v1178, %v1234
        %v1243 = vmul.f32 %v1179, %v1234
        %v1244 = vmul.f32 %v1180, %v1234
        %v1245 = vmul.f32 %v1181, %v1234
        %v1246 = vmul.f32 %v1182, %v1234
        %v1247 = vmul.f32 %v1183, %v1234
        %v1248 = vmul.f32 %v1184, %v1234
        %v1249 = vmul.f32 %v1185, %v1234
        %v1250 = vmul.f32 %v1186, %v1234
        %v1251 = vmul.f32 %v1187, %v1234
        %v1252 = vmul.f32 %v1188, %v1234
        %v1253 = vmul.f32 %v1189, %v1234
        %v1254 = vmul.f32 %v1190, %v1234
        %v1255 = vmul.f32 %v1191, %v1234
        %v1256 = vmul.f32 %v1192, %v1234
        %v1257 = vmul.f32 %v1193, %v1234
        %v1258 = vmul.f32 %v1194, %v1234
        %v1283 = vrot.slane %v1235, 1
        %v1284 = vrot.slane %v1236, 1
        %v1285 = vsel %vm470, %v1283, %v1284
        %v1286 = vrot.slane %v1237, 1
        %v1287 = vsel %vm470, %v1284, %v1286
        %v1288 = vrot.slane %v1238, 1
        %v1289 = vrot.slane %v1239, 1
        %v1290 = vsel %vm470, %v1288, %v1289
        %v1291 = vrot.slane %v1240, 1
        %v1292 = vsel %vm470, %v1289, %v1291
        %v1293 = vrot.slane %v1241, 1
        %v1294 = vrot.slane %v1242, 1
        %v1295 = vsel %vm470, %v1293, %v1294
        %v1296 = vrot.slane %v1243, 1
        %v1297 = vsel %vm470, %v1294, %v1296
        %v1298 = vrot.slane %v1244, 1
        %v1299 = vrot.slane %v1245, 1
        %v1300 = vsel %vm470, %v1298, %v1299
        %v1301 = vrot.slane %v1246, 1
        %v1302 = vsel %vm470, %v1299, %v1301
        %v1303 = vrot.slane %v1247, 1
        %v1304 = vrot.slane %v1248, 1
        %v1305 = vsel %vm470, %v1303, %v1304
        %v1306 = vrot.slane %v1249, 1
        %v1307 = vsel %vm470, %v1304, %v1306
        %v1308 = vrot.slane %v1250, 1
        %v1309 = vrot.slane %v1251, 1
        %v1310 = vsel %vm470, %v1308, %v1309
        %v1311 = vrot.slane %v1252, 1
        %v1312 = vsel %vm470, %v1309, %v1311
        %v1313 = vrot.slane %v1253, 1
        %v1314 = vrot.slane %v1254, 1
        %v1315 = vsel %vm470, %v1313, %v1314
        %v1316 = vrot.slane %v1255, 1
        %v1317 = vsel %vm470, %v1314, %v1316
        %v1318 = vrot.slane %v1256, 1
        %v1319 = vrot.slane %v1257, 1
        %v1320 = vsel %vm470, %v1318, %v1319
        %v1321 = vrot.slane %v1258, 1
        %v1322 = vsel %vm470, %v1319, %v1321
        %v1339 = vadd.f32 %v1215, %v1285
        %v1340 = vadd.f32 %v1216, %v1287
        %v1341 = vadd.f32 %v1217, %v1290
        %v1342 = vadd.f32 %v1218, %v1292
        %v1343 = vadd.f32 %v1219, %v1295
        %v1344 = vadd.f32 %v1220, %v1297
        %v1345 = vadd.f32 %v1221, %v1300
        %v1346 = vadd.f32 %v1222, %v1302
        %v1347 = vadd.f32 %v1223, %v1305
        %v1348 = vadd.f32 %v1224, %v1307
        %v1349 = vadd.f32 %v1225, %v1310
        %v1350 = vadd.f32 %v1226, %v1312
        %v1351 = vadd.f32 %v1227, %v1315
        %v1352 = vadd.f32 %v1228, %v1317
        %v1353 = vadd.f32 %v1229, %v1320
        %v1354 = vadd.f32 %v1230, %v1322
        %v1355 = vlaneseq
        %v1356 = vshrl.u32 %v1355, 7
        %v1357 = vsub.s32 1, %v1356
        %v1358 = vrot.slane %v349, %v1357
        %v1359 = vmul.f32 %v1171, %v1358
        %v1360 = vmul.f32 %v1172, %v1358
        %v1361 = vmul.f32 %v1173, %v1358
        %v1362 = vmul.f32 %v1174, %v1358
        %v1363 = vmul.f32 %v1175, %v1358
        %v1364 = vmul.f32 %v1176, %v1358
        %v1365 = vmul.f32 %v1177, %v1358
        %v1366 = vmul.f32 %v1178, %v1358
        %v1367 = vmul.f32 %v1179, %v1358
        %v1368 = vmul.f32 %v1180, %v1358
        %v1369 = vmul.f32 %v1181, %v1358
        %v1370 = vmul.f32 %v1182, %v1358
        %v1371 = vmul.f32 %v1183, %v1358
        %v1372 = vmul.f32 %v1184, %v1358
        %v1373 = vmul.f32 %v1185, %v1358
        %v1374 = vmul.f32 %v1186, %v1358
        %v1375 = vmul.f32 %v1187, %v1358
        %v1376 = vmul.f32 %v1188, %v1358
        %v1377 = vmul.f32 %v1189, %v1358
        %v1378 = vmul.f32 %v1190, %v1358
        %v1379 = vmul.f32 %v1191, %v1358
        %v1380 = vmul.f32 %v1192, %v1358
        %v1381 = vmul.f32 %v1193, %v1358
        %v1382 = vmul.f32 %v1194, %v1358
        %v1407 = vrot.slane %v1359, 2
        %v1408 = vrot.slane %v1360, 2
        %v1409 = vsel %vm595, %v1407, %v1408
        %v1410 = vrot.slane %v1361, 2
        %v1411 = vsel %vm595, %v1408, %v1410
        %v1412 = vrot.slane %v1362, 2
        %v1413 = vrot.slane %v1363, 2
        %v1414 = vsel %vm595, %v1412, %v1413
        %v1415 = vrot.slane %v1364, 2
        %v1416 = vsel %vm595, %v1413, %v1415
        %v1417 = vrot.slane %v1365, 2
        %v1418 = vrot.slane %v1366, 2
        %v1419 = vsel %vm595, %v1417, %v1418
        %v1420 = vrot.slane %v1367, 2
        %v1421 = vsel %vm595, %v1418, %v1420
        %v1422 = vrot.slane %v1368, 2
        %v1423 = vrot.slane %v1369, 2
        %v1424 = vsel %vm595, %v1422, %v1423
        %v1425 = vrot.slane %v1370, 2
        %v1426 = vsel %vm595, %v1423, %v1425
        %v1427 = vrot.slane %v1371, 2
        %v1428 = vrot.slane %v1372, 2
        %v1429 = vsel %vm595, %v1427, %v1428
        %v1430 = vrot.slane %v1373, 2
        %v1431 = vsel %vm595, %v1428, %v1430
        %v1432 = vrot.slane %v1374, 2
        %v1433 = vrot.slane %v1375, 2
        %v1434 = vsel %vm595, %v1432, %v1433
        %v1435 = vrot.slane %v1376, 2
        %v1436 = vsel %vm595, %v1433, %v1435
        %v1437 = vrot.slane %v1377, 2
        %v1438 = vrot.slane %v1378, 2
        %v1439 = vsel %vm595, %v1437, %v1438
        %v1440 = vrot.slane %v1379, 2
        %v1441 = vsel %vm595, %v1438, %v1440
        %v1442 = vrot.slane %v1380, 2
        %v1443 = vrot.slane %v1381, 2
        %v1444 = vsel %vm595, %v1442, %v1443
        %v1445 = vrot.slane %v1382, 2
        %v1446 = vsel %vm595, %v1443, %v1445
        %v1463 = vadd.f32 %v1339, %v1409
        %v1464 = vadd.f32 %v1340, %v1411
        %v1465 = vadd.f32 %v1341, %v1414
        %v1466 = vadd.f32 %v1342, %v1416
        %v1467 = vadd.f32 %v1343, %v1419
        %v1468 = vadd.f32 %v1344, %v1421
        %v1469 = vadd.f32 %v1345, %v1424
        %v1470 = vadd.f32 %v1346, %v1426
        %v1471 = vadd.f32 %v1347, %v1429
        %v1472 = vadd.f32 %v1348, %v1431
        %v1473 = vadd.f32 %v1349, %v1434
        %v1474 = vadd.f32 %v1350, %v1436
        %v1475 = vadd.f32 %v1351, %v1439
        %v1476 = vadd.f32 %v1352, %v1441
        %v1477 = vadd.f32 %v1353, %v1444
        %v1478 = vadd.f32 %v1354, %v1446
        %v1479 = vlaneseq
        %v1480 = vshrl.u32 %v1479, 7
        %v1481 = vsub.s32 2, %v1480
        %v1482 = vrot.slane %v349, %v1481
        %v1483 = vmul.f32 %v1171, %v1482
        %v1484 = vmul.f32 %v1172, %v1482
        %v1485 = vmul.f32 %v1173, %v1482
        %v1486 = vmul.f32 %v1174, %v1482
        %v1487 = vmul.f32 %v1175, %v1482
        %v1488 = vmul.f32 %v1176, %v1482
        %v1489 = vmul.f32 %v1177, %v1482
        %v1490 = vmul.f32 %v1178, %v1482
        %v1491 = vmul.f32 %v1179, %v1482
        %v1492 = vmul.f32 %v1180, %v1482
        %v1493 = vmul.f32 %v1181, %v1482
        %v1494 = vmul.f32 %v1182, %v1482
        %v1495 = vmul.f32 %v1183, %v1482
        %v1496 = vmul.f32 %v1184, %v1482
        %v1497 = vmul.f32 %v1185, %v1482
        %v1498 = vmul.f32 %v1186, %v1482
        %v1499 = vmul.f32 %v1187, %v1482
        %v1500 = vmul.f32 %v1188, %v1482
        %v1501 = vmul.f32 %v1189, %v1482
        %v1502 = vmul.f32 %v1190, %v1482
        %v1503 = vmul.f32 %v1191, %v1482
        %v1504 = vmul.f32 %v1192, %v1482
        %v1505 = vmul.f32 %v1193, %v1482
        %v1506 = vmul.f32 %v1194, %v1482
        %v1531 = vrot.slane %v1483, 3
        %v1532 = vrot.slane %v1484, 3
        %v1533 = vsel %vm720, %v1531, %v1532
        %v1534 = vrot.slane %v1485, 3
        %v1535 = vsel %vm720, %v1532, %v1534
        %v1536 = vrot.slane %v1486, 3
        %v1537 = vrot.slane %v1487, 3
        %v1538 = vsel %vm720, %v1536, %v1537
        %v1539 = vrot.slane %v1488, 3
        %v1540 = vsel %vm720, %v1537, %v1539
        %v1541 = vrot.slane %v1489, 3
        %v1542 = vrot.slane %v1490, 3
        %v1543 = vsel %vm720, %v1541, %v1542
        %v1544 = vrot.slane %v1491, 3
        %v1545 = vsel %vm720, %v1542, %v1544
        %v1546 = vrot.slane %v1492, 3
        %v1547 = vrot.slane %v1493, 3
        %v1548 = vsel %vm720, %v1546, %v1547
        %v1549 = vrot.slane %v1494, 3
        %v1550 = vsel %vm720, %v1547, %v1549
        %v1551 = vrot.slane %v1495, 3
        %v1552 = vrot.slane %v1496, 3
        %v1553 = vsel %vm720, %v1551, %v1552
        %v1554 = vrot.slane %v1497, 3
        %v1555 = vsel %vm720, %v1552, %v1554
        %v1556 = vrot.slane %v1498, 3
        %v1557 = vrot.slane %v1499, 3
        %v1558 = vsel %vm720, %v1556, %v1557
        %v1559 = vrot.slane %v1500, 3
        %v1560 = vsel %vm720, %v1557, %v1559
        %v1561 = vrot.slane %v1501, 3
        %v1562 = vrot.slane %v1502, 3
        %v1563 = vsel %vm720, %v1561, %v1562
        %v1564 = vrot.slane %v1503, 3
        %v1565 = vsel %vm720, %v1562, %v1564
        %v1566 = vrot.slane %v1504, 3
        %v1567 = vrot.slane %v1505, 3
        %v1568 = vsel %vm720, %v1566, %v1567
        %v1569 = vrot.slane %v1506, 3
        %v1570 = vsel %vm720, %v1567, %v1569
        %v1587 = vadd.f32 %v1463, %v1533
        %v1588 = vadd.f32 %v1464, %v1535
        %v1589 = vadd.f32 %v1465, %v1538
        %v1590 = vadd.f32 %v1466, %v1540
        %v1591 = vadd.f32 %v1467, %v1543
        %v1592 = vadd.f32 %v1468, %v1545
        %v1593 = vadd.f32 %v1469, %v1548
        %v1594 = vadd.f32 %v1470, %v1550
        %v1595 = vadd.f32 %v1471, %v1553
        %v1596 = vadd.f32 %v1472, %v1555
        %v1597 = vadd.f32 %v1473, %v1558
        %v1598 = vadd.f32 %v1474, %v1560
        %v1599 = vadd.f32 %v1475, %v1563
        %v1600 = vadd.f32 %v1476, %v1565
        %v1601 = vadd.f32 %v1477, %v1568
        %v1602 = vadd.f32 %v1478, %v1570
        %v1603 = vlaneseq
        %v1604 = vshrl.u32 %v1603, 7
        %v1605 = vsub.s32 3, %v1604
        %v1606 = vrot.slane %v349, %v1605
        %v1607 = vmul.f32 %v1171, %v1606
        %v1608 = vmul.f32 %v1172, %v1606
        %v1609 = vmul.f32 %v1173, %v1606
        %v1610 = vmul.f32 %v1174, %v1606
        %v1611 = vmul.f32 %v1175, %v1606
        %v1612 = vmul.f32 %v1176, %v1606
        %v1613 = vmul.f32 %v1177, %v1606
        %v1614 = vmul.f32 %v1178, %v1606
        %v1615 = vmul.f32 %v1179, %v1606
        %v1616 = vmul.f32 %v1180, %v1606
        %v1617 = vmul.f32 %v1181, %v1606
        %v1618 = vmul.f32 %v1182, %v1606
        %v1619 = vmul.f32 %v1183, %v1606
        %v1620 = vmul.f32 %v1184, %v1606
        %v1621 = vmul.f32 %v1185, %v1606
        %v1622 = vmul.f32 %v1186, %v1606
        %v1623 = vmul.f32 %v1187, %v1606
        %v1624 = vmul.f32 %v1188, %v1606
        %v1625 = vmul.f32 %v1189, %v1606
        %v1626 = vmul.f32 %v1190, %v1606
        %v1627 = vmul.f32 %v1191, %v1606
        %v1628 = vmul.f32 %v1192, %v1606
        %v1629 = vmul.f32 %v1193, %v1606
        %v1630 = vmul.f32 %v1194, %v1606
        %v1655 = vrot.slane %v1607, 4
        %v1656 = vrot.slane %v1608, 4
        %v1657 = vsel %vm845, %v1655, %v1656
        %v1658 = vrot.slane %v1609, 4
        %v1659 = vsel %vm845, %v1656, %v1658
        %v1660 = vrot.slane %v1610, 4
        %v1661 = vrot.slane %v1611, 4
        %v1662 = vsel %vm845, %v1660, %v1661
        %v1663 = vrot.slane %v1612, 4
        %v1664 = vsel %vm845, %v1661, %v1663
        %v1665 = vrot.slane %v1613, 4
        %v1666 = vrot.slane %v1614, 4
        %v1667 = vsel %vm845, %v1665, %v1666
        %v1668 = vrot.slane %v1615, 4
        %v1669 = vsel %vm845, %v1666, %v1668
        %v1670 = vrot.slane %v1616, 4
        %v1671 = vrot.slane %v1617, 4
        %v1672 = vsel %vm845, %v1670, %v1671
        %v1673 = vrot.slane %v1618, 4
        %v1674 = vsel %vm845, %v1671, %v1673
        %v1675 = vrot.slane %v1619, 4
        %v1676 = vrot.slane %v1620, 4
        %v1677 = vsel %vm845, %v1675, %v1676
        %v1678 = vrot.slane %v1621, 4
        %v1679 = vsel %vm845, %v1676, %v1678
        %v1680 = vrot.slane %v1622, 4
        %v1681 = vrot.slane %v1623, 4
        %v1682 = vsel %vm845, %v1680, %v1681
        %v1683 = vrot.slane %v1624, 4
        %v1684 = vsel %vm845, %v1681, %v1683
        %v1685 = vrot.slane %v1625, 4
        %v1686 = vrot.slane %v1626, 4
        %v1687 = vsel %vm845, %v1685, %v1686
        %v1688 = vrot.slane %v1627, 4
        %v1689 = vsel %vm845, %v1686, %v1688
        %v1690 = vrot.slane %v1628, 4
        %v1691 = vrot.slane %v1629, 4
        %v1692 = vsel %vm845, %v1690, %v1691
        %v1693 = vrot.slane %v1630, 4
        %v1694 = vsel %vm845, %v1691, %v1693
        %v1711 = vadd.f32 %v1587, %v1657
        %v1712 = vadd.f32 %v1588, %v1659
        %v1713 = vadd.f32 %v1589, %v1662
        %v1714 = vadd.f32 %v1590, %v1664
        %v1715 = vadd.f32 %v1591, %v1667
        %v1716 = vadd.f32 %v1592, %v1669
        %v1717 = vadd.f32 %v1593, %v1672
        %v1718 = vadd.f32 %v1594, %v1674
        %v1719 = vadd.f32 %v1595, %v1677
        %v1720 = vadd.f32 %v1596, %v1679
        %v1721 = vadd.f32 %v1597, %v1682
        %v1722 = vadd.f32 %v1598, %v1684
        %v1723 = vadd.f32 %v1599, %v1687
        %v1724 = vadd.f32 %v1600, %v1689
        %v1725 = vadd.f32 %v1601, %v1692
        %v1726 = vadd.f32 %v1602, %v1694
        %v1727 = vlaneseq
        %v1728 = vshrl.u32 %v1727, 7
        %v1729 = vsub.s32 4, %v1728
        %v1730 = vrot.slane %v349, %v1729
        %v1731 = vmul.f32 %v1171, %v1730
        %v1732 = vmul.f32 %v1172, %v1730
        %v1733 = vmul.f32 %v1173, %v1730
        %v1734 = vmul.f32 %v1174, %v1730
        %v1735 = vmul.f32 %v1175, %v1730
        %v1736 = vmul.f32 %v1176, %v1730
        %v1737 = vmul.f32 %v1177, %v1730
        %v1738 = vmul.f32 %v1178, %v1730
        %v1739 = vmul.f32 %v1179, %v1730
        %v1740 = vmul.f32 %v1180, %v1730
        %v1741 = vmul.f32 %v1181, %v1730
        %v1742 = vmul.f32 %v1182, %v1730
        %v1743 = vmul.f32 %v1183, %v1730
        %v1744 = vmul.f32 %v1184, %v1730
        %v1745 = vmul.f32 %v1185, %v1730
        %v1746 = vmul.f32 %v1186, %v1730
        %v1747 = vmul.f32 %v1187, %v1730
        %v1748 = vmul.f32 %v1188, %v1730
        %v1749 = vmul.f32 %v1189, %v1730
        %v1750 = vmul.f32 %v1190, %v1730
        %v1751 = vmul.f32 %v1191, %v1730
        %v1752 = vmul.f32 %v1192, %v1730
        %v1753 = vmul.f32 %v1193, %v1730
        %v1754 = vmul.f32 %v1194, %v1730
        %v1779 = vrot.slane %v1731, 5
        %v1780 = vrot.slane %v1732, 5
        %v1781 = vsel %vm970, %v1779, %v1780
        %v1782 = vrot.slane %v1733, 5
        %v1783 = vsel %vm970, %v1780, %v1782
        %v1784 = vrot.slane %v1734, 5
        %v1785 = vrot.slane %v1735, 5
        %v1786 = vsel %vm970, %v1784, %v1785
        %v1787 = vrot.slane %v1736, 5
        %v1788 = vsel %vm970, %v1785, %v1787
        %v1789 = vrot.slane %v1737, 5
        %v1790 = vrot.slane %v1738, 5
        %v1791 = vsel %vm970, %v1789, %v1790
        %v1792 = vrot.slane %v1739, 5
        %v1793 = vsel %vm970, %v1790, %v1792
        %v1794 = vrot.slane %v1740, 5
        %v1795 = vrot.slane %v1741, 5
        %v1796 = vsel %vm970, %v1794, %v1795
        %v1797 = vrot.slane %v1742, 5
        %v1798 = vsel %vm970, %v1795, %v1797
        %v1799 = vrot.slane %v1743, 5
        %v1800 = vrot.slane %v1744, 5
        %v1801 = vsel %vm970, %v1799, %v1800
        %v1802 = vrot.slane %v1745, 5
        %v1803 = vsel %vm970, %v1800, %v1802
        %v1804 = vrot.slane %v1746, 5
        %v1805 = vrot.slane %v1747, 5
        %v1806 = vsel %vm970, %v1804, %v1805
        %v1807 = vrot.slane %v1748, 5
        %v1808 = vsel %vm970, %v1805, %v1807
        %v1809 = vrot.slane %v1749, 5
        %v1810 = vrot.slane %v1750, 5
        %v1811 = vsel %vm970, %v1809, %v1810
        %v1812 = vrot.slane %v1751, 5
        %v1813 = vsel %vm970, %v1810, %v1812
        %v1814 = vrot.slane %v1752, 5
        %v1815 = vrot.slane %v1753, 5
        %v1816 = vsel %vm970, %v1814, %v1815
        %v1817 = vrot.slane %v1754, 5
        %v1818 = vsel %vm970, %v1815, %v1817
        %v1835 = vadd.f32 %v1711, %v1781
        %v1836 = vadd.f32 %v1712, %v1783
        %v1837 = vadd.f32 %v1713, %v1786
        %v1838 = vadd.f32 %v1714, %v1788
        %v1839 = vadd.f32 %v1715, %v1791
        %v1840 = vadd.f32 %v1716, %v1793
        %v1841 = vadd.f32 %v1717, %v1796
        %v1842 = vadd.f32 %v1718, %v1798
        %v1843 = vadd.f32 %v1719, %v1801
        %v1844 = vadd.f32 %v1720, %v1803
        %v1845 = vadd.f32 %v1721, %v1806
        %v1846 = vadd.f32 %v1722, %v1808
        %v1847 = vadd.f32 %v1723, %v1811
        %v1848 = vadd.f32 %v1724, %v1813
        %v1849 = vadd.f32 %v1725, %v1816
        %v1850 = vadd.f32 %v1726, %v1818
        %v1851 = vlaneseq
        %v1852 = vshrl.u32 %v1851, 7
        %v1853 = vsub.s32 5, %v1852
        %v1854 = vrot.slane %v349, %v1853
        %v1855 = vmul.f32 %v1171, %v1854
        %v1856 = vmul.f32 %v1172, %v1854
        %v1857 = vmul.f32 %v1173, %v1854
        %v1858 = vmul.f32 %v1174, %v1854
        %v1859 = vmul.f32 %v1175, %v1854
        %v1860 = vmul.f32 %v1176, %v1854
        %v1861 = vmul.f32 %v1177, %v1854
        %v1862 = vmul.f32 %v1178, %v1854
        %v1863 = vmul.f32 %v1179, %v1854
        %v1864 = vmul.f32 %v1180, %v1854
        %v1865 = vmul.f32 %v1181, %v1854
        %v1866 = vmul.f32 %v1182, %v1854
        %v1867 = vmul.f32 %v1183, %v1854
        %v1868 = vmul.f32 %v1184, %v1854
        %v1869 = vmul.f32 %v1185, %v1854
        %v1870 = vmul.f32 %v1186, %v1854
        %v1871 = vmul.f32 %v1187, %v1854
        %v1872 = vmul.f32 %v1188, %v1854
        %v1873 = vmul.f32 %v1189, %v1854
        %v1874 = vmul.f32 %v1190, %v1854
        %v1875 = vmul.f32 %v1191, %v1854
        %v1876 = vmul.f32 %v1192, %v1854
        %v1877 = vmul.f32 %v1193, %v1854
        %v1878 = vmul.f32 %v1194, %v1854
        %v1903 = vrot.slane %v1855, 6
        %v1904 = vrot.slane %v1856, 6
        %v1905 = vsel %vm1095, %v1903, %v1904
        %v1906 = vrot.slane %v1857, 6
        %v1907 = vsel %vm1095, %v1904, %v1906
        %v1908 = vrot.slane %v1858, 6
        %v1909 = vrot.slane %v1859, 6
        %v1910 = vsel %vm1095, %v1908, %v1909
        %v1911 = vrot.slane %v1860, 6
        %v1912 = vsel %vm1095, %v1909, %v1911
        %v1913 = vrot.slane %v1861, 6
        %v1914 = vrot.slane %v1862, 6
        %v1915 = vsel %vm1095, %v1913, %v1914
        %v1916 = vrot.slane %v1863, 6
        %v1917 = vsel %vm1095, %v1914, %v1916
        %v1918 = vrot.slane %v1864, 6
        %v1919 = vrot.slane %v1865, 6
        %v1920 = vsel %vm1095, %v1918, %v1919
        %v1921 = vrot.slane %v1866, 6
        %v1922 = vsel %vm1095, %v1919, %v1921
        %v1923 = vrot.slane %v1867, 6
        %v1924 = vrot.slane %v1868, 6
        %v1925 = vsel %vm1095, %v1923, %v1924
        %v1926 = vrot.slane %v1869, 6
        %v1927 = vsel %vm1095, %v1924, %v1926
        %v1928 = vrot.slane %v1870, 6
        %v1929 = vrot.slane %v1871, 6
        %v1930 = vsel %vm1095, %v1928, %v1929
        %v1931 = vrot.slane %v1872, 6
        %v1932 = vsel %vm1095, %v1929, %v1931
        %v1933 = vrot.slane %v1873, 6
        %v1934 = vrot.slane %v1874, 6
        %v1935 = vsel %vm1095, %v1933, %v1934
        %v1936 = vrot.slane %v1875, 6
        %v1937 = vsel %vm1095, %v1934, %v1936
        %v1938 = vrot.slane %v1876, 6
        %v1939 = vrot.slane %v1877, 6
        %v1940 = vsel %vm1095, %v1938, %v1939
        %v1941 = vrot.slane %v1878, 6
        %v1942 = vsel %vm1095, %v1939, %v1941
        %v1959 = vadd.f32 %v1835, %v1905
        %v1960 = vadd.f32 %v1836, %v1907
        %v1961 = vadd.f32 %v1837, %v1910
        %v1962 = vadd.f32 %v1838, %v1912
        %v1963 = vadd.f32 %v1839, %v1915
        %v1964 = vadd.f32 %v1840, %v1917
        %v1965 = vadd.f32 %v1841, %v1920
        %v1966 = vadd.f32 %v1842, %v1922
        %v1967 = vadd.f32 %v1843, %v1925
        %v1968 = vadd.f32 %v1844, %v1927
        %v1969 = vadd.f32 %v1845, %v1930
        %v1970 = vadd.f32 %v1846, %v1932
        %v1971 = vadd.f32 %v1847, %v1935
        %v1972 = vadd.f32 %v1848, %v1937
        %v1973 = vadd.f32 %v1849, %v1940
        %v1974 = vadd.f32 %v1850, %v1942
        %s1975 = sadd.s32 %s347, 2
        %s1976 = smul.u32 %s1975, 24
        %s1977 = scalar_lea.vmem %s344, %s1976
        %v1978 = vld [vmem:[%s1977] sm:$0xff]
        %v1979 = vld [vmem:[%s1977 + $0x8] sm:$0xff]
        %v1980 = vld [vmem:[%s1977 + $0x10] sm:$0x3f]
        %v1981 = vld [vmem:[%s1977 + $0x18] sm:$0xff]
        %v1982 = vld [vmem:[%s1977 + $0x20] sm:$0xff]
        %v1983 = vld [vmem:[%s1977 + $0x28] sm:$0x3f]
        %v1984 = vld [vmem:[%s1977 + $0x30] sm:$0xff]
        %v1985 = vld [vmem:[%s1977 + $0x38] sm:$0xff]
        %v1986 = vld [vmem:[%s1977 + $0x40] sm:$0x3f]
        %v1987 = vld [vmem:[%s1977 + $0x48] sm:$0xff]
        %v1988 = vld [vmem:[%s1977 + $0x50] sm:$0xff]
        %v1989 = vld [vmem:[%s1977 + $0x58] sm:$0x3f]
        %v1990 = vld [vmem:[%s1977 + $0x60] sm:$0xff]
        %v1991 = vld [vmem:[%s1977 + $0x68] sm:$0xff]
        %v1992 = vld [vmem:[%s1977 + $0x70] sm:$0x3f]
        %v1993 = vld [vmem:[%s1977 + $0x78] sm:$0xff]
        %v1994 = vld [vmem:[%s1977 + $0x80] sm:$0xff]
        %v1995 = vld [vmem:[%s1977 + $0x88] sm:$0x3f]
        %v1996 = vld [vmem:[%s1977 + $0x90] sm:$0xff]
        %v1997 = vld [vmem:[%s1977 + $0x98] sm:$0xff]
        %v1998 = vld [vmem:[%s1977 + $0xa0] sm:$0x3f]
        %v1999 = vld [vmem:[%s1977 + $0xa8] sm:$0xff]
        %v2000 = vld [vmem:[%s1977 + $0xb0] sm:$0xff]
        %v2001 = vld [vmem:[%s1977 + $0xb8] sm:$0x3f]
        %v2002 = vlaneseq
        %v2003 = vshrl.u32 %v2002, 7
        %v2004 = vsub.s32 6, %v2003
        %v2005 = vrot.slane %v349, %v2004
        %v2006 = vmul.f32 %v1978, %v2005
        %v2007 = vmul.f32 %v1979, %v2005
        %v2008 = vmul.f32 %v1981, %v2005
        %v2009 = vmul.f32 %v1982, %v2005
        %v2010 = vmul.f32 %v1984, %v2005
        %v2011 = vmul.f32 %v1985, %v2005
        %v2012 = vmul.f32 %v1987, %v2005
        %v2013 = vmul.f32 %v1988, %v2005
        %v2014 = vmul.f32 %v1990, %v2005
        %v2015 = vmul.f32 %v1991, %v2005
        %v2016 = vmul.f32 %v1993, %v2005
        %v2017 = vmul.f32 %v1994, %v2005
        %v2018 = vmul.f32 %v1996, %v2005
        %v2019 = vmul.f32 %v1997, %v2005
        %v2020 = vmul.f32 %v1999, %v2005
        %v2021 = vmul.f32 %v2000, %v2005
        %v2022 = vadd.f32 %v1959, %v2006
        %v2023 = vadd.f32 %v1960, %v2007
        %v2024 = vadd.f32 %v1961, %v2008
        %v2025 = vadd.f32 %v1962, %v2009
        %v2026 = vadd.f32 %v1963, %v2010
        %v2027 = vadd.f32 %v1964, %v2011
        %v2028 = vadd.f32 %v1965, %v2012
        %v2029 = vadd.f32 %v1966, %v2013
        %v2030 = vadd.f32 %v1967, %v2014
        %v2031 = vadd.f32 %v1968, %v2015
        %v2032 = vadd.f32 %v1969, %v2016
        %v2033 = vadd.f32 %v1970, %v2017
        %v2034 = vadd.f32 %v1971, %v2018
        %v2035 = vadd.f32 %v1972, %v2019
        %v2036 = vadd.f32 %v1973, %v2020
        %v2037 = vadd.f32 %v1974, %v2021
        %v2038 = vlaneseq
        %v2039 = vshrl.u32 %v2038, 7
        %v2040 = vsub.s32 7, %v2039
        %v2041 = vrot.slane %v349, %v2040
        %v2042 = vmul.f32 %v1978, %v2041
        %v2043 = vmul.f32 %v1979, %v2041
        %v2044 = vmul.f32 %v1980, %v2041
        %v2045 = vmul.f32 %v1981, %v2041
        %v2046 = vmul.f32 %v1982, %v2041
        %v2047 = vmul.f32 %v1983, %v2041
        %v2048 = vmul.f32 %v1984, %v2041
        %v2049 = vmul.f32 %v1985, %v2041
        %v2050 = vmul.f32 %v1986, %v2041
        %v2051 = vmul.f32 %v1987, %v2041
        %v2052 = vmul.f32 %v1988, %v2041
        %v2053 = vmul.f32 %v1989, %v2041
        %v2054 = vmul.f32 %v1990, %v2041
        %v2055 = vmul.f32 %v1991, %v2041
        %v2056 = vmul.f32 %v1992, %v2041
        %v2057 = vmul.f32 %v1993, %v2041
        %v2058 = vmul.f32 %v1994, %v2041
        %v2059 = vmul.f32 %v1995, %v2041
        %v2060 = vmul.f32 %v1996, %v2041
        %v2061 = vmul.f32 %v1997, %v2041
        %v2062 = vmul.f32 %v1998, %v2041
        %v2063 = vmul.f32 %v1999, %v2041
        %v2064 = vmul.f32 %v2000, %v2041
        %v2065 = vmul.f32 %v2001, %v2041
        %v2090 = vrot.slane %v2042, 1
        %v2091 = vrot.slane %v2043, 1
        %v2092 = vsel %vm470, %v2090, %v2091
        %v2093 = vrot.slane %v2044, 1
        %v2094 = vsel %vm470, %v2091, %v2093
        %v2095 = vrot.slane %v2045, 1
        %v2096 = vrot.slane %v2046, 1
        %v2097 = vsel %vm470, %v2095, %v2096
        %v2098 = vrot.slane %v2047, 1
        %v2099 = vsel %vm470, %v2096, %v2098
        %v2100 = vrot.slane %v2048, 1
        %v2101 = vrot.slane %v2049, 1
        %v2102 = vsel %vm470, %v2100, %v2101
        %v2103 = vrot.slane %v2050, 1
        %v2104 = vsel %vm470, %v2101, %v2103
        %v2105 = vrot.slane %v2051, 1
        %v2106 = vrot.slane %v2052, 1
        %v2107 = vsel %vm470, %v2105, %v2106
        %v2108 = vrot.slane %v2053, 1
        %v2109 = vsel %vm470, %v2106, %v2108
        %v2110 = vrot.slane %v2054, 1
        %v2111 = vrot.slane %v2055, 1
        %v2112 = vsel %vm470, %v2110, %v2111
        %v2113 = vrot.slane %v2056, 1
        %v2114 = vsel %vm470, %v2111, %v2113
        %v2115 = vrot.slane %v2057, 1
        %v2116 = vrot.slane %v2058, 1
        %v2117 = vsel %vm470, %v2115, %v2116
        %v2118 = vrot.slane %v2059, 1
        %v2119 = vsel %vm470, %v2116, %v2118
        %v2120 = vrot.slane %v2060, 1
        %v2121 = vrot.slane %v2061, 1
        %v2122 = vsel %vm470, %v2120, %v2121
        %v2123 = vrot.slane %v2062, 1
        %v2124 = vsel %vm470, %v2121, %v2123
        %v2125 = vrot.slane %v2063, 1
        %v2126 = vrot.slane %v2064, 1
        %v2127 = vsel %vm470, %v2125, %v2126
        %v2128 = vrot.slane %v2065, 1
        %v2129 = vsel %vm470, %v2126, %v2128
        %v2146 = vadd.f32 %v2022, %v2092
        %v2147 = vadd.f32 %v2023, %v2094
        %v2148 = vadd.f32 %v2024, %v2097
        %v2149 = vadd.f32 %v2025, %v2099
        %v2150 = vadd.f32 %v2026, %v2102
        %v2151 = vadd.f32 %v2027, %v2104
        %v2152 = vadd.f32 %v2028, %v2107
        %v2153 = vadd.f32 %v2029, %v2109
        %v2154 = vadd.f32 %v2030, %v2112
        %v2155 = vadd.f32 %v2031, %v2114
        %v2156 = vadd.f32 %v2032, %v2117
        %v2157 = vadd.f32 %v2033, %v2119
        %v2158 = vadd.f32 %v2034, %v2122
        %v2159 = vadd.f32 %v2035, %v2124
        %v2160 = vadd.f32 %v2036, %v2127
        %v2161 = vadd.f32 %v2037, %v2129
        %v2162 = vlaneseq
        %v2163 = vshrl.u32 %v2162, 7
        %v2164 = vsub.s32 0, %v2163
        %v2165 = vrot.slane %v350, %v2164
        %v2166 = vmul.f32 %v1978, %v2165
        %v2167 = vmul.f32 %v1979, %v2165
        %v2168 = vmul.f32 %v1980, %v2165
        %v2169 = vmul.f32 %v1981, %v2165
        %v2170 = vmul.f32 %v1982, %v2165
        %v2171 = vmul.f32 %v1983, %v2165
        %v2172 = vmul.f32 %v1984, %v2165
        %v2173 = vmul.f32 %v1985, %v2165
        %v2174 = vmul.f32 %v1986, %v2165
        %v2175 = vmul.f32 %v1987, %v2165
        %v2176 = vmul.f32 %v1988, %v2165
        %v2177 = vmul.f32 %v1989, %v2165
        %v2178 = vmul.f32 %v1990, %v2165
        %v2179 = vmul.f32 %v1991, %v2165
        %v2180 = vmul.f32 %v1992, %v2165
        %v2181 = vmul.f32 %v1993, %v2165
        %v2182 = vmul.f32 %v1994, %v2165
        %v2183 = vmul.f32 %v1995, %v2165
        %v2184 = vmul.f32 %v1996, %v2165
        %v2185 = vmul.f32 %v1997, %v2165
        %v2186 = vmul.f32 %v1998, %v2165
        %v2187 = vmul.f32 %v1999, %v2165
        %v2188 = vmul.f32 %v2000, %v2165
        %v2189 = vmul.f32 %v2001, %v2165
        %v2214 = vrot.slane %v2166, 2
        %v2215 = vrot.slane %v2167, 2
        %v2216 = vsel %vm595, %v2214, %v2215
        %v2217 = vrot.slane %v2168, 2
        %v2218 = vsel %vm595, %v2215, %v2217
        %v2219 = vrot.slane %v2169, 2
        %v2220 = vrot.slane %v2170, 2
        %v2221 = vsel %vm595, %v2219, %v2220
        %v2222 = vrot.slane %v2171, 2
        %v2223 = vsel %vm595, %v2220, %v2222
        %v2224 = vrot.slane %v2172, 2
        %v2225 = vrot.slane %v2173, 2
        %v2226 = vsel %vm595, %v2224, %v2225
        %v2227 = vrot.slane %v2174, 2
        %v2228 = vsel %vm595, %v2225, %v2227
        %v2229 = vrot.slane %v2175, 2
        %v2230 = vrot.slane %v2176, 2
        %v2231 = vsel %vm595, %v2229, %v2230
        %v2232 = vrot.slane %v2177, 2
        %v2233 = vsel %vm595, %v2230, %v2232
        %v2234 = vrot.slane %v2178, 2
        %v2235 = vrot.slane %v2179, 2
        %v2236 = vsel %vm595, %v2234, %v2235
        %v2237 = vrot.slane %v2180, 2
        %v2238 = vsel %vm595, %v2235, %v2237
        %v2239 = vrot.slane %v2181, 2
        %v2240 = vrot.slane %v2182, 2
        %v2241 = vsel %vm595, %v2239, %v2240
        %v2242 = vrot.slane %v2183, 2
        %v2243 = vsel %vm595, %v2240, %v2242
        %v2244 = vrot.slane %v2184, 2
        %v2245 = vrot.slane %v2185, 2
        %v2246 = vsel %vm595, %v2244, %v2245
        %v2247 = vrot.slane %v2186, 2
        %v2248 = vsel %vm595, %v2245, %v2247
        %v2249 = vrot.slane %v2187, 2
        %v2250 = vrot.slane %v2188, 2
        %v2251 = vsel %vm595, %v2249, %v2250
        %v2252 = vrot.slane %v2189, 2
        %v2253 = vsel %vm595, %v2250, %v2252
        %v2270 = vadd.f32 %v2146, %v2216
        %v2271 = vadd.f32 %v2147, %v2218
        %v2272 = vadd.f32 %v2148, %v2221
        %v2273 = vadd.f32 %v2149, %v2223
        %v2274 = vadd.f32 %v2150, %v2226
        %v2275 = vadd.f32 %v2151, %v2228
        %v2276 = vadd.f32 %v2152, %v2231
        %v2277 = vadd.f32 %v2153, %v2233
        %v2278 = vadd.f32 %v2154, %v2236
        %v2279 = vadd.f32 %v2155, %v2238
        %v2280 = vadd.f32 %v2156, %v2241
        %v2281 = vadd.f32 %v2157, %v2243
        %v2282 = vadd.f32 %v2158, %v2246
        %v2283 = vadd.f32 %v2159, %v2248
        %v2284 = vadd.f32 %v2160, %v2251
        %v2285 = vadd.f32 %v2161, %v2253
        %v2286 = vlaneseq
        %v2287 = vshrl.u32 %v2286, 7
        %v2288 = vsub.s32 1, %v2287
        %v2289 = vrot.slane %v350, %v2288
        %v2290 = vmul.f32 %v1978, %v2289
        %v2291 = vmul.f32 %v1979, %v2289
        %v2292 = vmul.f32 %v1980, %v2289
        %v2293 = vmul.f32 %v1981, %v2289
        %v2294 = vmul.f32 %v1982, %v2289
        %v2295 = vmul.f32 %v1983, %v2289
        %v2296 = vmul.f32 %v1984, %v2289
        %v2297 = vmul.f32 %v1985, %v2289
        %v2298 = vmul.f32 %v1986, %v2289
        %v2299 = vmul.f32 %v1987, %v2289
        %v2300 = vmul.f32 %v1988, %v2289
        %v2301 = vmul.f32 %v1989, %v2289
        %v2302 = vmul.f32 %v1990, %v2289
        %v2303 = vmul.f32 %v1991, %v2289
        %v2304 = vmul.f32 %v1992, %v2289
        %v2305 = vmul.f32 %v1993, %v2289
        %v2306 = vmul.f32 %v1994, %v2289
        %v2307 = vmul.f32 %v1995, %v2289
        %v2308 = vmul.f32 %v1996, %v2289
        %v2309 = vmul.f32 %v1997, %v2289
        %v2310 = vmul.f32 %v1998, %v2289
        %v2311 = vmul.f32 %v1999, %v2289
        %v2312 = vmul.f32 %v2000, %v2289
        %v2313 = vmul.f32 %v2001, %v2289
        %v2338 = vrot.slane %v2290, 3
        %v2339 = vrot.slane %v2291, 3
        %v2340 = vsel %vm720, %v2338, %v2339
        %v2341 = vrot.slane %v2292, 3
        %v2342 = vsel %vm720, %v2339, %v2341
        %v2343 = vrot.slane %v2293, 3
        %v2344 = vrot.slane %v2294, 3
        %v2345 = vsel %vm720, %v2343, %v2344
        %v2346 = vrot.slane %v2295, 3
        %v2347 = vsel %vm720, %v2344, %v2346
        %v2348 = vrot.slane %v2296, 3
        %v2349 = vrot.slane %v2297, 3
        %v2350 = vsel %vm720, %v2348, %v2349
        %v2351 = vrot.slane %v2298, 3
        %v2352 = vsel %vm720, %v2349, %v2351
        %v2353 = vrot.slane %v2299, 3
        %v2354 = vrot.slane %v2300, 3
        %v2355 = vsel %vm720, %v2353, %v2354
        %v2356 = vrot.slane %v2301, 3
        %v2357 = vsel %vm720, %v2354, %v2356
        %v2358 = vrot.slane %v2302, 3
        %v2359 = vrot.slane %v2303, 3
        %v2360 = vsel %vm720, %v2358, %v2359
        %v2361 = vrot.slane %v2304, 3
        %v2362 = vsel %vm720, %v2359, %v2361
        %v2363 = vrot.slane %v2305, 3
        %v2364 = vrot.slane %v2306, 3
        %v2365 = vsel %vm720, %v2363, %v2364
        %v2366 = vrot.slane %v2307, 3
        %v2367 = vsel %vm720, %v2364, %v2366
        %v2368 = vrot.slane %v2308, 3
        %v2369 = vrot.slane %v2309, 3
        %v2370 = vsel %vm720, %v2368, %v2369
        %v2371 = vrot.slane %v2310, 3
        %v2372 = vsel %vm720, %v2369, %v2371
        %v2373 = vrot.slane %v2311, 3
        %v2374 = vrot.slane %v2312, 3
        %v2375 = vsel %vm720, %v2373, %v2374
        %v2376 = vrot.slane %v2313, 3
        %v2377 = vsel %vm720, %v2374, %v2376
        %v2394 = vadd.f32 %v2270, %v2340
        %v2395 = vadd.f32 %v2271, %v2342
        %v2396 = vadd.f32 %v2272, %v2345
        %v2397 = vadd.f32 %v2273, %v2347
        %v2398 = vadd.f32 %v2274, %v2350
        %v2399 = vadd.f32 %v2275, %v2352
        %v2400 = vadd.f32 %v2276, %v2355
        %v2401 = vadd.f32 %v2277, %v2357
        %v2402 = vadd.f32 %v2278, %v2360
        %v2403 = vadd.f32 %v2279, %v2362
        %v2404 = vadd.f32 %v2280, %v2365
        %v2405 = vadd.f32 %v2281, %v2367
        %v2406 = vadd.f32 %v2282, %v2370
        %v2407 = vadd.f32 %v2283, %v2372
        %v2408 = vadd.f32 %v2284, %v2375
        %v2409 = vadd.f32 %v2285, %v2377
        %v2410 = vlaneseq
        %v2411 = vshrl.u32 %v2410, 7
        %v2412 = vsub.s32 2, %v2411
        %v2413 = vrot.slane %v350, %v2412
        %v2414 = vmul.f32 %v1978, %v2413
        %v2415 = vmul.f32 %v1979, %v2413
        %v2416 = vmul.f32 %v1980, %v2413
        %v2417 = vmul.f32 %v1981, %v2413
        %v2418 = vmul.f32 %v1982, %v2413
        %v2419 = vmul.f32 %v1983, %v2413
        %v2420 = vmul.f32 %v1984, %v2413
        %v2421 = vmul.f32 %v1985, %v2413
        %v2422 = vmul.f32 %v1986, %v2413
        %v2423 = vmul.f32 %v1987, %v2413
        %v2424 = vmul.f32 %v1988, %v2413
        %v2425 = vmul.f32 %v1989, %v2413
        %v2426 = vmul.f32 %v1990, %v2413
        %v2427 = vmul.f32 %v1991, %v2413
        %v2428 = vmul.f32 %v1992, %v2413
        %v2429 = vmul.f32 %v1993, %v2413
        %v2430 = vmul.f32 %v1994, %v2413
        %v2431 = vmul.f32 %v1995, %v2413
        %v2432 = vmul.f32 %v1996, %v2413
        %v2433 = vmul.f32 %v1997, %v2413
        %v2434 = vmul.f32 %v1998, %v2413
        %v2435 = vmul.f32 %v1999, %v2413
        %v2436 = vmul.f32 %v2000, %v2413
        %v2437 = vmul.f32 %v2001, %v2413
        %v2462 = vrot.slane %v2414, 4
        %v2463 = vrot.slane %v2415, 4
        %v2464 = vsel %vm845, %v2462, %v2463
        %v2465 = vrot.slane %v2416, 4
        %v2466 = vsel %vm845, %v2463, %v2465
        %v2467 = vrot.slane %v2417, 4
        %v2468 = vrot.slane %v2418, 4
        %v2469 = vsel %vm845, %v2467, %v2468
        %v2470 = vrot.slane %v2419, 4
        %v2471 = vsel %vm845, %v2468, %v2470
        %v2472 = vrot.slane %v2420, 4
        %v2473 = vrot.slane %v2421, 4
        %v2474 = vsel %vm845, %v2472, %v2473
        %v2475 = vrot.slane %v2422, 4
        %v2476 = vsel %vm845, %v2473, %v2475
        %v2477 = vrot.slane %v2423, 4
        %v2478 = vrot.slane %v2424, 4
        %v2479 = vsel %vm845, %v2477, %v2478
        %v2480 = vrot.slane %v2425, 4
        %v2481 = vsel %vm845, %v2478, %v2480
        %v2482 = vrot.slane %v2426, 4
        %v2483 = vrot.slane %v2427, 4
        %v2484 = vsel %vm845, %v2482, %v2483
        %v2485 = vrot.slane %v2428, 4
        %v2486 = vsel %vm845, %v2483, %v2485
        %v2487 = vrot.slane %v2429, 4
        %v2488 = vrot.slane %v2430, 4
        %v2489 = vsel %vm845, %v2487, %v2488
        %v2490 = vrot.slane %v2431, 4
        %v2491 = vsel %vm845, %v2488, %v2490
        %v2492 = vrot.slane %v2432, 4
        %v2493 = vrot.slane %v2433, 4
        %v2494 = vsel %vm845, %v2492, %v2493
        %v2495 = vrot.slane %v2434, 4
        %v2496 = vsel %vm845, %v2493, %v2495
        %v2497 = vrot.slane %v2435, 4
        %v2498 = vrot.slane %v2436, 4
        %v2499 = vsel %vm845, %v2497, %v2498
        %v2500 = vrot.slane %v2437, 4
        %v2501 = vsel %vm845, %v2498, %v2500
        %v2518 = vadd.f32 %v2394, %v2464
        %v2519 = vadd.f32 %v2395, %v2466
        %v2520 = vadd.f32 %v2396, %v2469
        %v2521 = vadd.f32 %v2397, %v2471
        %v2522 = vadd.f32 %v2398, %v2474
        %v2523 = vadd.f32 %v2399, %v2476
        %v2524 = vadd.f32 %v2400, %v2479
        %v2525 = vadd.f32 %v2401, %v2481
        %v2526 = vadd.f32 %v2402, %v2484
        %v2527 = vadd.f32 %v2403, %v2486
        %v2528 = vadd.f32 %v2404, %v2489
        %v2529 = vadd.f32 %v2405, %v2491
        %v2530 = vadd.f32 %v2406, %v2494
        %v2531 = vadd.f32 %v2407, %v2496
        %v2532 = vadd.f32 %v2408, %v2499
        %v2533 = vadd.f32 %v2409, %v2501
        %v2534 = vlaneseq
        %v2535 = vshrl.u32 %v2534, 7
        %v2536 = vsub.s32 3, %v2535
        %v2537 = vrot.slane %v350, %v2536
        %v2538 = vmul.f32 %v1978, %v2537
        %v2539 = vmul.f32 %v1979, %v2537
        %v2540 = vmul.f32 %v1980, %v2537
        %v2541 = vmul.f32 %v1981, %v2537
        %v2542 = vmul.f32 %v1982, %v2537
        %v2543 = vmul.f32 %v1983, %v2537
        %v2544 = vmul.f32 %v1984, %v2537
        %v2545 = vmul.f32 %v1985, %v2537
        %v2546 = vmul.f32 %v1986, %v2537
        %v2547 = vmul.f32 %v1987, %v2537
        %v2548 = vmul.f32 %v1988, %v2537
        %v2549 = vmul.f32 %v1989, %v2537
        %v2550 = vmul.f32 %v1990, %v2537
        %v2551 = vmul.f32 %v1991, %v2537
        %v2552 = vmul.f32 %v1992, %v2537
        %v2553 = vmul.f32 %v1993, %v2537
        %v2554 = vmul.f32 %v1994, %v2537
        %v2555 = vmul.f32 %v1995, %v2537
        %v2556 = vmul.f32 %v1996, %v2537
        %v2557 = vmul.f32 %v1997, %v2537
        %v2558 = vmul.f32 %v1998, %v2537
        %v2559 = vmul.f32 %v1999, %v2537
        %v2560 = vmul.f32 %v2000, %v2537
        %v2561 = vmul.f32 %v2001, %v2537
        %v2586 = vrot.slane %v2538, 5
        %v2587 = vrot.slane %v2539, 5
        %v2588 = vsel %vm970, %v2586, %v2587
        %v2589 = vrot.slane %v2540, 5
        %v2590 = vsel %vm970, %v2587, %v2589
        %v2591 = vrot.slane %v2541, 5
        %v2592 = vrot.slane %v2542, 5
        %v2593 = vsel %vm970, %v2591, %v2592
        %v2594 = vrot.slane %v2543, 5
        %v2595 = vsel %vm970, %v2592, %v2594
        %v2596 = vrot.slane %v2544, 5
        %v2597 = vrot.slane %v2545, 5
        %v2598 = vsel %vm970, %v2596, %v2597
        %v2599 = vrot.slane %v2546, 5
        %v2600 = vsel %vm970, %v2597, %v2599
        %v2601 = vrot.slane %v2547, 5
        %v2602 = vrot.slane %v2548, 5
        %v2603 = vsel %vm970, %v2601, %v2602
        %v2604 = vrot.slane %v2549, 5
        %v2605 = vsel %vm970, %v2602, %v2604
        %v2606 = vrot.slane %v2550, 5
        %v2607 = vrot.slane %v2551, 5
        %v2608 = vsel %vm970, %v2606, %v2607
        %v2609 = vrot.slane %v2552, 5
        %v2610 = vsel %vm970, %v2607, %v2609
        %v2611 = vrot.slane %v2553, 5
        %v2612 = vrot.slane %v2554, 5
        %v2613 = vsel %vm970, %v2611, %v2612
        %v2614 = vrot.slane %v2555, 5
        %v2615 = vsel %vm970, %v2612, %v2614
        %v2616 = vrot.slane %v2556, 5
        %v2617 = vrot.slane %v2557, 5
        %v2618 = vsel %vm970, %v2616, %v2617
        %v2619 = vrot.slane %v2558, 5
        %v2620 = vsel %vm970, %v2617, %v2619
        %v2621 = vrot.slane %v2559, 5
        %v2622 = vrot.slane %v2560, 5
        %v2623 = vsel %vm970, %v2621, %v2622
        %v2624 = vrot.slane %v2561, 5
        %v2625 = vsel %vm970, %v2622, %v2624
        %v2642 = vadd.f32 %v2518, %v2588
        %v2643 = vadd.f32 %v2519, %v2590
        %v2644 = vadd.f32 %v2520, %v2593
        %v2645 = vadd.f32 %v2521, %v2595
        %v2646 = vadd.f32 %v2522, %v2598
        %v2647 = vadd.f32 %v2523, %v2600
        %v2648 = vadd.f32 %v2524, %v2603
        %v2649 = vadd.f32 %v2525, %v2605
        %v2650 = vadd.f32 %v2526, %v2608
        %v2651 = vadd.f32 %v2527, %v2610
        %v2652 = vadd.f32 %v2528, %v2613
        %v2653 = vadd.f32 %v2529, %v2615
        %v2654 = vadd.f32 %v2530, %v2618
        %v2655 = vadd.f32 %v2531, %v2620
        %v2656 = vadd.f32 %v2532, %v2623
        %v2657 = vadd.f32 %v2533, %v2625
        %v2658 = vlaneseq
        %v2659 = vshrl.u32 %v2658, 7
        %v2660 = vsub.s32 4, %v2659
        %v2661 = vrot.slane %v350, %v2660
        %v2662 = vmul.f32 %v1978, %v2661
        %v2663 = vmul.f32 %v1979, %v2661
        %v2664 = vmul.f32 %v1980, %v2661
        %v2665 = vmul.f32 %v1981, %v2661
        %v2666 = vmul.f32 %v1982, %v2661
        %v2667 = vmul.f32 %v1983, %v2661
        %v2668 = vmul.f32 %v1984, %v2661
        %v2669 = vmul.f32 %v1985, %v2661
        %v2670 = vmul.f32 %v1986, %v2661
        %v2671 = vmul.f32 %v1987, %v2661
        %v2672 = vmul.f32 %v1988, %v2661
        %v2673 = vmul.f32 %v1989, %v2661
        %v2674 = vmul.f32 %v1990, %v2661
        %v2675 = vmul.f32 %v1991, %v2661
        %v2676 = vmul.f32 %v1992, %v2661
        %v2677 = vmul.f32 %v1993, %v2661
        %v2678 = vmul.f32 %v1994, %v2661
        %v2679 = vmul.f32 %v1995, %v2661
        %v2680 = vmul.f32 %v1996, %v2661
        %v2681 = vmul.f32 %v1997, %v2661
        %v2682 = vmul.f32 %v1998, %v2661
        %v2683 = vmul.f32 %v1999, %v2661
        %v2684 = vmul.f32 %v2000, %v2661
        %v2685 = vmul.f32 %v2001, %v2661
        %v2710 = vrot.slane %v2662, 6
        %v2711 = vrot.slane %v2663, 6
        %v2712 = vsel %vm1095, %v2710, %v2711
        %v2713 = vrot.slane %v2664, 6
        %v2714 = vsel %vm1095, %v2711, %v2713
        %v2715 = vrot.slane %v2665, 6
        %v2716 = vrot.slane %v2666, 6
        %v2717 = vsel %vm1095, %v2715, %v2716
        %v2718 = vrot.slane %v2667, 6
        %v2719 = vsel %vm1095, %v2716, %v2718
        %v2720 = vrot.slane %v2668, 6
        %v2721 = vrot.slane %v2669, 6
        %v2722 = vsel %vm1095, %v2720, %v2721
        %v2723 = vrot.slane %v2670, 6
        %v2724 = vsel %vm1095, %v2721, %v2723
        %v2725 = vrot.slane %v2671, 6
        %v2726 = vrot.slane %v2672, 6
        %v2727 = vsel %vm1095, %v2725, %v2726
        %v2728 = vrot.slane %v2673, 6
        %v2729 = vsel %vm1095, %v2726, %v2728
        %v2730 = vrot.slane %v2674, 6
        %v2731 = vrot.slane %v2675, 6
        %v2732 = vsel %vm1095, %v2730, %v2731
        %v2733 = vrot.slane %v2676, 6
        %v2734 = vsel %vm1095, %v2731, %v2733
        %v2735 = vrot.slane %v2677, 6
        %v2736 = vrot.slane %v2678, 6
        %v2737 = vsel %vm1095, %v2735, %v2736
        %v2738 = vrot.slane %v2679, 6
        %v2739 = vsel %vm1095, %v2736, %v2738
        %v2740 = vrot.slane %v2680, 6
        %v2741 = vrot.slane %v2681, 6
        %v2742 = vsel %vm1095, %v2740, %v2741
        %v2743 = vrot.slane %v2682, 6
        %v2744 = vsel %vm1095, %v2741, %v2743
        %v2745 = vrot.slane %v2683, 6
        %v2746 = vrot.slane %v2684, 6
        %v2747 = vsel %vm1095, %v2745, %v2746
        %v2748 = vrot.slane %v2685, 6
        %v2749 = vsel %vm1095, %v2746, %v2748
        %v2766 = vadd.f32 %v2642, %v2712
        %v2767 = vadd.f32 %v2643, %v2714
        %v2768 = vadd.f32 %v2644, %v2717
        %v2769 = vadd.f32 %v2645, %v2719
        %v2770 = vadd.f32 %v2646, %v2722
        %v2771 = vadd.f32 %v2647, %v2724
        %v2772 = vadd.f32 %v2648, %v2727
        %v2773 = vadd.f32 %v2649, %v2729
        %v2774 = vadd.f32 %v2650, %v2732
        %v2775 = vadd.f32 %v2651, %v2734
        %v2776 = vadd.f32 %v2652, %v2737
        %v2777 = vadd.f32 %v2653, %v2739
        %v2778 = vadd.f32 %v2654, %v2742
        %v2779 = vadd.f32 %v2655, %v2744
        %v2780 = vadd.f32 %v2656, %v2747
        %v2781 = vadd.f32 %v2657, %v2749
        %s2782 = sadd.s32 %s347, 3
        %s2783 = smul.u32 %s2782, 24
        %s2784 = scalar_lea.vmem %s344, %s2783
        %v2785 = vld [vmem:[%s2784] sm:$0xff]
        %v2786 = vld [vmem:[%s2784 + $0x8] sm:$0xff]
        %v2787 = vld [vmem:[%s2784 + $0x10] sm:$0x3f]
        %v2788 = vld [vmem:[%s2784 + $0x18] sm:$0xff]
        %v2789 = vld [vmem:[%s2784 + $0x20] sm:$0xff]
        %v2790 = vld [vmem:[%s2784 + $0x28] sm:$0x3f]
        %v2791 = vld [vmem:[%s2784 + $0x30] sm:$0xff]
        %v2792 = vld [vmem:[%s2784 + $0x38] sm:$0xff]
        %v2793 = vld [vmem:[%s2784 + $0x40] sm:$0x3f]
        %v2794 = vld [vmem:[%s2784 + $0x48] sm:$0xff]
        %v2795 = vld [vmem:[%s2784 + $0x50] sm:$0xff]
        %v2796 = vld [vmem:[%s2784 + $0x58] sm:$0x3f]
        %v2797 = vld [vmem:[%s2784 + $0x60] sm:$0xff]
        %v2798 = vld [vmem:[%s2784 + $0x68] sm:$0xff]
        %v2799 = vld [vmem:[%s2784 + $0x70] sm:$0x3f]
        %v2800 = vld [vmem:[%s2784 + $0x78] sm:$0xff]
        %v2801 = vld [vmem:[%s2784 + $0x80] sm:$0xff]
        %v2802 = vld [vmem:[%s2784 + $0x88] sm:$0x3f]
        %v2803 = vld [vmem:[%s2784 + $0x90] sm:$0xff]
        %v2804 = vld [vmem:[%s2784 + $0x98] sm:$0xff]
        %v2805 = vld [vmem:[%s2784 + $0xa0] sm:$0x3f]
        %v2806 = vld [vmem:[%s2784 + $0xa8] sm:$0xff]
        %v2807 = vld [vmem:[%s2784 + $0xb0] sm:$0xff]
        %v2808 = vld [vmem:[%s2784 + $0xb8] sm:$0x3f]
        %v2809 = vlaneseq
        %v2810 = vshrl.u32 %v2809, 7
        %v2811 = vsub.s32 5, %v2810
        %v2812 = vrot.slane %v350, %v2811
        %v2813 = vmul.f32 %v2785, %v2812
        %v2814 = vmul.f32 %v2786, %v2812
        %v2815 = vmul.f32 %v2788, %v2812
        %v2816 = vmul.f32 %v2789, %v2812
        %v2817 = vmul.f32 %v2791, %v2812
        %v2818 = vmul.f32 %v2792, %v2812
        %v2819 = vmul.f32 %v2794, %v2812
        %v2820 = vmul.f32 %v2795, %v2812
        %v2821 = vmul.f32 %v2797, %v2812
        %v2822 = vmul.f32 %v2798, %v2812
        %v2823 = vmul.f32 %v2800, %v2812
        %v2824 = vmul.f32 %v2801, %v2812
        %v2825 = vmul.f32 %v2803, %v2812
        %v2826 = vmul.f32 %v2804, %v2812
        %v2827 = vmul.f32 %v2806, %v2812
        %v2828 = vmul.f32 %v2807, %v2812
        %v2829 = vadd.f32 %v2766, %v2813
        %v2830 = vadd.f32 %v2767, %v2814
        %v2831 = vadd.f32 %v2768, %v2815
        %v2832 = vadd.f32 %v2769, %v2816
        %v2833 = vadd.f32 %v2770, %v2817
        %v2834 = vadd.f32 %v2771, %v2818
        %v2835 = vadd.f32 %v2772, %v2819
        %v2836 = vadd.f32 %v2773, %v2820
        %v2837 = vadd.f32 %v2774, %v2821
        %v2838 = vadd.f32 %v2775, %v2822
        %v2839 = vadd.f32 %v2776, %v2823
        %v2840 = vadd.f32 %v2777, %v2824
        %v2841 = vadd.f32 %v2778, %v2825
        %v2842 = vadd.f32 %v2779, %v2826
        %v2843 = vadd.f32 %v2780, %v2827
        %v2844 = vadd.f32 %v2781, %v2828
        %v2845 = vlaneseq
        %v2846 = vshrl.u32 %v2845, 7
        %v2847 = vsub.s32 6, %v2846
        %v2848 = vrot.slane %v350, %v2847
        %v2849 = vmul.f32 %v2785, %v2848
        %v2850 = vmul.f32 %v2786, %v2848
        %v2851 = vmul.f32 %v2787, %v2848
        %v2852 = vmul.f32 %v2788, %v2848
        %v2853 = vmul.f32 %v2789, %v2848
        %v2854 = vmul.f32 %v2790, %v2848
        %v2855 = vmul.f32 %v2791, %v2848
        %v2856 = vmul.f32 %v2792, %v2848
        %v2857 = vmul.f32 %v2793, %v2848
        %v2858 = vmul.f32 %v2794, %v2848
        %v2859 = vmul.f32 %v2795, %v2848
        %v2860 = vmul.f32 %v2796, %v2848
        %v2861 = vmul.f32 %v2797, %v2848
        %v2862 = vmul.f32 %v2798, %v2848
        %v2863 = vmul.f32 %v2799, %v2848
        %v2864 = vmul.f32 %v2800, %v2848
        %v2865 = vmul.f32 %v2801, %v2848
        %v2866 = vmul.f32 %v2802, %v2848
        %v2867 = vmul.f32 %v2803, %v2848
        %v2868 = vmul.f32 %v2804, %v2848
        %v2869 = vmul.f32 %v2805, %v2848
        %v2870 = vmul.f32 %v2806, %v2848
        %v2871 = vmul.f32 %v2807, %v2848
        %v2872 = vmul.f32 %v2808, %v2848
        %v2897 = vrot.slane %v2849, 1
        %v2898 = vrot.slane %v2850, 1
        %v2899 = vsel %vm470, %v2897, %v2898
        %v2900 = vrot.slane %v2851, 1
        %v2901 = vsel %vm470, %v2898, %v2900
        %v2902 = vrot.slane %v2852, 1
        %v2903 = vrot.slane %v2853, 1
        %v2904 = vsel %vm470, %v2902, %v2903
        %v2905 = vrot.slane %v2854, 1
        %v2906 = vsel %vm470, %v2903, %v2905
        %v2907 = vrot.slane %v2855, 1
        %v2908 = vrot.slane %v2856, 1
        %v2909 = vsel %vm470, %v2907, %v2908
        %v2910 = vrot.slane %v2857, 1
        %v2911 = vsel %vm470, %v2908, %v2910
        %v2912 = vrot.slane %v2858, 1
        %v2913 = vrot.slane %v2859, 1
        %v2914 = vsel %vm470, %v2912, %v2913
        %v2915 = vrot.slane %v2860, 1
        %v2916 = vsel %vm470, %v2913, %v2915
        %v2917 = vrot.slane %v2861, 1
        %v2918 = vrot.slane %v2862, 1
        %v2919 = vsel %vm470, %v2917, %v2918
        %v2920 = vrot.slane %v2863, 1
        %v2921 = vsel %vm470, %v2918, %v2920
        %v2922 = vrot.slane %v2864, 1
        %v2923 = vrot.slane %v2865, 1
        %v2924 = vsel %vm470, %v2922, %v2923
        %v2925 = vrot.slane %v2866, 1
        %v2926 = vsel %vm470, %v2923, %v2925
        %v2927 = vrot.slane %v2867, 1
        %v2928 = vrot.slane %v2868, 1
        %v2929 = vsel %vm470, %v2927, %v2928
        %v2930 = vrot.slane %v2869, 1
        %v2931 = vsel %vm470, %v2928, %v2930
        %v2932 = vrot.slane %v2870, 1
        %v2933 = vrot.slane %v2871, 1
        %v2934 = vsel %vm470, %v2932, %v2933
        %v2935 = vrot.slane %v2872, 1
        %v2936 = vsel %vm470, %v2933, %v2935
        %v2953 = vadd.f32 %v2829, %v2899
        %v2954 = vadd.f32 %v2830, %v2901
        %v2955 = vadd.f32 %v2831, %v2904
        %v2956 = vadd.f32 %v2832, %v2906
        %v2957 = vadd.f32 %v2833, %v2909
        %v2958 = vadd.f32 %v2834, %v2911
        %v2959 = vadd.f32 %v2835, %v2914
        %v2960 = vadd.f32 %v2836, %v2916
        %v2961 = vadd.f32 %v2837, %v2919
        %v2962 = vadd.f32 %v2838, %v2921
        %v2963 = vadd.f32 %v2839, %v2924
        %v2964 = vadd.f32 %v2840, %v2926
        %v2965 = vadd.f32 %v2841, %v2929
        %v2966 = vadd.f32 %v2842, %v2931
        %v2967 = vadd.f32 %v2843, %v2934
        %v2968 = vadd.f32 %v2844, %v2936
        %v2969 = vlaneseq
        %v2970 = vshrl.u32 %v2969, 7
        %v2971 = vsub.s32 7, %v2970
        %v2972 = vrot.slane %v350, %v2971
        %v2973 = vmul.f32 %v2785, %v2972
        %v2974 = vmul.f32 %v2786, %v2972
        %v2975 = vmul.f32 %v2787, %v2972
        %v2976 = vmul.f32 %v2788, %v2972
        %v2977 = vmul.f32 %v2789, %v2972
        %v2978 = vmul.f32 %v2790, %v2972
        %v2979 = vmul.f32 %v2791, %v2972
        %v2980 = vmul.f32 %v2792, %v2972
        %v2981 = vmul.f32 %v2793, %v2972
        %v2982 = vmul.f32 %v2794, %v2972
        %v2983 = vmul.f32 %v2795, %v2972
        %v2984 = vmul.f32 %v2796, %v2972
        %v2985 = vmul.f32 %v2797, %v2972
        %v2986 = vmul.f32 %v2798, %v2972
        %v2987 = vmul.f32 %v2799, %v2972
        %v2988 = vmul.f32 %v2800, %v2972
        %v2989 = vmul.f32 %v2801, %v2972
        %v2990 = vmul.f32 %v2802, %v2972
        %v2991 = vmul.f32 %v2803, %v2972
        %v2992 = vmul.f32 %v2804, %v2972
        %v2993 = vmul.f32 %v2805, %v2972
        %v2994 = vmul.f32 %v2806, %v2972
        %v2995 = vmul.f32 %v2807, %v2972
        %v2996 = vmul.f32 %v2808, %v2972
        %v3021 = vrot.slane %v2973, 2
        %v3022 = vrot.slane %v2974, 2
        %v3023 = vsel %vm595, %v3021, %v3022
        %v3024 = vrot.slane %v2975, 2
        %v3025 = vsel %vm595, %v3022, %v3024
        %v3026 = vrot.slane %v2976, 2
        %v3027 = vrot.slane %v2977, 2
        %v3028 = vsel %vm595, %v3026, %v3027
        %v3029 = vrot.slane %v2978, 2
        %v3030 = vsel %vm595, %v3027, %v3029
        %v3031 = vrot.slane %v2979, 2
        %v3032 = vrot.slane %v2980, 2
        %v3033 = vsel %vm595, %v3031, %v3032
        %v3034 = vrot.slane %v2981, 2
        %v3035 = vsel %vm595, %v3032, %v3034
        %v3036 = vrot.slane %v2982, 2
        %v3037 = vrot.slane %v2983, 2
        %v3038 = vsel %vm595, %v3036, %v3037
        %v3039 = vrot.slane %v2984, 2
        %v3040 = vsel %vm595, %v3037, %v3039
        %v3041 = vrot.slane %v2985, 2
        %v3042 = vrot.slane %v2986, 2
        %v3043 = vsel %vm595, %v3041, %v3042
        %v3044 = vrot.slane %v2987, 2
        %v3045 = vsel %vm595, %v3042, %v3044
        %v3046 = vrot.slane %v2988, 2
        %v3047 = vrot.slane %v2989, 2
        %v3048 = vsel %vm595, %v3046, %v3047
        %v3049 = vrot.slane %v2990, 2
        %v3050 = vsel %vm595, %v3047, %v3049
        %v3051 = vrot.slane %v2991, 2
        %v3052 = vrot.slane %v2992, 2
        %v3053 = vsel %vm595, %v3051, %v3052
        %v3054 = vrot.slane %v2993, 2
        %v3055 = vsel %vm595, %v3052, %v3054
        %v3056 = vrot.slane %v2994, 2
        %v3057 = vrot.slane %v2995, 2
        %v3058 = vsel %vm595, %v3056, %v3057
        %v3059 = vrot.slane %v2996, 2
        %v3060 = vsel %vm595, %v3057, %v3059
        %v3077 = vadd.f32 %v2953, %v3023
        %v3078 = vadd.f32 %v2954, %v3025
        %v3079 = vadd.f32 %v2955, %v3028
        %v3080 = vadd.f32 %v2956, %v3030
        %v3081 = vadd.f32 %v2957, %v3033
        %v3082 = vadd.f32 %v2958, %v3035
        %v3083 = vadd.f32 %v2959, %v3038
        %v3084 = vadd.f32 %v2960, %v3040
        %v3085 = vadd.f32 %v2961, %v3043
        %v3086 = vadd.f32 %v2962, %v3045
        %v3087 = vadd.f32 %v2963, %v3048
        %v3088 = vadd.f32 %v2964, %v3050
        %v3089 = vadd.f32 %v2965, %v3053
        %v3090 = vadd.f32 %v2966, %v3055
        %v3091 = vadd.f32 %v2967, %v3058
        %v3092 = vadd.f32 %v2968, %v3060
        %v3093 = vlaneseq
        %v3094 = vshrl.u32 %v3093, 7
        %v3095 = vsub.s32 0, %v3094
        %v3096 = vrot.slane %v351, %v3095
        %v3097 = vmul.f32 %v2785, %v3096
        %v3098 = vmul.f32 %v2786, %v3096
        %v3099 = vmul.f32 %v2787, %v3096
        %v3100 = vmul.f32 %v2788, %v3096
        %v3101 = vmul.f32 %v2789, %v3096
        %v3102 = vmul.f32 %v2790, %v3096
        %v3103 = vmul.f32 %v2791, %v3096
        %v3104 = vmul.f32 %v2792, %v3096
        %v3105 = vmul.f32 %v2793, %v3096
        %v3106 = vmul.f32 %v2794, %v3096
        %v3107 = vmul.f32 %v2795, %v3096
        %v3108 = vmul.f32 %v2796, %v3096
        %v3109 = vmul.f32 %v2797, %v3096
        %v3110 = vmul.f32 %v2798, %v3096
        %v3111 = vmul.f32 %v2799, %v3096
        %v3112 = vmul.f32 %v2800, %v3096
        %v3113 = vmul.f32 %v2801, %v3096
        %v3114 = vmul.f32 %v2802, %v3096
        %v3115 = vmul.f32 %v2803, %v3096
        %v3116 = vmul.f32 %v2804, %v3096
        %v3117 = vmul.f32 %v2805, %v3096
        %v3118 = vmul.f32 %v2806, %v3096
        %v3119 = vmul.f32 %v2807, %v3096
        %v3120 = vmul.f32 %v2808, %v3096
        %v3145 = vrot.slane %v3097, 3
        %v3146 = vrot.slane %v3098, 3
        %v3147 = vsel %vm720, %v3145, %v3146
        %v3148 = vrot.slane %v3099, 3
        %v3149 = vsel %vm720, %v3146, %v3148
        %v3150 = vrot.slane %v3100, 3
        %v3151 = vrot.slane %v3101, 3
        %v3152 = vsel %vm720, %v3150, %v3151
        %v3153 = vrot.slane %v3102, 3
        %v3154 = vsel %vm720, %v3151, %v3153
        %v3155 = vrot.slane %v3103, 3
        %v3156 = vrot.slane %v3104, 3
        %v3157 = vsel %vm720, %v3155, %v3156
        %v3158 = vrot.slane %v3105, 3
        %v3159 = vsel %vm720, %v3156, %v3158
        %v3160 = vrot.slane %v3106, 3
        %v3161 = vrot.slane %v3107, 3
        %v3162 = vsel %vm720, %v3160, %v3161
        %v3163 = vrot.slane %v3108, 3
        %v3164 = vsel %vm720, %v3161, %v3163
        %v3165 = vrot.slane %v3109, 3
        %v3166 = vrot.slane %v3110, 3
        %v3167 = vsel %vm720, %v3165, %v3166
        %v3168 = vrot.slane %v3111, 3
        %v3169 = vsel %vm720, %v3166, %v3168
        %v3170 = vrot.slane %v3112, 3
        %v3171 = vrot.slane %v3113, 3
        %v3172 = vsel %vm720, %v3170, %v3171
        %v3173 = vrot.slane %v3114, 3
        %v3174 = vsel %vm720, %v3171, %v3173
        %v3175 = vrot.slane %v3115, 3
        %v3176 = vrot.slane %v3116, 3
        %v3177 = vsel %vm720, %v3175, %v3176
        %v3178 = vrot.slane %v3117, 3
        %v3179 = vsel %vm720, %v3176, %v3178
        %v3180 = vrot.slane %v3118, 3
        %v3181 = vrot.slane %v3119, 3
        %v3182 = vsel %vm720, %v3180, %v3181
        %v3183 = vrot.slane %v3120, 3
        %v3184 = vsel %vm720, %v3181, %v3183
        %v3201 = vadd.f32 %v3077, %v3147
        %v3202 = vadd.f32 %v3078, %v3149
        %v3203 = vadd.f32 %v3079, %v3152
        %v3204 = vadd.f32 %v3080, %v3154
        %v3205 = vadd.f32 %v3081, %v3157
        %v3206 = vadd.f32 %v3082, %v3159
        %v3207 = vadd.f32 %v3083, %v3162
        %v3208 = vadd.f32 %v3084, %v3164
        %v3209 = vadd.f32 %v3085, %v3167
        %v3210 = vadd.f32 %v3086, %v3169
        %v3211 = vadd.f32 %v3087, %v3172
        %v3212 = vadd.f32 %v3088, %v3174
        %v3213 = vadd.f32 %v3089, %v3177
        %v3214 = vadd.f32 %v3090, %v3179
        %v3215 = vadd.f32 %v3091, %v3182
        %v3216 = vadd.f32 %v3092, %v3184
        %v3217 = vlaneseq
        %v3218 = vshrl.u32 %v3217, 7
        %v3219 = vsub.s32 1, %v3218
        %v3220 = vrot.slane %v351, %v3219
        %v3221 = vmul.f32 %v2785, %v3220
        %v3222 = vmul.f32 %v2786, %v3220
        %v3223 = vmul.f32 %v2787, %v3220
        %v3224 = vmul.f32 %v2788, %v3220
        %v3225 = vmul.f32 %v2789, %v3220
        %v3226 = vmul.f32 %v2790, %v3220
        %v3227 = vmul.f32 %v2791, %v3220
        %v3228 = vmul.f32 %v2792, %v3220
        %v3229 = vmul.f32 %v2793, %v3220
        %v3230 = vmul.f32 %v2794, %v3220
        %v3231 = vmul.f32 %v2795, %v3220
        %v3232 = vmul.f32 %v2796, %v3220
        %v3233 = vmul.f32 %v2797, %v3220
        %v3234 = vmul.f32 %v2798, %v3220
        %v3235 = vmul.f32 %v2799, %v3220
        %v3236 = vmul.f32 %v2800, %v3220
        %v3237 = vmul.f32 %v2801, %v3220
        %v3238 = vmul.f32 %v2802, %v3220
        %v3239 = vmul.f32 %v2803, %v3220
        %v3240 = vmul.f32 %v2804, %v3220
        %v3241 = vmul.f32 %v2805, %v3220
        %v3242 = vmul.f32 %v2806, %v3220
        %v3243 = vmul.f32 %v2807, %v3220
        %v3244 = vmul.f32 %v2808, %v3220
        %v3269 = vrot.slane %v3221, 4
        %v3270 = vrot.slane %v3222, 4
        %v3271 = vsel %vm845, %v3269, %v3270
        %v3272 = vrot.slane %v3223, 4
        %v3273 = vsel %vm845, %v3270, %v3272
        %v3274 = vrot.slane %v3224, 4
        %v3275 = vrot.slane %v3225, 4
        %v3276 = vsel %vm845, %v3274, %v3275
        %v3277 = vrot.slane %v3226, 4
        %v3278 = vsel %vm845, %v3275, %v3277
        %v3279 = vrot.slane %v3227, 4
        %v3280 = vrot.slane %v3228, 4
        %v3281 = vsel %vm845, %v3279, %v3280
        %v3282 = vrot.slane %v3229, 4
        %v3283 = vsel %vm845, %v3280, %v3282
        %v3284 = vrot.slane %v3230, 4
        %v3285 = vrot.slane %v3231, 4
        %v3286 = vsel %vm845, %v3284, %v3285
        %v3287 = vrot.slane %v3232, 4
        %v3288 = vsel %vm845, %v3285, %v3287
        %v3289 = vrot.slane %v3233, 4
        %v3290 = vrot.slane %v3234, 4
        %v3291 = vsel %vm845, %v3289, %v3290
        %v3292 = vrot.slane %v3235, 4
        %v3293 = vsel %vm845, %v3290, %v3292
        %v3294 = vrot.slane %v3236, 4
        %v3295 = vrot.slane %v3237, 4
        %v3296 = vsel %vm845, %v3294, %v3295
        %v3297 = vrot.slane %v3238, 4
        %v3298 = vsel %vm845, %v3295, %v3297
        %v3299 = vrot.slane %v3239, 4
        %v3300 = vrot.slane %v3240, 4
        %v3301 = vsel %vm845, %v3299, %v3300
        %v3302 = vrot.slane %v3241, 4
        %v3303 = vsel %vm845, %v3300, %v3302
        %v3304 = vrot.slane %v3242, 4
        %v3305 = vrot.slane %v3243, 4
        %v3306 = vsel %vm845, %v3304, %v3305
        %v3307 = vrot.slane %v3244, 4
        %v3308 = vsel %vm845, %v3305, %v3307
        %v3325 = vadd.f32 %v3201, %v3271
        %v3326 = vadd.f32 %v3202, %v3273
        %v3327 = vadd.f32 %v3203, %v3276
        %v3328 = vadd.f32 %v3204, %v3278
        %v3329 = vadd.f32 %v3205, %v3281
        %v3330 = vadd.f32 %v3206, %v3283
        %v3331 = vadd.f32 %v3207, %v3286
        %v3332 = vadd.f32 %v3208, %v3288
        %v3333 = vadd.f32 %v3209, %v3291
        %v3334 = vadd.f32 %v3210, %v3293
        %v3335 = vadd.f32 %v3211, %v3296
        %v3336 = vadd.f32 %v3212, %v3298
        %v3337 = vadd.f32 %v3213, %v3301
        %v3338 = vadd.f32 %v3214, %v3303
        %v3339 = vadd.f32 %v3215, %v3306
        %v3340 = vadd.f32 %v3216, %v3308
        %v3341 = vlaneseq
        %v3342 = vshrl.u32 %v3341, 7
        %v3343 = vsub.s32 2, %v3342
        %v3344 = vrot.slane %v351, %v3343
        %v3345 = vmul.f32 %v2785, %v3344
        %v3346 = vmul.f32 %v2786, %v3344
        %v3347 = vmul.f32 %v2787, %v3344
        %v3348 = vmul.f32 %v2788, %v3344
        %v3349 = vmul.f32 %v2789, %v3344
        %v3350 = vmul.f32 %v2790, %v3344
        %v3351 = vmul.f32 %v2791, %v3344
        %v3352 = vmul.f32 %v2792, %v3344
        %v3353 = vmul.f32 %v2793, %v3344
        %v3354 = vmul.f32 %v2794, %v3344
        %v3355 = vmul.f32 %v2795, %v3344
        %v3356 = vmul.f32 %v2796, %v3344
        %v3357 = vmul.f32 %v2797, %v3344
        %v3358 = vmul.f32 %v2798, %v3344
        %v3359 = vmul.f32 %v2799, %v3344
        %v3360 = vmul.f32 %v2800, %v3344
        %v3361 = vmul.f32 %v2801, %v3344
        %v3362 = vmul.f32 %v2802, %v3344
        %v3363 = vmul.f32 %v2803, %v3344
        %v3364 = vmul.f32 %v2804, %v3344
        %v3365 = vmul.f32 %v2805, %v3344
        %v3366 = vmul.f32 %v2806, %v3344
        %v3367 = vmul.f32 %v2807, %v3344
        %v3368 = vmul.f32 %v2808, %v3344
        %v3393 = vrot.slane %v3345, 5
        %v3394 = vrot.slane %v3346, 5
        %v3395 = vsel %vm970, %v3393, %v3394
        %v3396 = vrot.slane %v3347, 5
        %v3397 = vsel %vm970, %v3394, %v3396
        %v3398 = vrot.slane %v3348, 5
        %v3399 = vrot.slane %v3349, 5
        %v3400 = vsel %vm970, %v3398, %v3399
        %v3401 = vrot.slane %v3350, 5
        %v3402 = vsel %vm970, %v3399, %v3401
        %v3403 = vrot.slane %v3351, 5
        %v3404 = vrot.slane %v3352, 5
        %v3405 = vsel %vm970, %v3403, %v3404
        %v3406 = vrot.slane %v3353, 5
        %v3407 = vsel %vm970, %v3404, %v3406
        %v3408 = vrot.slane %v3354, 5
        %v3409 = vrot.slane %v3355, 5
        %v3410 = vsel %vm970, %v3408, %v3409
        %v3411 = vrot.slane %v3356, 5
        %v3412 = vsel %vm970, %v3409, %v3411
        %v3413 = vrot.slane %v3357, 5
        %v3414 = vrot.slane %v3358, 5
        %v3415 = vsel %vm970, %v3413, %v3414
        %v3416 = vrot.slane %v3359, 5
        %v3417 = vsel %vm970, %v3414, %v3416
        %v3418 = vrot.slane %v3360, 5
        %v3419 = vrot.slane %v3361, 5
        %v3420 = vsel %vm970, %v3418, %v3419
        %v3421 = vrot.slane %v3362, 5
        %v3422 = vsel %vm970, %v3419, %v3421
        %v3423 = vrot.slane %v3363, 5
        %v3424 = vrot.slane %v3364, 5
        %v3425 = vsel %vm970, %v3423, %v3424
        %v3426 = vrot.slane %v3365, 5
        %v3427 = vsel %vm970, %v3424, %v3426
        %v3428 = vrot.slane %v3366, 5
        %v3429 = vrot.slane %v3367, 5
        %v3430 = vsel %vm970, %v3428, %v3429
        %v3431 = vrot.slane %v3368, 5
        %v3432 = vsel %vm970, %v3429, %v3431
        %v3449 = vadd.f32 %v3325, %v3395
        %v3450 = vadd.f32 %v3326, %v3397
        %v3451 = vadd.f32 %v3327, %v3400
        %v3452 = vadd.f32 %v3328, %v3402
        %v3453 = vadd.f32 %v3329, %v3405
        %v3454 = vadd.f32 %v3330, %v3407
        %v3455 = vadd.f32 %v3331, %v3410
        %v3456 = vadd.f32 %v3332, %v3412
        %v3457 = vadd.f32 %v3333, %v3415
        %v3458 = vadd.f32 %v3334, %v3417
        %v3459 = vadd.f32 %v3335, %v3420
        %v3460 = vadd.f32 %v3336, %v3422
        %v3461 = vadd.f32 %v3337, %v3425
        %v3462 = vadd.f32 %v3338, %v3427
        %v3463 = vadd.f32 %v3339, %v3430
        %v3464 = vadd.f32 %v3340, %v3432
        %v3465 = vlaneseq
        %v3466 = vshrl.u32 %v3465, 7
        %v3467 = vsub.s32 3, %v3466
        %v3468 = vrot.slane %v351, %v3467
        %v3469 = vmul.f32 %v2785, %v3468
        %v3470 = vmul.f32 %v2786, %v3468
        %v3471 = vmul.f32 %v2787, %v3468
        %v3472 = vmul.f32 %v2788, %v3468
        %v3473 = vmul.f32 %v2789, %v3468
        %v3474 = vmul.f32 %v2790, %v3468
        %v3475 = vmul.f32 %v2791, %v3468
        %v3476 = vmul.f32 %v2792, %v3468
        %v3477 = vmul.f32 %v2793, %v3468
        %v3478 = vmul.f32 %v2794, %v3468
        %v3479 = vmul.f32 %v2795, %v3468
        %v3480 = vmul.f32 %v2796, %v3468
        %v3481 = vmul.f32 %v2797, %v3468
        %v3482 = vmul.f32 %v2798, %v3468
        %v3483 = vmul.f32 %v2799, %v3468
        %v3484 = vmul.f32 %v2800, %v3468
        %v3485 = vmul.f32 %v2801, %v3468
        %v3486 = vmul.f32 %v2802, %v3468
        %v3487 = vmul.f32 %v2803, %v3468
        %v3488 = vmul.f32 %v2804, %v3468
        %v3489 = vmul.f32 %v2805, %v3468
        %v3490 = vmul.f32 %v2806, %v3468
        %v3491 = vmul.f32 %v2807, %v3468
        %v3492 = vmul.f32 %v2808, %v3468
        %v3517 = vrot.slane %v3469, 6
        %v3518 = vrot.slane %v3470, 6
        %v3519 = vsel %vm1095, %v3517, %v3518
        %v3520 = vrot.slane %v3471, 6
        %v3521 = vsel %vm1095, %v3518, %v3520
        %v3522 = vrot.slane %v3472, 6
        %v3523 = vrot.slane %v3473, 6
        %v3524 = vsel %vm1095, %v3522, %v3523
        %v3525 = vrot.slane %v3474, 6
        %v3526 = vsel %vm1095, %v3523, %v3525
        %v3527 = vrot.slane %v3475, 6
        %v3528 = vrot.slane %v3476, 6
        %v3529 = vsel %vm1095, %v3527, %v3528
        %v3530 = vrot.slane %v3477, 6
        %v3531 = vsel %vm1095, %v3528, %v3530
        %v3532 = vrot.slane %v3478, 6
        %v3533 = vrot.slane %v3479, 6
        %v3534 = vsel %vm1095, %v3532, %v3533
        %v3535 = vrot.slane %v3480, 6
        %v3536 = vsel %vm1095, %v3533, %v3535
        %v3537 = vrot.slane %v3481, 6
        %v3538 = vrot.slane %v3482, 6
        %v3539 = vsel %vm1095, %v3537, %v3538
        %v3540 = vrot.slane %v3483, 6
        %v3541 = vsel %vm1095, %v3538, %v3540
        %v3542 = vrot.slane %v3484, 6
        %v3543 = vrot.slane %v3485, 6
        %v3544 = vsel %vm1095, %v3542, %v3543
        %v3545 = vrot.slane %v3486, 6
        %v3546 = vsel %vm1095, %v3543, %v3545
        %v3547 = vrot.slane %v3487, 6
        %v3548 = vrot.slane %v3488, 6
        %v3549 = vsel %vm1095, %v3547, %v3548
        %v3550 = vrot.slane %v3489, 6
        %v3551 = vsel %vm1095, %v3548, %v3550
        %v3552 = vrot.slane %v3490, 6
        %v3553 = vrot.slane %v3491, 6
        %v3554 = vsel %vm1095, %v3552, %v3553
        %v3555 = vrot.slane %v3492, 6
        %v3556 = vsel %vm1095, %v3553, %v3555
        %v3573 = vadd.f32 %v3449, %v3519
        %v3574 = vadd.f32 %v3450, %v3521
        %v3575 = vadd.f32 %v3451, %v3524
        %v3576 = vadd.f32 %v3452, %v3526
        %v3577 = vadd.f32 %v3453, %v3529
        %v3578 = vadd.f32 %v3454, %v3531
        %v3579 = vadd.f32 %v3455, %v3534
        %v3580 = vadd.f32 %v3456, %v3536
        %v3581 = vadd.f32 %v3457, %v3539
        %v3582 = vadd.f32 %v3458, %v3541
        %v3583 = vadd.f32 %v3459, %v3544
        %v3584 = vadd.f32 %v3460, %v3546
        %v3585 = vadd.f32 %v3461, %v3549
        %v3586 = vadd.f32 %v3462, %v3551
        %v3587 = vadd.f32 %v3463, %v3554
        %v3588 = vadd.f32 %v3464, %v3556
        %s3589 = sadd.s32 %s347, 4
        %s3590 = smul.u32 %s3589, 24
        %s3591 = scalar_lea.vmem %s344, %s3590
        %v3592 = vld [vmem:[%s3591] sm:$0xff]
        %v3593 = vld [vmem:[%s3591 + $0x8] sm:$0xff]
        %v3594 = vld [vmem:[%s3591 + $0x10] sm:$0x3f]
        %v3595 = vld [vmem:[%s3591 + $0x18] sm:$0xff]
        %v3596 = vld [vmem:[%s3591 + $0x20] sm:$0xff]
        %v3597 = vld [vmem:[%s3591 + $0x28] sm:$0x3f]
        %v3598 = vld [vmem:[%s3591 + $0x30] sm:$0xff]
        %v3599 = vld [vmem:[%s3591 + $0x38] sm:$0xff]
        %v3600 = vld [vmem:[%s3591 + $0x40] sm:$0x3f]
        %v3601 = vld [vmem:[%s3591 + $0x48] sm:$0xff]
        %v3602 = vld [vmem:[%s3591 + $0x50] sm:$0xff]
        %v3603 = vld [vmem:[%s3591 + $0x58] sm:$0x3f]
        %v3604 = vld [vmem:[%s3591 + $0x60] sm:$0xff]
        %v3605 = vld [vmem:[%s3591 + $0x68] sm:$0xff]
        %v3606 = vld [vmem:[%s3591 + $0x70] sm:$0x3f]
        %v3607 = vld [vmem:[%s3591 + $0x78] sm:$0xff]
        %v3608 = vld [vmem:[%s3591 + $0x80] sm:$0xff]
        %v3609 = vld [vmem:[%s3591 + $0x88] sm:$0x3f]
        %v3610 = vld [vmem:[%s3591 + $0x90] sm:$0xff]
        %v3611 = vld [vmem:[%s3591 + $0x98] sm:$0xff]
        %v3612 = vld [vmem:[%s3591 + $0xa0] sm:$0x3f]
        %v3613 = vld [vmem:[%s3591 + $0xa8] sm:$0xff]
        %v3614 = vld [vmem:[%s3591 + $0xb0] sm:$0xff]
        %v3615 = vld [vmem:[%s3591 + $0xb8] sm:$0x3f]
        %v3616 = vlaneseq
        %v3617 = vshrl.u32 %v3616, 7
        %v3618 = vsub.s32 4, %v3617
        %v3619 = vrot.slane %v351, %v3618
        %v3620 = vmul.f32 %v3592, %v3619
        %v3621 = vmul.f32 %v3593, %v3619
        %v3622 = vmul.f32 %v3595, %v3619
        %v3623 = vmul.f32 %v3596, %v3619
        %v3624 = vmul.f32 %v3598, %v3619
        %v3625 = vmul.f32 %v3599, %v3619
        %v3626 = vmul.f32 %v3601, %v3619
        %v3627 = vmul.f32 %v3602, %v3619
        %v3628 = vmul.f32 %v3604, %v3619
        %v3629 = vmul.f32 %v3605, %v3619
        %v3630 = vmul.f32 %v3607, %v3619
        %v3631 = vmul.f32 %v3608, %v3619
        %v3632 = vmul.f32 %v3610, %v3619
        %v3633 = vmul.f32 %v3611, %v3619
        %v3634 = vmul.f32 %v3613, %v3619
        %v3635 = vmul.f32 %v3614, %v3619
        %v3636 = vadd.f32 %v3573, %v3620
        %v3637 = vadd.f32 %v3574, %v3621
        %v3638 = vadd.f32 %v3575, %v3622
        %v3639 = vadd.f32 %v3576, %v3623
        %v3640 = vadd.f32 %v3577, %v3624
        %v3641 = vadd.f32 %v3578, %v3625
        %v3642 = vadd.f32 %v3579, %v3626
        %v3643 = vadd.f32 %v3580, %v3627
        %v3644 = vadd.f32 %v3581, %v3628
        %v3645 = vadd.f32 %v3582, %v3629
        %v3646 = vadd.f32 %v3583, %v3630
        %v3647 = vadd.f32 %v3584, %v3631
        %v3648 = vadd.f32 %v3585, %v3632
        %v3649 = vadd.f32 %v3586, %v3633
        %v3650 = vadd.f32 %v3587, %v3634
        %v3651 = vadd.f32 %v3588, %v3635
        %v3652 = vlaneseq
        %v3653 = vshrl.u32 %v3652, 7
        %v3654 = vsub.s32 5, %v3653
        %v3655 = vrot.slane %v351, %v3654
        %v3656 = vmul.f32 %v3592, %v3655
        %v3657 = vmul.f32 %v3593, %v3655
        %v3658 = vmul.f32 %v3594, %v3655
        %v3659 = vmul.f32 %v3595, %v3655
        %v3660 = vmul.f32 %v3596, %v3655
        %v3661 = vmul.f32 %v3597, %v3655
        %v3662 = vmul.f32 %v3598, %v3655
        %v3663 = vmul.f32 %v3599, %v3655
        %v3664 = vmul.f32 %v3600, %v3655
        %v3665 = vmul.f32 %v3601, %v3655
        %v3666 = vmul.f32 %v3602, %v3655
        %v3667 = vmul.f32 %v3603, %v3655
        %v3668 = vmul.f32 %v3604, %v3655
        %v3669 = vmul.f32 %v3605, %v3655
        %v3670 = vmul.f32 %v3606, %v3655
        %v3671 = vmul.f32 %v3607, %v3655
        %v3672 = vmul.f32 %v3608, %v3655
        %v3673 = vmul.f32 %v3609, %v3655
        %v3674 = vmul.f32 %v3610, %v3655
        %v3675 = vmul.f32 %v3611, %v3655
        %v3676 = vmul.f32 %v3612, %v3655
        %v3677 = vmul.f32 %v3613, %v3655
        %v3678 = vmul.f32 %v3614, %v3655
        %v3679 = vmul.f32 %v3615, %v3655
        %v3704 = vrot.slane %v3656, 1
        %v3705 = vrot.slane %v3657, 1
        %v3706 = vsel %vm470, %v3704, %v3705
        %v3707 = vrot.slane %v3658, 1
        %v3708 = vsel %vm470, %v3705, %v3707
        %v3709 = vrot.slane %v3659, 1
        %v3710 = vrot.slane %v3660, 1
        %v3711 = vsel %vm470, %v3709, %v3710
        %v3712 = vrot.slane %v3661, 1
        %v3713 = vsel %vm470, %v3710, %v3712
        %v3714 = vrot.slane %v3662, 1
        %v3715 = vrot.slane %v3663, 1
        %v3716 = vsel %vm470, %v3714, %v3715
        %v3717 = vrot.slane %v3664, 1
        %v3718 = vsel %vm470, %v3715, %v3717
        %v3719 = vrot.slane %v3665, 1
        %v3720 = vrot.slane %v3666, 1
        %v3721 = vsel %vm470, %v3719, %v3720
        %v3722 = vrot.slane %v3667, 1
        %v3723 = vsel %vm470, %v3720, %v3722
        %v3724 = vrot.slane %v3668, 1
        %v3725 = vrot.slane %v3669, 1
        %v3726 = vsel %vm470, %v3724, %v3725
        %v3727 = vrot.slane %v3670, 1
        %v3728 = vsel %vm470, %v3725, %v3727
        %v3729 = vrot.slane %v3671, 1
        %v3730 = vrot.slane %v3672, 1
        %v3731 = vsel %vm470, %v3729, %v3730
        %v3732 = vrot.slane %v3673, 1
        %v3733 = vsel %vm470, %v3730, %v3732
        %v3734 = vrot.slane %v3674, 1
        %v3735 = vrot.slane %v3675, 1
        %v3736 = vsel %vm470, %v3734, %v3735
        %v3737 = vrot.slane %v3676, 1
        %v3738 = vsel %vm470, %v3735, %v3737
        %v3739 = vrot.slane %v3677, 1
        %v3740 = vrot.slane %v3678, 1
        %v3741 = vsel %vm470, %v3739, %v3740
        %v3742 = vrot.slane %v3679, 1
        %v3743 = vsel %vm470, %v3740, %v3742
        %v3760 = vadd.f32 %v3636, %v3706
        %v3761 = vadd.f32 %v3637, %v3708
        %v3762 = vadd.f32 %v3638, %v3711
        %v3763 = vadd.f32 %v3639, %v3713
        %v3764 = vadd.f32 %v3640, %v3716
        %v3765 = vadd.f32 %v3641, %v3718
        %v3766 = vadd.f32 %v3642, %v3721
        %v3767 = vadd.f32 %v3643, %v3723
        %v3768 = vadd.f32 %v3644, %v3726
        %v3769 = vadd.f32 %v3645, %v3728
        %v3770 = vadd.f32 %v3646, %v3731
        %v3771 = vadd.f32 %v3647, %v3733
        %v3772 = vadd.f32 %v3648, %v3736
        %v3773 = vadd.f32 %v3649, %v3738
        %v3774 = vadd.f32 %v3650, %v3741
        %v3775 = vadd.f32 %v3651, %v3743
        %v3776 = vlaneseq
        %v3777 = vshrl.u32 %v3776, 7
        %v3778 = vsub.s32 6, %v3777
        %v3779 = vrot.slane %v351, %v3778
        %v3780 = vmul.f32 %v3592, %v3779
        %v3781 = vmul.f32 %v3593, %v3779
        %v3782 = vmul.f32 %v3594, %v3779
        %v3783 = vmul.f32 %v3595, %v3779
        %v3784 = vmul.f32 %v3596, %v3779
        %v3785 = vmul.f32 %v3597, %v3779
        %v3786 = vmul.f32 %v3598, %v3779
        %v3787 = vmul.f32 %v3599, %v3779
        %v3788 = vmul.f32 %v3600, %v3779
        %v3789 = vmul.f32 %v3601, %v3779
        %v3790 = vmul.f32 %v3602, %v3779
        %v3791 = vmul.f32 %v3603, %v3779
        %v3792 = vmul.f32 %v3604, %v3779
        %v3793 = vmul.f32 %v3605, %v3779
        %v3794 = vmul.f32 %v3606, %v3779
        %v3795 = vmul.f32 %v3607, %v3779
        %v3796 = vmul.f32 %v3608, %v3779
        %v3797 = vmul.f32 %v3609, %v3779
        %v3798 = vmul.f32 %v3610, %v3779
        %v3799 = vmul.f32 %v3611, %v3779
        %v3800 = vmul.f32 %v3612, %v3779
        %v3801 = vmul.f32 %v3613, %v3779
        %v3802 = vmul.f32 %v3614, %v3779
        %v3803 = vmul.f32 %v3615, %v3779
        %v3828 = vrot.slane %v3780, 2
        %v3829 = vrot.slane %v3781, 2
        %v3830 = vsel %vm595, %v3828, %v3829
        %v3831 = vrot.slane %v3782, 2
        %v3832 = vsel %vm595, %v3829, %v3831
        %v3833 = vrot.slane %v3783, 2
        %v3834 = vrot.slane %v3784, 2
        %v3835 = vsel %vm595, %v3833, %v3834
        %v3836 = vrot.slane %v3785, 2
        %v3837 = vsel %vm595, %v3834, %v3836
        %v3838 = vrot.slane %v3786, 2
        %v3839 = vrot.slane %v3787, 2
        %v3840 = vsel %vm595, %v3838, %v3839
        %v3841 = vrot.slane %v3788, 2
        %v3842 = vsel %vm595, %v3839, %v3841
        %v3843 = vrot.slane %v3789, 2
        %v3844 = vrot.slane %v3790, 2
        %v3845 = vsel %vm595, %v3843, %v3844
        %v3846 = vrot.slane %v3791, 2
        %v3847 = vsel %vm595, %v3844, %v3846
        %v3848 = vrot.slane %v3792, 2
        %v3849 = vrot.slane %v3793, 2
        %v3850 = vsel %vm595, %v3848, %v3849
        %v3851 = vrot.slane %v3794, 2
        %v3852 = vsel %vm595, %v3849, %v3851
        %v3853 = vrot.slane %v3795, 2
        %v3854 = vrot.slane %v3796, 2
        %v3855 = vsel %vm595, %v3853, %v3854
        %v3856 = vrot.slane %v3797, 2
        %v3857 = vsel %vm595, %v3854, %v3856
        %v3858 = vrot.slane %v3798, 2
        %v3859 = vrot.slane %v3799, 2
        %v3860 = vsel %vm595, %v3858, %v3859
        %v3861 = vrot.slane %v3800, 2
        %v3862 = vsel %vm595, %v3859, %v3861
        %v3863 = vrot.slane %v3801, 2
        %v3864 = vrot.slane %v3802, 2
        %v3865 = vsel %vm595, %v3863, %v3864
        %v3866 = vrot.slane %v3803, 2
        %v3867 = vsel %vm595, %v3864, %v3866
        %v3884 = vadd.f32 %v3760, %v3830
        %v3885 = vadd.f32 %v3761, %v3832
        %v3886 = vadd.f32 %v3762, %v3835
        %v3887 = vadd.f32 %v3763, %v3837
        %v3888 = vadd.f32 %v3764, %v3840
        %v3889 = vadd.f32 %v3765, %v3842
        %v3890 = vadd.f32 %v3766, %v3845
        %v3891 = vadd.f32 %v3767, %v3847
        %v3892 = vadd.f32 %v3768, %v3850
        %v3893 = vadd.f32 %v3769, %v3852
        %v3894 = vadd.f32 %v3770, %v3855
        %v3895 = vadd.f32 %v3771, %v3857
        %v3896 = vadd.f32 %v3772, %v3860
        %v3897 = vadd.f32 %v3773, %v3862
        %v3898 = vadd.f32 %v3774, %v3865
        %v3899 = vadd.f32 %v3775, %v3867
        %v3900 = vlaneseq
        %v3901 = vshrl.u32 %v3900, 7
        %v3902 = vsub.s32 7, %v3901
        %v3903 = vrot.slane %v351, %v3902
        %v3904 = vmul.f32 %v3592, %v3903
        %v3905 = vmul.f32 %v3593, %v3903
        %v3906 = vmul.f32 %v3594, %v3903
        %v3907 = vmul.f32 %v3595, %v3903
        %v3908 = vmul.f32 %v3596, %v3903
        %v3909 = vmul.f32 %v3597, %v3903
        %v3910 = vmul.f32 %v3598, %v3903
        %v3911 = vmul.f32 %v3599, %v3903
        %v3912 = vmul.f32 %v3600, %v3903
        %v3913 = vmul.f32 %v3601, %v3903
        %v3914 = vmul.f32 %v3602, %v3903
        %v3915 = vmul.f32 %v3603, %v3903
        %v3916 = vmul.f32 %v3604, %v3903
        %v3917 = vmul.f32 %v3605, %v3903
        %v3918 = vmul.f32 %v3606, %v3903
        %v3919 = vmul.f32 %v3607, %v3903
        %v3920 = vmul.f32 %v3608, %v3903
        %v3921 = vmul.f32 %v3609, %v3903
        %v3922 = vmul.f32 %v3610, %v3903
        %v3923 = vmul.f32 %v3611, %v3903
        %v3924 = vmul.f32 %v3612, %v3903
        %v3925 = vmul.f32 %v3613, %v3903
        %v3926 = vmul.f32 %v3614, %v3903
        %v3927 = vmul.f32 %v3615, %v3903
        %v3952 = vrot.slane %v3904, 3
        %v3953 = vrot.slane %v3905, 3
        %v3954 = vsel %vm720, %v3952, %v3953
        %v3955 = vrot.slane %v3906, 3
        %v3956 = vsel %vm720, %v3953, %v3955
        %v3957 = vrot.slane %v3907, 3
        %v3958 = vrot.slane %v3908, 3
        %v3959 = vsel %vm720, %v3957, %v3958
        %v3960 = vrot.slane %v3909, 3
        %v3961 = vsel %vm720, %v3958, %v3960
        %v3962 = vrot.slane %v3910, 3
        %v3963 = vrot.slane %v3911, 3
        %v3964 = vsel %vm720, %v3962, %v3963
        %v3965 = vrot.slane %v3912, 3
        %v3966 = vsel %vm720, %v3963, %v3965
        %v3967 = vrot.slane %v3913, 3
        %v3968 = vrot.slane %v3914, 3
        %v3969 = vsel %vm720, %v3967, %v3968
        %v3970 = vrot.slane %v3915, 3
        %v3971 = vsel %vm720, %v3968, %v3970
        %v3972 = vrot.slane %v3916, 3
        %v3973 = vrot.slane %v3917, 3
        %v3974 = vsel %vm720, %v3972, %v3973
        %v3975 = vrot.slane %v3918, 3
        %v3976 = vsel %vm720, %v3973, %v3975
        %v3977 = vrot.slane %v3919, 3
        %v3978 = vrot.slane %v3920, 3
        %v3979 = vsel %vm720, %v3977, %v3978
        %v3980 = vrot.slane %v3921, 3
        %v3981 = vsel %vm720, %v3978, %v3980
        %v3982 = vrot.slane %v3922, 3
        %v3983 = vrot.slane %v3923, 3
        %v3984 = vsel %vm720, %v3982, %v3983
        %v3985 = vrot.slane %v3924, 3
        %v3986 = vsel %vm720, %v3983, %v3985
        %v3987 = vrot.slane %v3925, 3
        %v3988 = vrot.slane %v3926, 3
        %v3989 = vsel %vm720, %v3987, %v3988
        %v3990 = vrot.slane %v3927, 3
        %v3991 = vsel %vm720, %v3988, %v3990
        %v4008 = vadd.f32 %v3884, %v3954
        %v4009 = vadd.f32 %v3885, %v3956
        %v4010 = vadd.f32 %v3886, %v3959
        %v4011 = vadd.f32 %v3887, %v3961
        %v4012 = vadd.f32 %v3888, %v3964
        %v4013 = vadd.f32 %v3889, %v3966
        %v4014 = vadd.f32 %v3890, %v3969
        %v4015 = vadd.f32 %v3891, %v3971
        %v4016 = vadd.f32 %v3892, %v3974
        %v4017 = vadd.f32 %v3893, %v3976
        %v4018 = vadd.f32 %v3894, %v3979
        %v4019 = vadd.f32 %v3895, %v3981
        %v4020 = vadd.f32 %v3896, %v3984
        %v4021 = vadd.f32 %v3897, %v3986
        %v4022 = vadd.f32 %v3898, %v3989
        %v4023 = vadd.f32 %v3899, %v3991
        %v4024 = vlaneseq
        %v4025 = vshrl.u32 %v4024, 7
        %v4026 = vsub.s32 0, %v4025
        %v4027 = vrot.slane %v352, %v4026
        %v4028 = vmul.f32 %v3592, %v4027
        %v4029 = vmul.f32 %v3593, %v4027
        %v4030 = vmul.f32 %v3594, %v4027
        %v4031 = vmul.f32 %v3595, %v4027
        %v4032 = vmul.f32 %v3596, %v4027
        %v4033 = vmul.f32 %v3597, %v4027
        %v4034 = vmul.f32 %v3598, %v4027
        %v4035 = vmul.f32 %v3599, %v4027
        %v4036 = vmul.f32 %v3600, %v4027
        %v4037 = vmul.f32 %v3601, %v4027
        %v4038 = vmul.f32 %v3602, %v4027
        %v4039 = vmul.f32 %v3603, %v4027
        %v4040 = vmul.f32 %v3604, %v4027
        %v4041 = vmul.f32 %v3605, %v4027
        %v4042 = vmul.f32 %v3606, %v4027
        %v4043 = vmul.f32 %v3607, %v4027
        %v4044 = vmul.f32 %v3608, %v4027
        %v4045 = vmul.f32 %v3609, %v4027
        %v4046 = vmul.f32 %v3610, %v4027
        %v4047 = vmul.f32 %v3611, %v4027
        %v4048 = vmul.f32 %v3612, %v4027
        %v4049 = vmul.f32 %v3613, %v4027
        %v4050 = vmul.f32 %v3614, %v4027
        %v4051 = vmul.f32 %v3615, %v4027
        %v4076 = vrot.slane %v4028, 4
        %v4077 = vrot.slane %v4029, 4
        %v4078 = vsel %vm845, %v4076, %v4077
        %v4079 = vrot.slane %v4030, 4
        %v4080 = vsel %vm845, %v4077, %v4079
        %v4081 = vrot.slane %v4031, 4
        %v4082 = vrot.slane %v4032, 4
        %v4083 = vsel %vm845, %v4081, %v4082
        %v4084 = vrot.slane %v4033, 4
        %v4085 = vsel %vm845, %v4082, %v4084
        %v4086 = vrot.slane %v4034, 4
        %v4087 = vrot.slane %v4035, 4
        %v4088 = vsel %vm845, %v4086, %v4087
        %v4089 = vrot.slane %v4036, 4
        %v4090 = vsel %vm845, %v4087, %v4089
        %v4091 = vrot.slane %v4037, 4
        %v4092 = vrot.slane %v4038, 4
        %v4093 = vsel %vm845, %v4091, %v4092
        %v4094 = vrot.slane %v4039, 4
        %v4095 = vsel %vm845, %v4092, %v4094
        %v4096 = vrot.slane %v4040, 4
        %v4097 = vrot.slane %v4041, 4
        %v4098 = vsel %vm845, %v4096, %v4097
        %v4099 = vrot.slane %v4042, 4
        %v4100 = vsel %vm845, %v4097, %v4099
        %v4101 = vrot.slane %v4043, 4
        %v4102 = vrot.slane %v4044, 4
        %v4103 = vsel %vm845, %v4101, %v4102
        %v4104 = vrot.slane %v4045, 4
        %v4105 = vsel %vm845, %v4102, %v4104
        %v4106 = vrot.slane %v4046, 4
        %v4107 = vrot.slane %v4047, 4
        %v4108 = vsel %vm845, %v4106, %v4107
        %v4109 = vrot.slane %v4048, 4
        %v4110 = vsel %vm845, %v4107, %v4109
        %v4111 = vrot.slane %v4049, 4
        %v4112 = vrot.slane %v4050, 4
        %v4113 = vsel %vm845, %v4111, %v4112
        %v4114 = vrot.slane %v4051, 4
        %v4115 = vsel %vm845, %v4112, %v4114
        %v4132 = vadd.f32 %v4008, %v4078
        %v4133 = vadd.f32 %v4009, %v4080
        %v4134 = vadd.f32 %v4010, %v4083
        %v4135 = vadd.f32 %v4011, %v4085
        %v4136 = vadd.f32 %v4012, %v4088
        %v4137 = vadd.f32 %v4013, %v4090
        %v4138 = vadd.f32 %v4014, %v4093
        %v4139 = vadd.f32 %v4015, %v4095
        %v4140 = vadd.f32 %v4016, %v4098
        %v4141 = vadd.f32 %v4017, %v4100
        %v4142 = vadd.f32 %v4018, %v4103
        %v4143 = vadd.f32 %v4019, %v4105
        %v4144 = vadd.f32 %v4020, %v4108
        %v4145 = vadd.f32 %v4021, %v4110
        %v4146 = vadd.f32 %v4022, %v4113
        %v4147 = vadd.f32 %v4023, %v4115
        %v4148 = vlaneseq
        %v4149 = vshrl.u32 %v4148, 7
        %v4150 = vsub.s32 1, %v4149
        %v4151 = vrot.slane %v352, %v4150
        %v4152 = vmul.f32 %v3592, %v4151
        %v4153 = vmul.f32 %v3593, %v4151
        %v4154 = vmul.f32 %v3594, %v4151
        %v4155 = vmul.f32 %v3595, %v4151
        %v4156 = vmul.f32 %v3596, %v4151
        %v4157 = vmul.f32 %v3597, %v4151
        %v4158 = vmul.f32 %v3598, %v4151
        %v4159 = vmul.f32 %v3599, %v4151
        %v4160 = vmul.f32 %v3600, %v4151
        %v4161 = vmul.f32 %v3601, %v4151
        %v4162 = vmul.f32 %v3602, %v4151
        %v4163 = vmul.f32 %v3603, %v4151
        %v4164 = vmul.f32 %v3604, %v4151
        %v4165 = vmul.f32 %v3605, %v4151
        %v4166 = vmul.f32 %v3606, %v4151
        %v4167 = vmul.f32 %v3607, %v4151
        %v4168 = vmul.f32 %v3608, %v4151
        %v4169 = vmul.f32 %v3609, %v4151
        %v4170 = vmul.f32 %v3610, %v4151
        %v4171 = vmul.f32 %v3611, %v4151
        %v4172 = vmul.f32 %v3612, %v4151
        %v4173 = vmul.f32 %v3613, %v4151
        %v4174 = vmul.f32 %v3614, %v4151
        %v4175 = vmul.f32 %v3615, %v4151
        %v4200 = vrot.slane %v4152, 5
        %v4201 = vrot.slane %v4153, 5
        %v4202 = vsel %vm970, %v4200, %v4201
        %v4203 = vrot.slane %v4154, 5
        %v4204 = vsel %vm970, %v4201, %v4203
        %v4205 = vrot.slane %v4155, 5
        %v4206 = vrot.slane %v4156, 5
        %v4207 = vsel %vm970, %v4205, %v4206
        %v4208 = vrot.slane %v4157, 5
        %v4209 = vsel %vm970, %v4206, %v4208
        %v4210 = vrot.slane %v4158, 5
        %v4211 = vrot.slane %v4159, 5
        %v4212 = vsel %vm970, %v4210, %v4211
        %v4213 = vrot.slane %v4160, 5
        %v4214 = vsel %vm970, %v4211, %v4213
        %v4215 = vrot.slane %v4161, 5
        %v4216 = vrot.slane %v4162, 5
        %v4217 = vsel %vm970, %v4215, %v4216
        %v4218 = vrot.slane %v4163, 5
        %v4219 = vsel %vm970, %v4216, %v4218
        %v4220 = vrot.slane %v4164, 5
        %v4221 = vrot.slane %v4165, 5
        %v4222 = vsel %vm970, %v4220, %v4221
        %v4223 = vrot.slane %v4166, 5
        %v4224 = vsel %vm970, %v4221, %v4223
        %v4225 = vrot.slane %v4167, 5
        %v4226 = vrot.slane %v4168, 5
        %v4227 = vsel %vm970, %v4225, %v4226
        %v4228 = vrot.slane %v4169, 5
        %v4229 = vsel %vm970, %v4226, %v4228
        %v4230 = vrot.slane %v4170, 5
        %v4231 = vrot.slane %v4171, 5
        %v4232 = vsel %vm970, %v4230, %v4231
        %v4233 = vrot.slane %v4172, 5
        %v4234 = vsel %vm970, %v4231, %v4233
        %v4235 = vrot.slane %v4173, 5
        %v4236 = vrot.slane %v4174, 5
        %v4237 = vsel %vm970, %v4235, %v4236
        %v4238 = vrot.slane %v4175, 5
        %v4239 = vsel %vm970, %v4236, %v4238
        %v4256 = vadd.f32 %v4132, %v4202
        %v4257 = vadd.f32 %v4133, %v4204
        %v4258 = vadd.f32 %v4134, %v4207
        %v4259 = vadd.f32 %v4135, %v4209
        %v4260 = vadd.f32 %v4136, %v4212
        %v4261 = vadd.f32 %v4137, %v4214
        %v4262 = vadd.f32 %v4138, %v4217
        %v4263 = vadd.f32 %v4139, %v4219
        %v4264 = vadd.f32 %v4140, %v4222
        %v4265 = vadd.f32 %v4141, %v4224
        %v4266 = vadd.f32 %v4142, %v4227
        %v4267 = vadd.f32 %v4143, %v4229
        %v4268 = vadd.f32 %v4144, %v4232
        %v4269 = vadd.f32 %v4145, %v4234
        %v4270 = vadd.f32 %v4146, %v4237
        %v4271 = vadd.f32 %v4147, %v4239
        %v4272 = vlaneseq
        %v4273 = vshrl.u32 %v4272, 7
        %v4274 = vsub.s32 2, %v4273
        %v4275 = vrot.slane %v352, %v4274
        %v4276 = vmul.f32 %v3592, %v4275
        %v4277 = vmul.f32 %v3593, %v4275
        %v4278 = vmul.f32 %v3594, %v4275
        %v4279 = vmul.f32 %v3595, %v4275
        %v4280 = vmul.f32 %v3596, %v4275
        %v4281 = vmul.f32 %v3597, %v4275
        %v4282 = vmul.f32 %v3598, %v4275
        %v4283 = vmul.f32 %v3599, %v4275
        %v4284 = vmul.f32 %v3600, %v4275
        %v4285 = vmul.f32 %v3601, %v4275
        %v4286 = vmul.f32 %v3602, %v4275
        %v4287 = vmul.f32 %v3603, %v4275
        %v4288 = vmul.f32 %v3604, %v4275
        %v4289 = vmul.f32 %v3605, %v4275
        %v4290 = vmul.f32 %v3606, %v4275
        %v4291 = vmul.f32 %v3607, %v4275
        %v4292 = vmul.f32 %v3608, %v4275
        %v4293 = vmul.f32 %v3609, %v4275
        %v4294 = vmul.f32 %v3610, %v4275
        %v4295 = vmul.f32 %v3611, %v4275
        %v4296 = vmul.f32 %v3612, %v4275
        %v4297 = vmul.f32 %v3613, %v4275
        %v4298 = vmul.f32 %v3614, %v4275
        %v4299 = vmul.f32 %v3615, %v4275
        %v4324 = vrot.slane %v4276, 6
        %v4325 = vrot.slane %v4277, 6
        %v4326 = vsel %vm1095, %v4324, %v4325
        %v4327 = vrot.slane %v4278, 6
        %v4328 = vsel %vm1095, %v4325, %v4327
        %v4329 = vrot.slane %v4279, 6
        %v4330 = vrot.slane %v4280, 6
        %v4331 = vsel %vm1095, %v4329, %v4330
        %v4332 = vrot.slane %v4281, 6
        %v4333 = vsel %vm1095, %v4330, %v4332
        %v4334 = vrot.slane %v4282, 6
        %v4335 = vrot.slane %v4283, 6
        %v4336 = vsel %vm1095, %v4334, %v4335
        %v4337 = vrot.slane %v4284, 6
        %v4338 = vsel %vm1095, %v4335, %v4337
        %v4339 = vrot.slane %v4285, 6
        %v4340 = vrot.slane %v4286, 6
        %v4341 = vsel %vm1095, %v4339, %v4340
        %v4342 = vrot.slane %v4287, 6
        %v4343 = vsel %vm1095, %v4340, %v4342
        %v4344 = vrot.slane %v4288, 6
        %v4345 = vrot.slane %v4289, 6
        %v4346 = vsel %vm1095, %v4344, %v4345
        %v4347 = vrot.slane %v4290, 6
        %v4348 = vsel %vm1095, %v4345, %v4347
        %v4349 = vrot.slane %v4291, 6
        %v4350 = vrot.slane %v4292, 6
        %v4351 = vsel %vm1095, %v4349, %v4350
        %v4352 = vrot.slane %v4293, 6
        %v4353 = vsel %vm1095, %v4350, %v4352
        %v4354 = vrot.slane %v4294, 6
        %v4355 = vrot.slane %v4295, 6
        %v4356 = vsel %vm1095, %v4354, %v4355
        %v4357 = vrot.slane %v4296, 6
        %v4358 = vsel %vm1095, %v4355, %v4357
        %v4359 = vrot.slane %v4297, 6
        %v4360 = vrot.slane %v4298, 6
        %v4361 = vsel %vm1095, %v4359, %v4360
        %v4362 = vrot.slane %v4299, 6
        %v4363 = vsel %vm1095, %v4360, %v4362
        %v4380 = vadd.f32 %v4256, %v4326
        %v4381 = vadd.f32 %v4257, %v4328
        %v4382 = vadd.f32 %v4258, %v4331
        %v4383 = vadd.f32 %v4259, %v4333
        %v4384 = vadd.f32 %v4260, %v4336
        %v4385 = vadd.f32 %v4261, %v4338
        %v4386 = vadd.f32 %v4262, %v4341
        %v4387 = vadd.f32 %v4263, %v4343
        %v4388 = vadd.f32 %v4264, %v4346
        %v4389 = vadd.f32 %v4265, %v4348
        %v4390 = vadd.f32 %v4266, %v4351
        %v4391 = vadd.f32 %v4267, %v4353
        %v4392 = vadd.f32 %v4268, %v4356
        %v4393 = vadd.f32 %v4269, %v4358
        %v4394 = vadd.f32 %v4270, %v4361
        %v4395 = vadd.f32 %v4271, %v4363
        %s4396 = sadd.s32 %s347, 5
        %s4397 = smul.u32 %s4396, 24
        %s4398 = scalar_lea.vmem %s344, %s4397
        %v4399 = vld [vmem:[%s4398] sm:$0xff]
        %v4400 = vld [vmem:[%s4398 + $0x8] sm:$0xff]
        %v4401 = vld [vmem:[%s4398 + $0x10] sm:$0x3f]
        %v4402 = vld [vmem:[%s4398 + $0x18] sm:$0xff]
        %v4403 = vld [vmem:[%s4398 + $0x20] sm:$0xff]
        %v4404 = vld [vmem:[%s4398 + $0x28] sm:$0x3f]
        %v4405 = vld [vmem:[%s4398 + $0x30] sm:$0xff]
        %v4406 = vld [vmem:[%s4398 + $0x38] sm:$0xff]
        %v4407 = vld [vmem:[%s4398 + $0x40] sm:$0x3f]
        %v4408 = vld [vmem:[%s4398 + $0x48] sm:$0xff]
        %v4409 = vld [vmem:[%s4398 + $0x50] sm:$0xff]
        %v4410 = vld [vmem:[%s4398 + $0x58] sm:$0x3f]
        %v4411 = vld [vmem:[%s4398 + $0x60] sm:$0xff]
        %v4412 = vld [vmem:[%s4398 + $0x68] sm:$0xff]
        %v4413 = vld [vmem:[%s4398 + $0x70] sm:$0x3f]
        %v4414 = vld [vmem:[%s4398 + $0x78] sm:$0xff]
        %v4415 = vld [vmem:[%s4398 + $0x80] sm:$0xff]
        %v4416 = vld [vmem:[%s4398 + $0x88] sm:$0x3f]
        %v4417 = vld [vmem:[%s4398 + $0x90] sm:$0xff]
        %v4418 = vld [vmem:[%s4398 + $0x98] sm:$0xff]
        %v4419 = vld [vmem:[%s4398 + $0xa0] sm:$0x3f]
        %v4420 = vld [vmem:[%s4398 + $0xa8] sm:$0xff]
        %v4421 = vld [vmem:[%s4398 + $0xb0] sm:$0xff]
        %v4422 = vld [vmem:[%s4398 + $0xb8] sm:$0x3f]
        %v4423 = vlaneseq
        %v4424 = vshrl.u32 %v4423, 7
        %v4425 = vsub.s32 3, %v4424
        %v4426 = vrot.slane %v352, %v4425
        %v4427 = vmul.f32 %v4399, %v4426
        %v4428 = vmul.f32 %v4400, %v4426
        %v4429 = vmul.f32 %v4402, %v4426
        %v4430 = vmul.f32 %v4403, %v4426
        %v4431 = vmul.f32 %v4405, %v4426
        %v4432 = vmul.f32 %v4406, %v4426
        %v4433 = vmul.f32 %v4408, %v4426
        %v4434 = vmul.f32 %v4409, %v4426
        %v4435 = vmul.f32 %v4411, %v4426
        %v4436 = vmul.f32 %v4412, %v4426
        %v4437 = vmul.f32 %v4414, %v4426
        %v4438 = vmul.f32 %v4415, %v4426
        %v4439 = vmul.f32 %v4417, %v4426
        %v4440 = vmul.f32 %v4418, %v4426
        %v4441 = vmul.f32 %v4420, %v4426
        %v4442 = vmul.f32 %v4421, %v4426
        %v4443 = vadd.f32 %v4380, %v4427
        %v4444 = vadd.f32 %v4381, %v4428
        %v4445 = vadd.f32 %v4382, %v4429
        %v4446 = vadd.f32 %v4383, %v4430
        %v4447 = vadd.f32 %v4384, %v4431
        %v4448 = vadd.f32 %v4385, %v4432
        %v4449 = vadd.f32 %v4386, %v4433
        %v4450 = vadd.f32 %v4387, %v4434
        %v4451 = vadd.f32 %v4388, %v4435
        %v4452 = vadd.f32 %v4389, %v4436
        %v4453 = vadd.f32 %v4390, %v4437
        %v4454 = vadd.f32 %v4391, %v4438
        %v4455 = vadd.f32 %v4392, %v4439
        %v4456 = vadd.f32 %v4393, %v4440
        %v4457 = vadd.f32 %v4394, %v4441
        %v4458 = vadd.f32 %v4395, %v4442
        %v4459 = vlaneseq
        %v4460 = vshrl.u32 %v4459, 7
        %v4461 = vsub.s32 4, %v4460
        %v4462 = vrot.slane %v352, %v4461
        %v4463 = vmul.f32 %v4399, %v4462
        %v4464 = vmul.f32 %v4400, %v4462
        %v4465 = vmul.f32 %v4401, %v4462
        %v4466 = vmul.f32 %v4402, %v4462
        %v4467 = vmul.f32 %v4403, %v4462
        %v4468 = vmul.f32 %v4404, %v4462
        %v4469 = vmul.f32 %v4405, %v4462
        %v4470 = vmul.f32 %v4406, %v4462
        %v4471 = vmul.f32 %v4407, %v4462
        %v4472 = vmul.f32 %v4408, %v4462
        %v4473 = vmul.f32 %v4409, %v4462
        %v4474 = vmul.f32 %v4410, %v4462
        %v4475 = vmul.f32 %v4411, %v4462
        %v4476 = vmul.f32 %v4412, %v4462
        %v4477 = vmul.f32 %v4413, %v4462
        %v4478 = vmul.f32 %v4414, %v4462
        %v4479 = vmul.f32 %v4415, %v4462
        %v4480 = vmul.f32 %v4416, %v4462
        %v4481 = vmul.f32 %v4417, %v4462
        %v4482 = vmul.f32 %v4418, %v4462
        %v4483 = vmul.f32 %v4419, %v4462
        %v4484 = vmul.f32 %v4420, %v4462
        %v4485 = vmul.f32 %v4421, %v4462
        %v4486 = vmul.f32 %v4422, %v4462
        %v4511 = vrot.slane %v4463, 1
        %v4512 = vrot.slane %v4464, 1
        %v4513 = vsel %vm470, %v4511, %v4512
        %v4514 = vrot.slane %v4465, 1
        %v4515 = vsel %vm470, %v4512, %v4514
        %v4516 = vrot.slane %v4466, 1
        %v4517 = vrot.slane %v4467, 1
        %v4518 = vsel %vm470, %v4516, %v4517
        %v4519 = vrot.slane %v4468, 1
        %v4520 = vsel %vm470, %v4517, %v4519
        %v4521 = vrot.slane %v4469, 1
        %v4522 = vrot.slane %v4470, 1
        %v4523 = vsel %vm470, %v4521, %v4522
        %v4524 = vrot.slane %v4471, 1
        %v4525 = vsel %vm470, %v4522, %v4524
        %v4526 = vrot.slane %v4472, 1
        %v4527 = vrot.slane %v4473, 1
        %v4528 = vsel %vm470, %v4526, %v4527
        %v4529 = vrot.slane %v4474, 1
        %v4530 = vsel %vm470, %v4527, %v4529
        %v4531 = vrot.slane %v4475, 1
        %v4532 = vrot.slane %v4476, 1
        %v4533 = vsel %vm470, %v4531, %v4532
        %v4534 = vrot.slane %v4477, 1
        %v4535 = vsel %vm470, %v4532, %v4534
        %v4536 = vrot.slane %v4478, 1
        %v4537 = vrot.slane %v4479, 1
        %v4538 = vsel %vm470, %v4536, %v4537
        %v4539 = vrot.slane %v4480, 1
        %v4540 = vsel %vm470, %v4537, %v4539
        %v4541 = vrot.slane %v4481, 1
        %v4542 = vrot.slane %v4482, 1
        %v4543 = vsel %vm470, %v4541, %v4542
        %v4544 = vrot.slane %v4483, 1
        %v4545 = vsel %vm470, %v4542, %v4544
        %v4546 = vrot.slane %v4484, 1
        %v4547 = vrot.slane %v4485, 1
        %v4548 = vsel %vm470, %v4546, %v4547
        %v4549 = vrot.slane %v4486, 1
        %v4550 = vsel %vm470, %v4547, %v4549
        %v4567 = vadd.f32 %v4443, %v4513
        %v4568 = vadd.f32 %v4444, %v4515
        %v4569 = vadd.f32 %v4445, %v4518
        %v4570 = vadd.f32 %v4446, %v4520
        %v4571 = vadd.f32 %v4447, %v4523
        %v4572 = vadd.f32 %v4448, %v4525
        %v4573 = vadd.f32 %v4449, %v4528
        %v4574 = vadd.f32 %v4450, %v4530
        %v4575 = vadd.f32 %v4451, %v4533
        %v4576 = vadd.f32 %v4452, %v4535
        %v4577 = vadd.f32 %v4453, %v4538
        %v4578 = vadd.f32 %v4454, %v4540
        %v4579 = vadd.f32 %v4455, %v4543
        %v4580 = vadd.f32 %v4456, %v4545
        %v4581 = vadd.f32 %v4457, %v4548
        %v4582 = vadd.f32 %v4458, %v4550
        %v4583 = vlaneseq
        %v4584 = vshrl.u32 %v4583, 7
        %v4585 = vsub.s32 5, %v4584
        %v4586 = vrot.slane %v352, %v4585
        %v4587 = vmul.f32 %v4399, %v4586
        %v4588 = vmul.f32 %v4400, %v4586
        %v4589 = vmul.f32 %v4401, %v4586
        %v4590 = vmul.f32 %v4402, %v4586
        %v4591 = vmul.f32 %v4403, %v4586
        %v4592 = vmul.f32 %v4404, %v4586
        %v4593 = vmul.f32 %v4405, %v4586
        %v4594 = vmul.f32 %v4406, %v4586
        %v4595 = vmul.f32 %v4407, %v4586
        %v4596 = vmul.f32 %v4408, %v4586
        %v4597 = vmul.f32 %v4409, %v4586
        %v4598 = vmul.f32 %v4410, %v4586
        %v4599 = vmul.f32 %v4411, %v4586
        %v4600 = vmul.f32 %v4412, %v4586
        %v4601 = vmul.f32 %v4413, %v4586
        %v4602 = vmul.f32 %v4414, %v4586
        %v4603 = vmul.f32 %v4415, %v4586
        %v4604 = vmul.f32 %v4416, %v4586
        %v4605 = vmul.f32 %v4417, %v4586
        %v4606 = vmul.f32 %v4418, %v4586
        %v4607 = vmul.f32 %v4419, %v4586
        %v4608 = vmul.f32 %v4420, %v4586
        %v4609 = vmul.f32 %v4421, %v4586
        %v4610 = vmul.f32 %v4422, %v4586
        %v4635 = vrot.slane %v4587, 2
        %v4636 = vrot.slane %v4588, 2
        %v4637 = vsel %vm595, %v4635, %v4636
        %v4638 = vrot.slane %v4589, 2
        %v4639 = vsel %vm595, %v4636, %v4638
        %v4640 = vrot.slane %v4590, 2
        %v4641 = vrot.slane %v4591, 2
        %v4642 = vsel %vm595, %v4640, %v4641
        %v4643 = vrot.slane %v4592, 2
        %v4644 = vsel %vm595, %v4641, %v4643
        %v4645 = vrot.slane %v4593, 2
        %v4646 = vrot.slane %v4594, 2
        %v4647 = vsel %vm595, %v4645, %v4646
        %v4648 = vrot.slane %v4595, 2
        %v4649 = vsel %vm595, %v4646, %v4648
        %v4650 = vrot.slane %v4596, 2
        %v4651 = vrot.slane %v4597, 2
        %v4652 = vsel %vm595, %v4650, %v4651
        %v4653 = vrot.slane %v4598, 2
        %v4654 = vsel %vm595, %v4651, %v4653
        %v4655 = vrot.slane %v4599, 2
        %v4656 = vrot.slane %v4600, 2
        %v4657 = vsel %vm595, %v4655, %v4656
        %v4658 = vrot.slane %v4601, 2
        %v4659 = vsel %vm595, %v4656, %v4658
        %v4660 = vrot.slane %v4602, 2
        %v4661 = vrot.slane %v4603, 2
        %v4662 = vsel %vm595, %v4660, %v4661
        %v4663 = vrot.slane %v4604, 2
        %v4664 = vsel %vm595, %v4661, %v4663
        %v4665 = vrot.slane %v4605, 2
        %v4666 = vrot.slane %v4606, 2
        %v4667 = vsel %vm595, %v4665, %v4666
        %v4668 = vrot.slane %v4607, 2
        %v4669 = vsel %vm595, %v4666, %v4668
        %v4670 = vrot.slane %v4608, 2
        %v4671 = vrot.slane %v4609, 2
        %v4672 = vsel %vm595, %v4670, %v4671
        %v4673 = vrot.slane %v4610, 2
        %v4674 = vsel %vm595, %v4671, %v4673
        %v4691 = vadd.f32 %v4567, %v4637
        %v4692 = vadd.f32 %v4568, %v4639
        %v4693 = vadd.f32 %v4569, %v4642
        %v4694 = vadd.f32 %v4570, %v4644
        %v4695 = vadd.f32 %v4571, %v4647
        %v4696 = vadd.f32 %v4572, %v4649
        %v4697 = vadd.f32 %v4573, %v4652
        %v4698 = vadd.f32 %v4574, %v4654
        %v4699 = vadd.f32 %v4575, %v4657
        %v4700 = vadd.f32 %v4576, %v4659
        %v4701 = vadd.f32 %v4577, %v4662
        %v4702 = vadd.f32 %v4578, %v4664
        %v4703 = vadd.f32 %v4579, %v4667
        %v4704 = vadd.f32 %v4580, %v4669
        %v4705 = vadd.f32 %v4581, %v4672
        %v4706 = vadd.f32 %v4582, %v4674
        %v4707 = vlaneseq
        %v4708 = vshrl.u32 %v4707, 7
        %v4709 = vsub.s32 6, %v4708
        %v4710 = vrot.slane %v352, %v4709
        %v4711 = vmul.f32 %v4399, %v4710
        %v4712 = vmul.f32 %v4400, %v4710
        %v4713 = vmul.f32 %v4401, %v4710
        %v4714 = vmul.f32 %v4402, %v4710
        %v4715 = vmul.f32 %v4403, %v4710
        %v4716 = vmul.f32 %v4404, %v4710
        %v4717 = vmul.f32 %v4405, %v4710
        %v4718 = vmul.f32 %v4406, %v4710
        %v4719 = vmul.f32 %v4407, %v4710
        %v4720 = vmul.f32 %v4408, %v4710
        %v4721 = vmul.f32 %v4409, %v4710
        %v4722 = vmul.f32 %v4410, %v4710
        %v4723 = vmul.f32 %v4411, %v4710
        %v4724 = vmul.f32 %v4412, %v4710
        %v4725 = vmul.f32 %v4413, %v4710
        %v4726 = vmul.f32 %v4414, %v4710
        %v4727 = vmul.f32 %v4415, %v4710
        %v4728 = vmul.f32 %v4416, %v4710
        %v4729 = vmul.f32 %v4417, %v4710
        %v4730 = vmul.f32 %v4418, %v4710
        %v4731 = vmul.f32 %v4419, %v4710
        %v4732 = vmul.f32 %v4420, %v4710
        %v4733 = vmul.f32 %v4421, %v4710
        %v4734 = vmul.f32 %v4422, %v4710
        %v4759 = vrot.slane %v4711, 3
        %v4760 = vrot.slane %v4712, 3
        %v4761 = vsel %vm720, %v4759, %v4760
        %v4762 = vrot.slane %v4713, 3
        %v4763 = vsel %vm720, %v4760, %v4762
        %v4764 = vrot.slane %v4714, 3
        %v4765 = vrot.slane %v4715, 3
        %v4766 = vsel %vm720, %v4764, %v4765
        %v4767 = vrot.slane %v4716, 3
        %v4768 = vsel %vm720, %v4765, %v4767
        %v4769 = vrot.slane %v4717, 3
        %v4770 = vrot.slane %v4718, 3
        %v4771 = vsel %vm720, %v4769, %v4770
        %v4772 = vrot.slane %v4719, 3
        %v4773 = vsel %vm720, %v4770, %v4772
        %v4774 = vrot.slane %v4720, 3
        %v4775 = vrot.slane %v4721, 3
        %v4776 = vsel %vm720, %v4774, %v4775
        %v4777 = vrot.slane %v4722, 3
        %v4778 = vsel %vm720, %v4775, %v4777
        %v4779 = vrot.slane %v4723, 3
        %v4780 = vrot.slane %v4724, 3
        %v4781 = vsel %vm720, %v4779, %v4780
        %v4782 = vrot.slane %v4725, 3
        %v4783 = vsel %vm720, %v4780, %v4782
        %v4784 = vrot.slane %v4726, 3
        %v4785 = vrot.slane %v4727, 3
        %v4786 = vsel %vm720, %v4784, %v4785
        %v4787 = vrot.slane %v4728, 3
        %v4788 = vsel %vm720, %v4785, %v4787
        %v4789 = vrot.slane %v4729, 3
        %v4790 = vrot.slane %v4730, 3
        %v4791 = vsel %vm720, %v4789, %v4790
        %v4792 = vrot.slane %v4731, 3
        %v4793 = vsel %vm720, %v4790, %v4792
        %v4794 = vrot.slane %v4732, 3
        %v4795 = vrot.slane %v4733, 3
        %v4796 = vsel %vm720, %v4794, %v4795
        %v4797 = vrot.slane %v4734, 3
        %v4798 = vsel %vm720, %v4795, %v4797
        %v4815 = vadd.f32 %v4691, %v4761
        %v4816 = vadd.f32 %v4692, %v4763
        %v4817 = vadd.f32 %v4693, %v4766
        %v4818 = vadd.f32 %v4694, %v4768
        %v4819 = vadd.f32 %v4695, %v4771
        %v4820 = vadd.f32 %v4696, %v4773
        %v4821 = vadd.f32 %v4697, %v4776
        %v4822 = vadd.f32 %v4698, %v4778
        %v4823 = vadd.f32 %v4699, %v4781
        %v4824 = vadd.f32 %v4700, %v4783
        %v4825 = vadd.f32 %v4701, %v4786
        %v4826 = vadd.f32 %v4702, %v4788
        %v4827 = vadd.f32 %v4703, %v4791
        %v4828 = vadd.f32 %v4704, %v4793
        %v4829 = vadd.f32 %v4705, %v4796
        %v4830 = vadd.f32 %v4706, %v4798
        %v4831 = vlaneseq
        %v4832 = vshrl.u32 %v4831, 7
        %v4833 = vsub.s32 7, %v4832
        %v4834 = vrot.slane %v352, %v4833
        %v4835 = vmul.f32 %v4399, %v4834
        %v4836 = vmul.f32 %v4400, %v4834
        %v4837 = vmul.f32 %v4401, %v4834
        %v4838 = vmul.f32 %v4402, %v4834
        %v4839 = vmul.f32 %v4403, %v4834
        %v4840 = vmul.f32 %v4404, %v4834
        %v4841 = vmul.f32 %v4405, %v4834
        %v4842 = vmul.f32 %v4406, %v4834
        %v4843 = vmul.f32 %v4407, %v4834
        %v4844 = vmul.f32 %v4408, %v4834
        %v4845 = vmul.f32 %v4409, %v4834
        %v4846 = vmul.f32 %v4410, %v4834
        %v4847 = vmul.f32 %v4411, %v4834
        %v4848 = vmul.f32 %v4412, %v4834
        %v4849 = vmul.f32 %v4413, %v4834
        %v4850 = vmul.f32 %v4414, %v4834
        %v4851 = vmul.f32 %v4415, %v4834
        %v4852 = vmul.f32 %v4416, %v4834
        %v4853 = vmul.f32 %v4417, %v4834
        %v4854 = vmul.f32 %v4418, %v4834
        %v4855 = vmul.f32 %v4419, %v4834
        %v4856 = vmul.f32 %v4420, %v4834
        %v4857 = vmul.f32 %v4421, %v4834
        %v4858 = vmul.f32 %v4422, %v4834
        %v4883 = vrot.slane %v4835, 4
        %v4884 = vrot.slane %v4836, 4
        %v4885 = vsel %vm845, %v4883, %v4884
        %v4886 = vrot.slane %v4837, 4
        %v4887 = vsel %vm845, %v4884, %v4886
        %v4888 = vrot.slane %v4838, 4
        %v4889 = vrot.slane %v4839, 4
        %v4890 = vsel %vm845, %v4888, %v4889
        %v4891 = vrot.slane %v4840, 4
        %v4892 = vsel %vm845, %v4889, %v4891
        %v4893 = vrot.slane %v4841, 4
        %v4894 = vrot.slane %v4842, 4
        %v4895 = vsel %vm845, %v4893, %v4894
        %v4896 = vrot.slane %v4843, 4
        %v4897 = vsel %vm845, %v4894, %v4896
        %v4898 = vrot.slane %v4844, 4
        %v4899 = vrot.slane %v4845, 4
        %v4900 = vsel %vm845, %v4898, %v4899
        %v4901 = vrot.slane %v4846, 4
        %v4902 = vsel %vm845, %v4899, %v4901
        %v4903 = vrot.slane %v4847, 4
        %v4904 = vrot.slane %v4848, 4
        %v4905 = vsel %vm845, %v4903, %v4904
        %v4906 = vrot.slane %v4849, 4
        %v4907 = vsel %vm845, %v4904, %v4906
        %v4908 = vrot.slane %v4850, 4
        %v4909 = vrot.slane %v4851, 4
        %v4910 = vsel %vm845, %v4908, %v4909
        %v4911 = vrot.slane %v4852, 4
        %v4912 = vsel %vm845, %v4909, %v4911
        %v4913 = vrot.slane %v4853, 4
        %v4914 = vrot.slane %v4854, 4
        %v4915 = vsel %vm845, %v4913, %v4914
        %v4916 = vrot.slane %v4855, 4
        %v4917 = vsel %vm845, %v4914, %v4916
        %v4918 = vrot.slane %v4856, 4
        %v4919 = vrot.slane %v4857, 4
        %v4920 = vsel %vm845, %v4918, %v4919
        %v4921 = vrot.slane %v4858, 4
        %v4922 = vsel %vm845, %v4919, %v4921
        %v4939 = vadd.f32 %v4815, %v4885
        %v4940 = vadd.f32 %v4816, %v4887
        %v4941 = vadd.f32 %v4817, %v4890
        %v4942 = vadd.f32 %v4818, %v4892
        %v4943 = vadd.f32 %v4819, %v4895
        %v4944 = vadd.f32 %v4820, %v4897
        %v4945 = vadd.f32 %v4821, %v4900
        %v4946 = vadd.f32 %v4822, %v4902
        %v4947 = vadd.f32 %v4823, %v4905
        %v4948 = vadd.f32 %v4824, %v4907
        %v4949 = vadd.f32 %v4825, %v4910
        %v4950 = vadd.f32 %v4826, %v4912
        %v4951 = vadd.f32 %v4827, %v4915
        %v4952 = vadd.f32 %v4828, %v4917
        %v4953 = vadd.f32 %v4829, %v4920
        %v4954 = vadd.f32 %v4830, %v4922
        %v4955 = vlaneseq
        %v4956 = vshrl.u32 %v4955, 7
        %v4957 = vsub.s32 0, %v4956
        %v4958 = vrot.slane %v353, %v4957
        %v4959 = vmul.f32 %v4399, %v4958
        %v4960 = vmul.f32 %v4400, %v4958
        %v4961 = vmul.f32 %v4401, %v4958
        %v4962 = vmul.f32 %v4402, %v4958
        %v4963 = vmul.f32 %v4403, %v4958
        %v4964 = vmul.f32 %v4404, %v4958
        %v4965 = vmul.f32 %v4405, %v4958
        %v4966 = vmul.f32 %v4406, %v4958
        %v4967 = vmul.f32 %v4407, %v4958
        %v4968 = vmul.f32 %v4408, %v4958
        %v4969 = vmul.f32 %v4409, %v4958
        %v4970 = vmul.f32 %v4410, %v4958
        %v4971 = vmul.f32 %v4411, %v4958
        %v4972 = vmul.f32 %v4412, %v4958
        %v4973 = vmul.f32 %v4413, %v4958
        %v4974 = vmul.f32 %v4414, %v4958
        %v4975 = vmul.f32 %v4415, %v4958
        %v4976 = vmul.f32 %v4416, %v4958
        %v4977 = vmul.f32 %v4417, %v4958
        %v4978 = vmul.f32 %v4418, %v4958
        %v4979 = vmul.f32 %v4419, %v4958
        %v4980 = vmul.f32 %v4420, %v4958
        %v4981 = vmul.f32 %v4421, %v4958
        %v4982 = vmul.f32 %v4422, %v4958
        %v5007 = vrot.slane %v4959, 5
        %v5008 = vrot.slane %v4960, 5
        %v5009 = vsel %vm970, %v5007, %v5008
        %v5010 = vrot.slane %v4961, 5
        %v5011 = vsel %vm970, %v5008, %v5010
        %v5012 = vrot.slane %v4962, 5
        %v5013 = vrot.slane %v4963, 5
        %v5014 = vsel %vm970, %v5012, %v5013
        %v5015 = vrot.slane %v4964, 5
        %v5016 = vsel %vm970, %v5013, %v5015
        %v5017 = vrot.slane %v4965, 5
        %v5018 = vrot.slane %v4966, 5
        %v5019 = vsel %vm970, %v5017, %v5018
        %v5020 = vrot.slane %v4967, 5
        %v5021 = vsel %vm970, %v5018, %v5020
        %v5022 = vrot.slane %v4968, 5
        %v5023 = vrot.slane %v4969, 5
        %v5024 = vsel %vm970, %v5022, %v5023
        %v5025 = vrot.slane %v4970, 5
        %v5026 = vsel %vm970, %v5023, %v5025
        %v5027 = vrot.slane %v4971, 5
        %v5028 = vrot.slane %v4972, 5
        %v5029 = vsel %vm970, %v5027, %v5028
        %v5030 = vrot.slane %v4973, 5
        %v5031 = vsel %vm970, %v5028, %v5030
        %v5032 = vrot.slane %v4974, 5
        %v5033 = vrot.slane %v4975, 5
        %v5034 = vsel %vm970, %v5032, %v5033
        %v5035 = vrot.slane %v4976, 5
        %v5036 = vsel %vm970, %v5033, %v5035
        %v5037 = vrot.slane %v4977, 5
        %v5038 = vrot.slane %v4978, 5
        %v5039 = vsel %vm970, %v5037, %v5038
        %v5040 = vrot.slane %v4979, 5
        %v5041 = vsel %vm970, %v5038, %v5040
        %v5042 = vrot.slane %v4980, 5
        %v5043 = vrot.slane %v4981, 5
        %v5044 = vsel %vm970, %v5042, %v5043
        %v5045 = vrot.slane %v4982, 5
        %v5046 = vsel %vm970, %v5043, %v5045
        %v5063 = vadd.f32 %v4939, %v5009
        %v5064 = vadd.f32 %v4940, %v5011
        %v5065 = vadd.f32 %v4941, %v5014
        %v5066 = vadd.f32 %v4942, %v5016
        %v5067 = vadd.f32 %v4943, %v5019
        %v5068 = vadd.f32 %v4944, %v5021
        %v5069 = vadd.f32 %v4945, %v5024
        %v5070 = vadd.f32 %v4946, %v5026
        %v5071 = vadd.f32 %v4947, %v5029
        %v5072 = vadd.f32 %v4948, %v5031
        %v5073 = vadd.f32 %v4949, %v5034
        %v5074 = vadd.f32 %v4950, %v5036
        %v5075 = vadd.f32 %v4951, %v5039
        %v5076 = vadd.f32 %v4952, %v5041
        %v5077 = vadd.f32 %v4953, %v5044
        %v5078 = vadd.f32 %v4954, %v5046
        %v5079 = vlaneseq
        %v5080 = vshrl.u32 %v5079, 7
        %v5081 = vsub.s32 1, %v5080
        %v5082 = vrot.slane %v353, %v5081
        %v5083 = vmul.f32 %v4399, %v5082
        %v5084 = vmul.f32 %v4400, %v5082
        %v5085 = vmul.f32 %v4401, %v5082
        %v5086 = vmul.f32 %v4402, %v5082
        %v5087 = vmul.f32 %v4403, %v5082
        %v5088 = vmul.f32 %v4404, %v5082
        %v5089 = vmul.f32 %v4405, %v5082
        %v5090 = vmul.f32 %v4406, %v5082
        %v5091 = vmul.f32 %v4407, %v5082
        %v5092 = vmul.f32 %v4408, %v5082
        %v5093 = vmul.f32 %v4409, %v5082
        %v5094 = vmul.f32 %v4410, %v5082
        %v5095 = vmul.f32 %v4411, %v5082
        %v5096 = vmul.f32 %v4412, %v5082
        %v5097 = vmul.f32 %v4413, %v5082
        %v5098 = vmul.f32 %v4414, %v5082
        %v5099 = vmul.f32 %v4415, %v5082
        %v5100 = vmul.f32 %v4416, %v5082
        %v5101 = vmul.f32 %v4417, %v5082
        %v5102 = vmul.f32 %v4418, %v5082
        %v5103 = vmul.f32 %v4419, %v5082
        %v5104 = vmul.f32 %v4420, %v5082
        %v5105 = vmul.f32 %v4421, %v5082
        %v5106 = vmul.f32 %v4422, %v5082
        %v5131 = vrot.slane %v5083, 6
        %v5132 = vrot.slane %v5084, 6
        %v5133 = vsel %vm1095, %v5131, %v5132
        %v5134 = vrot.slane %v5085, 6
        %v5135 = vsel %vm1095, %v5132, %v5134
        %v5136 = vrot.slane %v5086, 6
        %v5137 = vrot.slane %v5087, 6
        %v5138 = vsel %vm1095, %v5136, %v5137
        %v5139 = vrot.slane %v5088, 6
        %v5140 = vsel %vm1095, %v5137, %v5139
        %v5141 = vrot.slane %v5089, 6
        %v5142 = vrot.slane %v5090, 6
        %v5143 = vsel %vm1095, %v5141, %v5142
        %v5144 = vrot.slane %v5091, 6
        %v5145 = vsel %vm1095, %v5142, %v5144
        %v5146 = vrot.slane %v5092, 6
        %v5147 = vrot.slane %v5093, 6
        %v5148 = vsel %vm1095, %v5146, %v5147
        %v5149 = vrot.slane %v5094, 6
        %v5150 = vsel %vm1095, %v5147, %v5149
        %v5151 = vrot.slane %v5095, 6
        %v5152 = vrot.slane %v5096, 6
        %v5153 = vsel %vm1095, %v5151, %v5152
        %v5154 = vrot.slane %v5097, 6
        %v5155 = vsel %vm1095, %v5152, %v5154
        %v5156 = vrot.slane %v5098, 6
        %v5157 = vrot.slane %v5099, 6
        %v5158 = vsel %vm1095, %v5156, %v5157
        %v5159 = vrot.slane %v5100, 6
        %v5160 = vsel %vm1095, %v5157, %v5159
        %v5161 = vrot.slane %v5101, 6
        %v5162 = vrot.slane %v5102, 6
        %v5163 = vsel %vm1095, %v5161, %v5162
        %v5164 = vrot.slane %v5103, 6
        %v5165 = vsel %vm1095, %v5162, %v5164
        %v5166 = vrot.slane %v5104, 6
        %v5167 = vrot.slane %v5105, 6
        %v5168 = vsel %vm1095, %v5166, %v5167
        %v5169 = vrot.slane %v5106, 6
        %v5170 = vsel %vm1095, %v5167, %v5169
        %v5187 = vadd.f32 %v5063, %v5133
        %v5188 = vadd.f32 %v5064, %v5135
        %v5189 = vadd.f32 %v5065, %v5138
        %v5190 = vadd.f32 %v5066, %v5140
        %v5191 = vadd.f32 %v5067, %v5143
        %v5192 = vadd.f32 %v5068, %v5145
        %v5193 = vadd.f32 %v5069, %v5148
        %v5194 = vadd.f32 %v5070, %v5150
        %v5195 = vadd.f32 %v5071, %v5153
        %v5196 = vadd.f32 %v5072, %v5155
        %v5197 = vadd.f32 %v5073, %v5158
        %v5198 = vadd.f32 %v5074, %v5160
        %v5199 = vadd.f32 %v5075, %v5163
        %v5200 = vadd.f32 %v5076, %v5165
        %v5201 = vadd.f32 %v5077, %v5168
        %v5202 = vadd.f32 %v5078, %v5170
        %s5203 = sadd.s32 %s347, 6
        %s5204 = smul.u32 %s5203, 24
        %s5205 = scalar_lea.vmem %s344, %s5204
        %v5206 = vld [vmem:[%s5205] sm:$0xff]
        %v5207 = vld [vmem:[%s5205 + $0x8] sm:$0xff]
        %v5208 = vld [vmem:[%s5205 + $0x10] sm:$0x3f]
        %v5209 = vld [vmem:[%s5205 + $0x18] sm:$0xff]
        %v5210 = vld [vmem:[%s5205 + $0x20] sm:$0xff]
        %v5211 = vld [vmem:[%s5205 + $0x28] sm:$0x3f]
        %v5212 = vld [vmem:[%s5205 + $0x30] sm:$0xff]
        %v5213 = vld [vmem:[%s5205 + $0x38] sm:$0xff]
        %v5214 = vld [vmem:[%s5205 + $0x40] sm:$0x3f]
        %v5215 = vld [vmem:[%s5205 + $0x48] sm:$0xff]
        %v5216 = vld [vmem:[%s5205 + $0x50] sm:$0xff]
        %v5217 = vld [vmem:[%s5205 + $0x58] sm:$0x3f]
        %v5218 = vld [vmem:[%s5205 + $0x60] sm:$0xff]
        %v5219 = vld [vmem:[%s5205 + $0x68] sm:$0xff]
        %v5220 = vld [vmem:[%s5205 + $0x70] sm:$0x3f]
        %v5221 = vld [vmem:[%s5205 + $0x78] sm:$0xff]
        %v5222 = vld [vmem:[%s5205 + $0x80] sm:$0xff]
        %v5223 = vld [vmem:[%s5205 + $0x88] sm:$0x3f]
        %v5224 = vld [vmem:[%s5205 + $0x90] sm:$0xff]
        %v5225 = vld [vmem:[%s5205 + $0x98] sm:$0xff]
        %v5226 = vld [vmem:[%s5205 + $0xa0] sm:$0x3f]
        %v5227 = vld [vmem:[%s5205 + $0xa8] sm:$0xff]
        %v5228 = vld [vmem:[%s5205 + $0xb0] sm:$0xff]
        %v5229 = vld [vmem:[%s5205 + $0xb8] sm:$0x3f]
        %v5230 = vlaneseq
        %v5231 = vshrl.u32 %v5230, 7
        %v5232 = vsub.s32 2, %v5231
        %v5233 = vrot.slane %v353, %v5232
        %v5234 = vmul.f32 %v5206, %v5233
        %v5235 = vmul.f32 %v5207, %v5233
        %v5236 = vmul.f32 %v5209, %v5233
        %v5237 = vmul.f32 %v5210, %v5233
        %v5238 = vmul.f32 %v5212, %v5233
        %v5239 = vmul.f32 %v5213, %v5233
        %v5240 = vmul.f32 %v5215, %v5233
        %v5241 = vmul.f32 %v5216, %v5233
        %v5242 = vmul.f32 %v5218, %v5233
        %v5243 = vmul.f32 %v5219, %v5233
        %v5244 = vmul.f32 %v5221, %v5233
        %v5245 = vmul.f32 %v5222, %v5233
        %v5246 = vmul.f32 %v5224, %v5233
        %v5247 = vmul.f32 %v5225, %v5233
        %v5248 = vmul.f32 %v5227, %v5233
        %v5249 = vmul.f32 %v5228, %v5233
        %v5250 = vadd.f32 %v5187, %v5234
        %v5251 = vadd.f32 %v5188, %v5235
        %v5252 = vadd.f32 %v5189, %v5236
        %v5253 = vadd.f32 %v5190, %v5237
        %v5254 = vadd.f32 %v5191, %v5238
        %v5255 = vadd.f32 %v5192, %v5239
        %v5256 = vadd.f32 %v5193, %v5240
        %v5257 = vadd.f32 %v5194, %v5241
        %v5258 = vadd.f32 %v5195, %v5242
        %v5259 = vadd.f32 %v5196, %v5243
        %v5260 = vadd.f32 %v5197, %v5244
        %v5261 = vadd.f32 %v5198, %v5245
        %v5262 = vadd.f32 %v5199, %v5246
        %v5263 = vadd.f32 %v5200, %v5247
        %v5264 = vadd.f32 %v5201, %v5248
        %v5265 = vadd.f32 %v5202, %v5249
        %v5266 = vlaneseq
        %v5267 = vshrl.u32 %v5266, 7
        %v5268 = vsub.s32 3, %v5267
        %v5269 = vrot.slane %v353, %v5268
        %v5270 = vmul.f32 %v5206, %v5269
        %v5271 = vmul.f32 %v5207, %v5269
        %v5272 = vmul.f32 %v5208, %v5269
        %v5273 = vmul.f32 %v5209, %v5269
        %v5274 = vmul.f32 %v5210, %v5269
        %v5275 = vmul.f32 %v5211, %v5269
        %v5276 = vmul.f32 %v5212, %v5269
        %v5277 = vmul.f32 %v5213, %v5269
        %v5278 = vmul.f32 %v5214, %v5269
        %v5279 = vmul.f32 %v5215, %v5269
        %v5280 = vmul.f32 %v5216, %v5269
        %v5281 = vmul.f32 %v5217, %v5269
        %v5282 = vmul.f32 %v5218, %v5269
        %v5283 = vmul.f32 %v5219, %v5269
        %v5284 = vmul.f32 %v5220, %v5269
        %v5285 = vmul.f32 %v5221, %v5269
        %v5286 = vmul.f32 %v5222, %v5269
        %v5287 = vmul.f32 %v5223, %v5269
        %v5288 = vmul.f32 %v5224, %v5269
        %v5289 = vmul.f32 %v5225, %v5269
        %v5290 = vmul.f32 %v5226, %v5269
        %v5291 = vmul.f32 %v5227, %v5269
        %v5292 = vmul.f32 %v5228, %v5269
        %v5293 = vmul.f32 %v5229, %v5269
        %v5318 = vrot.slane %v5270, 1
        %v5319 = vrot.slane %v5271, 1
        %v5320 = vsel %vm470, %v5318, %v5319
        %v5321 = vrot.slane %v5272, 1
        %v5322 = vsel %vm470, %v5319, %v5321
        %v5323 = vrot.slane %v5273, 1
        %v5324 = vrot.slane %v5274, 1
        %v5325 = vsel %vm470, %v5323, %v5324
        %v5326 = vrot.slane %v5275, 1
        %v5327 = vsel %vm470, %v5324, %v5326
        %v5328 = vrot.slane %v5276, 1
        %v5329 = vrot.slane %v5277, 1
        %v5330 = vsel %vm470, %v5328, %v5329
        %v5331 = vrot.slane %v5278, 1
        %v5332 = vsel %vm470, %v5329, %v5331
        %v5333 = vrot.slane %v5279, 1
        %v5334 = vrot.slane %v5280, 1
        %v5335 = vsel %vm470, %v5333, %v5334
        %v5336 = vrot.slane %v5281, 1
        %v5337 = vsel %vm470, %v5334, %v5336
        %v5338 = vrot.slane %v5282, 1
        %v5339 = vrot.slane %v5283, 1
        %v5340 = vsel %vm470, %v5338, %v5339
        %v5341 = vrot.slane %v5284, 1
        %v5342 = vsel %vm470, %v5339, %v5341
        %v5343 = vrot.slane %v5285, 1
        %v5344 = vrot.slane %v5286, 1
        %v5345 = vsel %vm470, %v5343, %v5344
        %v5346 = vrot.slane %v5287, 1
        %v5347 = vsel %vm470, %v5344, %v5346
        %v5348 = vrot.slane %v5288, 1
        %v5349 = vrot.slane %v5289, 1
        %v5350 = vsel %vm470, %v5348, %v5349
        %v5351 = vrot.slane %v5290, 1
        %v5352 = vsel %vm470, %v5349, %v5351
        %v5353 = vrot.slane %v5291, 1
        %v5354 = vrot.slane %v5292, 1
        %v5355 = vsel %vm470, %v5353, %v5354
        %v5356 = vrot.slane %v5293, 1
        %v5357 = vsel %vm470, %v5354, %v5356
        %v5374 = vadd.f32 %v5250, %v5320
        %v5375 = vadd.f32 %v5251, %v5322
        %v5376 = vadd.f32 %v5252, %v5325
        %v5377 = vadd.f32 %v5253, %v5327
        %v5378 = vadd.f32 %v5254, %v5330
        %v5379 = vadd.f32 %v5255, %v5332
        %v5380 = vadd.f32 %v5256, %v5335
        %v5381 = vadd.f32 %v5257, %v5337
        %v5382 = vadd.f32 %v5258, %v5340
        %v5383 = vadd.f32 %v5259, %v5342
        %v5384 = vadd.f32 %v5260, %v5345
        %v5385 = vadd.f32 %v5261, %v5347
        %v5386 = vadd.f32 %v5262, %v5350
        %v5387 = vadd.f32 %v5263, %v5352
        %v5388 = vadd.f32 %v5264, %v5355
        %v5389 = vadd.f32 %v5265, %v5357
        %v5390 = vlaneseq
        %v5391 = vshrl.u32 %v5390, 7
        %v5392 = vsub.s32 4, %v5391
        %v5393 = vrot.slane %v353, %v5392
        %v5394 = vmul.f32 %v5206, %v5393
        %v5395 = vmul.f32 %v5207, %v5393
        %v5396 = vmul.f32 %v5208, %v5393
        %v5397 = vmul.f32 %v5209, %v5393
        %v5398 = vmul.f32 %v5210, %v5393
        %v5399 = vmul.f32 %v5211, %v5393
        %v5400 = vmul.f32 %v5212, %v5393
        %v5401 = vmul.f32 %v5213, %v5393
        %v5402 = vmul.f32 %v5214, %v5393
        %v5403 = vmul.f32 %v5215, %v5393
        %v5404 = vmul.f32 %v5216, %v5393
        %v5405 = vmul.f32 %v5217, %v5393
        %v5406 = vmul.f32 %v5218, %v5393
        %v5407 = vmul.f32 %v5219, %v5393
        %v5408 = vmul.f32 %v5220, %v5393
        %v5409 = vmul.f32 %v5221, %v5393
        %v5410 = vmul.f32 %v5222, %v5393
        %v5411 = vmul.f32 %v5223, %v5393
        %v5412 = vmul.f32 %v5224, %v5393
        %v5413 = vmul.f32 %v5225, %v5393
        %v5414 = vmul.f32 %v5226, %v5393
        %v5415 = vmul.f32 %v5227, %v5393
        %v5416 = vmul.f32 %v5228, %v5393
        %v5417 = vmul.f32 %v5229, %v5393
        %v5442 = vrot.slane %v5394, 2
        %v5443 = vrot.slane %v5395, 2
        %v5444 = vsel %vm595, %v5442, %v5443
        %v5445 = vrot.slane %v5396, 2
        %v5446 = vsel %vm595, %v5443, %v5445
        %v5447 = vrot.slane %v5397, 2
        %v5448 = vrot.slane %v5398, 2
        %v5449 = vsel %vm595, %v5447, %v5448
        %v5450 = vrot.slane %v5399, 2
        %v5451 = vsel %vm595, %v5448, %v5450
        %v5452 = vrot.slane %v5400, 2
        %v5453 = vrot.slane %v5401, 2
        %v5454 = vsel %vm595, %v5452, %v5453
        %v5455 = vrot.slane %v5402, 2
        %v5456 = vsel %vm595, %v5453, %v5455
        %v5457 = vrot.slane %v5403, 2
        %v5458 = vrot.slane %v5404, 2
        %v5459 = vsel %vm595, %v5457, %v5458
        %v5460 = vrot.slane %v5405, 2
        %v5461 = vsel %vm595, %v5458, %v5460
        %v5462 = vrot.slane %v5406, 2
        %v5463 = vrot.slane %v5407, 2
        %v5464 = vsel %vm595, %v5462, %v5463
        %v5465 = vrot.slane %v5408, 2
        %v5466 = vsel %vm595, %v5463, %v5465
        %v5467 = vrot.slane %v5409, 2
        %v5468 = vrot.slane %v5410, 2
        %v5469 = vsel %vm595, %v5467, %v5468
        %v5470 = vrot.slane %v5411, 2
        %v5471 = vsel %vm595, %v5468, %v5470
        %v5472 = vrot.slane %v5412, 2
        %v5473 = vrot.slane %v5413, 2
        %v5474 = vsel %vm595, %v5472, %v5473
        %v5475 = vrot.slane %v5414, 2
        %v5476 = vsel %vm595, %v5473, %v5475
        %v5477 = vrot.slane %v5415, 2
        %v5478 = vrot.slane %v5416, 2
        %v5479 = vsel %vm595, %v5477, %v5478
        %v5480 = vrot.slane %v5417, 2
        %v5481 = vsel %vm595, %v5478, %v5480
        %v5498 = vadd.f32 %v5374, %v5444
        %v5499 = vadd.f32 %v5375, %v5446
        %v5500 = vadd.f32 %v5376, %v5449
        %v5501 = vadd.f32 %v5377, %v5451
        %v5502 = vadd.f32 %v5378, %v5454
        %v5503 = vadd.f32 %v5379, %v5456
        %v5504 = vadd.f32 %v5380, %v5459
        %v5505 = vadd.f32 %v5381, %v5461
        %v5506 = vadd.f32 %v5382, %v5464
        %v5507 = vadd.f32 %v5383, %v5466
        %v5508 = vadd.f32 %v5384, %v5469
        %v5509 = vadd.f32 %v5385, %v5471
        %v5510 = vadd.f32 %v5386, %v5474
        %v5511 = vadd.f32 %v5387, %v5476
        %v5512 = vadd.f32 %v5388, %v5479
        %v5513 = vadd.f32 %v5389, %v5481
        %v5514 = vlaneseq
        %v5515 = vshrl.u32 %v5514, 7
        %v5516 = vsub.s32 5, %v5515
        %v5517 = vrot.slane %v353, %v5516
        %v5518 = vmul.f32 %v5206, %v5517
        %v5519 = vmul.f32 %v5207, %v5517
        %v5520 = vmul.f32 %v5208, %v5517
        %v5521 = vmul.f32 %v5209, %v5517
        %v5522 = vmul.f32 %v5210, %v5517
        %v5523 = vmul.f32 %v5211, %v5517
        %v5524 = vmul.f32 %v5212, %v5517
        %v5525 = vmul.f32 %v5213, %v5517
        %v5526 = vmul.f32 %v5214, %v5517
        %v5527 = vmul.f32 %v5215, %v5517
        %v5528 = vmul.f32 %v5216, %v5517
        %v5529 = vmul.f32 %v5217, %v5517
        %v5530 = vmul.f32 %v5218, %v5517
        %v5531 = vmul.f32 %v5219, %v5517
        %v5532 = vmul.f32 %v5220, %v5517
        %v5533 = vmul.f32 %v5221, %v5517
        %v5534 = vmul.f32 %v5222, %v5517
        %v5535 = vmul.f32 %v5223, %v5517
        %v5536 = vmul.f32 %v5224, %v5517
        %v5537 = vmul.f32 %v5225, %v5517
        %v5538 = vmul.f32 %v5226, %v5517
        %v5539 = vmul.f32 %v5227, %v5517
        %v5540 = vmul.f32 %v5228, %v5517
        %v5541 = vmul.f32 %v5229, %v5517
        %v5566 = vrot.slane %v5518, 3
        %v5567 = vrot.slane %v5519, 3
        %v5568 = vsel %vm720, %v5566, %v5567
        %v5569 = vrot.slane %v5520, 3
        %v5570 = vsel %vm720, %v5567, %v5569
        %v5571 = vrot.slane %v5521, 3
        %v5572 = vrot.slane %v5522, 3
        %v5573 = vsel %vm720, %v5571, %v5572
        %v5574 = vrot.slane %v5523, 3
        %v5575 = vsel %vm720, %v5572, %v5574
        %v5576 = vrot.slane %v5524, 3
        %v5577 = vrot.slane %v5525, 3
        %v5578 = vsel %vm720, %v5576, %v5577
        %v5579 = vrot.slane %v5526, 3
        %v5580 = vsel %vm720, %v5577, %v5579
        %v5581 = vrot.slane %v5527, 3
        %v5582 = vrot.slane %v5528, 3
        %v5583 = vsel %vm720, %v5581, %v5582
        %v5584 = vrot.slane %v5529, 3
        %v5585 = vsel %vm720, %v5582, %v5584
        %v5586 = vrot.slane %v5530, 3
        %v5587 = vrot.slane %v5531, 3
        %v5588 = vsel %vm720, %v5586, %v5587
        %v5589 = vrot.slane %v5532, 3
        %v5590 = vsel %vm720, %v5587, %v5589
        %v5591 = vrot.slane %v5533, 3
        %v5592 = vrot.slane %v5534, 3
        %v5593 = vsel %vm720, %v5591, %v5592
        %v5594 = vrot.slane %v5535, 3
        %v5595 = vsel %vm720, %v5592, %v5594
        %v5596 = vrot.slane %v5536, 3
        %v5597 = vrot.slane %v5537, 3
        %v5598 = vsel %vm720, %v5596, %v5597
        %v5599 = vrot.slane %v5538, 3
        %v5600 = vsel %vm720, %v5597, %v5599
        %v5601 = vrot.slane %v5539, 3
        %v5602 = vrot.slane %v5540, 3
        %v5603 = vsel %vm720, %v5601, %v5602
        %v5604 = vrot.slane %v5541, 3
        %v5605 = vsel %vm720, %v5602, %v5604
        %v5622 = vadd.f32 %v5498, %v5568
        %v5623 = vadd.f32 %v5499, %v5570
        %v5624 = vadd.f32 %v5500, %v5573
        %v5625 = vadd.f32 %v5501, %v5575
        %v5626 = vadd.f32 %v5502, %v5578
        %v5627 = vadd.f32 %v5503, %v5580
        %v5628 = vadd.f32 %v5504, %v5583
        %v5629 = vadd.f32 %v5505, %v5585
        %v5630 = vadd.f32 %v5506, %v5588
        %v5631 = vadd.f32 %v5507, %v5590
        %v5632 = vadd.f32 %v5508, %v5593
        %v5633 = vadd.f32 %v5509, %v5595
        %v5634 = vadd.f32 %v5510, %v5598
        %v5635 = vadd.f32 %v5511, %v5600
        %v5636 = vadd.f32 %v5512, %v5603
        %v5637 = vadd.f32 %v5513, %v5605
        %v5638 = vlaneseq
        %v5639 = vshrl.u32 %v5638, 7
        %v5640 = vsub.s32 6, %v5639
        %v5641 = vrot.slane %v353, %v5640
        %v5642 = vmul.f32 %v5206, %v5641
        %v5643 = vmul.f32 %v5207, %v5641
        %v5644 = vmul.f32 %v5208, %v5641
        %v5645 = vmul.f32 %v5209, %v5641
        %v5646 = vmul.f32 %v5210, %v5641
        %v5647 = vmul.f32 %v5211, %v5641
        %v5648 = vmul.f32 %v5212, %v5641
        %v5649 = vmul.f32 %v5213, %v5641
        %v5650 = vmul.f32 %v5214, %v5641
        %v5651 = vmul.f32 %v5215, %v5641
        %v5652 = vmul.f32 %v5216, %v5641
        %v5653 = vmul.f32 %v5217, %v5641
        %v5654 = vmul.f32 %v5218, %v5641
        %v5655 = vmul.f32 %v5219, %v5641
        %v5656 = vmul.f32 %v5220, %v5641
        %v5657 = vmul.f32 %v5221, %v5641
        %v5658 = vmul.f32 %v5222, %v5641
        %v5659 = vmul.f32 %v5223, %v5641
        %v5660 = vmul.f32 %v5224, %v5641
        %v5661 = vmul.f32 %v5225, %v5641
        %v5662 = vmul.f32 %v5226, %v5641
        %v5663 = vmul.f32 %v5227, %v5641
        %v5664 = vmul.f32 %v5228, %v5641
        %v5665 = vmul.f32 %v5229, %v5641
        %v5690 = vrot.slane %v5642, 4
        %v5691 = vrot.slane %v5643, 4
        %v5692 = vsel %vm845, %v5690, %v5691
        %v5693 = vrot.slane %v5644, 4
        %v5694 = vsel %vm845, %v5691, %v5693
        %v5695 = vrot.slane %v5645, 4
        %v5696 = vrot.slane %v5646, 4
        %v5697 = vsel %vm845, %v5695, %v5696
        %v5698 = vrot.slane %v5647, 4
        %v5699 = vsel %vm845, %v5696, %v5698
        %v5700 = vrot.slane %v5648, 4
        %v5701 = vrot.slane %v5649, 4
        %v5702 = vsel %vm845, %v5700, %v5701
        %v5703 = vrot.slane %v5650, 4
        %v5704 = vsel %vm845, %v5701, %v5703
        %v5705 = vrot.slane %v5651, 4
        %v5706 = vrot.slane %v5652, 4
        %v5707 = vsel %vm845, %v5705, %v5706
        %v5708 = vrot.slane %v5653, 4
        %v5709 = vsel %vm845, %v5706, %v5708
        %v5710 = vrot.slane %v5654, 4
        %v5711 = vrot.slane %v5655, 4
        %v5712 = vsel %vm845, %v5710, %v5711
        %v5713 = vrot.slane %v5656, 4
        %v5714 = vsel %vm845, %v5711, %v5713
        %v5715 = vrot.slane %v5657, 4
        %v5716 = vrot.slane %v5658, 4
        %v5717 = vsel %vm845, %v5715, %v5716
        %v5718 = vrot.slane %v5659, 4
        %v5719 = vsel %vm845, %v5716, %v5718
        %v5720 = vrot.slane %v5660, 4
        %v5721 = vrot.slane %v5661, 4
        %v5722 = vsel %vm845, %v5720, %v5721
        %v5723 = vrot.slane %v5662, 4
        %v5724 = vsel %vm845, %v5721, %v5723
        %v5725 = vrot.slane %v5663, 4
        %v5726 = vrot.slane %v5664, 4
        %v5727 = vsel %vm845, %v5725, %v5726
        %v5728 = vrot.slane %v5665, 4
        %v5729 = vsel %vm845, %v5726, %v5728
        %v5746 = vadd.f32 %v5622, %v5692
        %v5747 = vadd.f32 %v5623, %v5694
        %v5748 = vadd.f32 %v5624, %v5697
        %v5749 = vadd.f32 %v5625, %v5699
        %v5750 = vadd.f32 %v5626, %v5702
        %v5751 = vadd.f32 %v5627, %v5704
        %v5752 = vadd.f32 %v5628, %v5707
        %v5753 = vadd.f32 %v5629, %v5709
        %v5754 = vadd.f32 %v5630, %v5712
        %v5755 = vadd.f32 %v5631, %v5714
        %v5756 = vadd.f32 %v5632, %v5717
        %v5757 = vadd.f32 %v5633, %v5719
        %v5758 = vadd.f32 %v5634, %v5722
        %v5759 = vadd.f32 %v5635, %v5724
        %v5760 = vadd.f32 %v5636, %v5727
        %v5761 = vadd.f32 %v5637, %v5729
        %v5762 = vlaneseq
        %v5763 = vshrl.u32 %v5762, 7
        %v5764 = vsub.s32 7, %v5763
        %v5765 = vrot.slane %v353, %v5764
        %v5766 = vmul.f32 %v5206, %v5765
        %v5767 = vmul.f32 %v5207, %v5765
        %v5768 = vmul.f32 %v5208, %v5765
        %v5769 = vmul.f32 %v5209, %v5765
        %v5770 = vmul.f32 %v5210, %v5765
        %v5771 = vmul.f32 %v5211, %v5765
        %v5772 = vmul.f32 %v5212, %v5765
        %v5773 = vmul.f32 %v5213, %v5765
        %v5774 = vmul.f32 %v5214, %v5765
        %v5775 = vmul.f32 %v5215, %v5765
        %v5776 = vmul.f32 %v5216, %v5765
        %v5777 = vmul.f32 %v5217, %v5765
        %v5778 = vmul.f32 %v5218, %v5765
        %v5779 = vmul.f32 %v5219, %v5765
        %v5780 = vmul.f32 %v5220, %v5765
        %v5781 = vmul.f32 %v5221, %v5765
        %v5782 = vmul.f32 %v5222, %v5765
        %v5783 = vmul.f32 %v5223, %v5765
        %v5784 = vmul.f32 %v5224, %v5765
        %v5785 = vmul.f32 %v5225, %v5765
        %v5786 = vmul.f32 %v5226, %v5765
        %v5787 = vmul.f32 %v5227, %v5765
        %v5788 = vmul.f32 %v5228, %v5765
        %v5789 = vmul.f32 %v5229, %v5765
        %v5814 = vrot.slane %v5766, 5
        %v5815 = vrot.slane %v5767, 5
        %v5816 = vsel %vm970, %v5814, %v5815
        %v5817 = vrot.slane %v5768, 5
        %v5818 = vsel %vm970, %v5815, %v5817
        %v5819 = vrot.slane %v5769, 5
        %v5820 = vrot.slane %v5770, 5
        %v5821 = vsel %vm970, %v5819, %v5820
        %v5822 = vrot.slane %v5771, 5
        %v5823 = vsel %vm970, %v5820, %v5822
        %v5824 = vrot.slane %v5772, 5
        %v5825 = vrot.slane %v5773, 5
        %v5826 = vsel %vm970, %v5824, %v5825
        %v5827 = vrot.slane %v5774, 5
        %v5828 = vsel %vm970, %v5825, %v5827
        %v5829 = vrot.slane %v5775, 5
        %v5830 = vrot.slane %v5776, 5
        %v5831 = vsel %vm970, %v5829, %v5830
        %v5832 = vrot.slane %v5777, 5
        %v5833 = vsel %vm970, %v5830, %v5832
        %v5834 = vrot.slane %v5778, 5
        %v5835 = vrot.slane %v5779, 5
        %v5836 = vsel %vm970, %v5834, %v5835
        %v5837 = vrot.slane %v5780, 5
        %v5838 = vsel %vm970, %v5835, %v5837
        %v5839 = vrot.slane %v5781, 5
        %v5840 = vrot.slane %v5782, 5
        %v5841 = vsel %vm970, %v5839, %v5840
        %v5842 = vrot.slane %v5783, 5
        %v5843 = vsel %vm970, %v5840, %v5842
        %v5844 = vrot.slane %v5784, 5
        %v5845 = vrot.slane %v5785, 5
        %v5846 = vsel %vm970, %v5844, %v5845
        %v5847 = vrot.slane %v5786, 5
        %v5848 = vsel %vm970, %v5845, %v5847
        %v5849 = vrot.slane %v5787, 5
        %v5850 = vrot.slane %v5788, 5
        %v5851 = vsel %vm970, %v5849, %v5850
        %v5852 = vrot.slane %v5789, 5
        %v5853 = vsel %vm970, %v5850, %v5852
        %v5870 = vadd.f32 %v5746, %v5816
        %v5871 = vadd.f32 %v5747, %v5818
        %v5872 = vadd.f32 %v5748, %v5821
        %v5873 = vadd.f32 %v5749, %v5823
        %v5874 = vadd.f32 %v5750, %v5826
        %v5875 = vadd.f32 %v5751, %v5828
        %v5876 = vadd.f32 %v5752, %v5831
        %v5877 = vadd.f32 %v5753, %v5833
        %v5878 = vadd.f32 %v5754, %v5836
        %v5879 = vadd.f32 %v5755, %v5838
        %v5880 = vadd.f32 %v5756, %v5841
        %v5881 = vadd.f32 %v5757, %v5843
        %v5882 = vadd.f32 %v5758, %v5846
        %v5883 = vadd.f32 %v5759, %v5848
        %v5884 = vadd.f32 %v5760, %v5851
        %v5885 = vadd.f32 %v5761, %v5853
        %v5886 = vlaneseq
        %v5887 = vshrl.u32 %v5886, 7
        %v5888 = vsub.s32 0, %v5887
        %v5889 = vrot.slane %v354, %v5888
        %v5890 = vmul.f32 %v5206, %v5889
        %v5891 = vmul.f32 %v5207, %v5889
        %v5892 = vmul.f32 %v5208, %v5889
        %v5893 = vmul.f32 %v5209, %v5889
        %v5894 = vmul.f32 %v5210, %v5889
        %v5895 = vmul.f32 %v5211, %v5889
        %v5896 = vmul.f32 %v5212, %v5889
        %v5897 = vmul.f32 %v5213, %v5889
        %v5898 = vmul.f32 %v5214, %v5889
        %v5899 = vmul.f32 %v5215, %v5889
        %v5900 = vmul.f32 %v5216, %v5889
        %v5901 = vmul.f32 %v5217, %v5889
        %v5902 = vmul.f32 %v5218, %v5889
        %v5903 = vmul.f32 %v5219, %v5889
        %v5904 = vmul.f32 %v5220, %v5889
        %v5905 = vmul.f32 %v5221, %v5889
        %v5906 = vmul.f32 %v5222, %v5889
        %v5907 = vmul.f32 %v5223, %v5889
        %v5908 = vmul.f32 %v5224, %v5889
        %v5909 = vmul.f32 %v5225, %v5889
        %v5910 = vmul.f32 %v5226, %v5889
        %v5911 = vmul.f32 %v5227, %v5889
        %v5912 = vmul.f32 %v5228, %v5889
        %v5913 = vmul.f32 %v5229, %v5889
        %v5938 = vrot.slane %v5890, 6
        %v5939 = vrot.slane %v5891, 6
        %v5940 = vsel %vm1095, %v5938, %v5939
        %v5941 = vrot.slane %v5892, 6
        %v5942 = vsel %vm1095, %v5939, %v5941
        %v5943 = vrot.slane %v5893, 6
        %v5944 = vrot.slane %v5894, 6
        %v5945 = vsel %vm1095, %v5943, %v5944
        %v5946 = vrot.slane %v5895, 6
        %v5947 = vsel %vm1095, %v5944, %v5946
        %v5948 = vrot.slane %v5896, 6
        %v5949 = vrot.slane %v5897, 6
        %v5950 = vsel %vm1095, %v5948, %v5949
        %v5951 = vrot.slane %v5898, 6
        %v5952 = vsel %vm1095, %v5949, %v5951
        %v5953 = vrot.slane %v5899, 6
        %v5954 = vrot.slane %v5900, 6
        %v5955 = vsel %vm1095, %v5953, %v5954
        %v5956 = vrot.slane %v5901, 6
        %v5957 = vsel %vm1095, %v5954, %v5956
        %v5958 = vrot.slane %v5902, 6
        %v5959 = vrot.slane %v5903, 6
        %v5960 = vsel %vm1095, %v5958, %v5959
        %v5961 = vrot.slane %v5904, 6
        %v5962 = vsel %vm1095, %v5959, %v5961
        %v5963 = vrot.slane %v5905, 6
        %v5964 = vrot.slane %v5906, 6
        %v5965 = vsel %vm1095, %v5963, %v5964
        %v5966 = vrot.slane %v5907, 6
        %v5967 = vsel %vm1095, %v5964, %v5966
        %v5968 = vrot.slane %v5908, 6
        %v5969 = vrot.slane %v5909, 6
        %v5970 = vsel %vm1095, %v5968, %v5969
        %v5971 = vrot.slane %v5910, 6
        %v5972 = vsel %vm1095, %v5969, %v5971
        %v5973 = vrot.slane %v5911, 6
        %v5974 = vrot.slane %v5912, 6
        %v5975 = vsel %vm1095, %v5973, %v5974
        %v5976 = vrot.slane %v5913, 6
        %v5977 = vsel %vm1095, %v5974, %v5976
        %v5994 = vadd.f32 %v5870, %v5940
        %v5995 = vadd.f32 %v5871, %v5942
        %v5996 = vadd.f32 %v5872, %v5945
        %v5997 = vadd.f32 %v5873, %v5947
        %v5998 = vadd.f32 %v5874, %v5950
        %v5999 = vadd.f32 %v5875, %v5952
        %v6000 = vadd.f32 %v5876, %v5955
        %v6001 = vadd.f32 %v5877, %v5957
        %v6002 = vadd.f32 %v5878, %v5960
        %v6003 = vadd.f32 %v5879, %v5962
        %v6004 = vadd.f32 %v5880, %v5965
        %v6005 = vadd.f32 %v5881, %v5967
        %v6006 = vadd.f32 %v5882, %v5970
        %v6007 = vadd.f32 %v5883, %v5972
        %v6008 = vadd.f32 %v5884, %v5975
        %v6009 = vadd.f32 %v5885, %v5977
        %v6011 = vlaneseq
        %v6012 = vshrl.u32 %v6011, 7
        %v6013 = vsub.s32 0, %v6012
        %v6014 = vrot.slane %v355, %v6013
        %v6016 = vadd.f32 %v5994, %v6014
        %v6017 = vadd.f32 %v5995, %v6014
        %v6018 = vadd.f32 %v5996, %v6014
        %v6019 = vadd.f32 %v5997, %v6014
        %v6020 = vadd.f32 %v5998, %v6014
        %v6021 = vadd.f32 %v5999, %v6014
        %v6022 = vadd.f32 %v6000, %v6014
        %v6023 = vadd.f32 %v6001, %v6014
        %v6024 = vadd.f32 %v6002, %v6014
        %v6025 = vadd.f32 %v6003, %v6014
        %v6026 = vadd.f32 %v6004, %v6014
        %v6027 = vadd.f32 %v6005, %v6014
        %v6028 = vadd.f32 %v6006, %v6014
        %v6029 = vadd.f32 %v6007, %v6014
        %v6030 = vadd.f32 %v6008, %v6014
        %v6031 = vadd.f32 %v6009, %v6014
        %vm6032 = vcmask 261120
        %v6033 = vsel %vm6032, %v6016, 0.0
        %6034 = vadd.xlane.f32.xlu0 %v6033
        %v6035 = vpop.xlane.xlu0 %6034
        %v6036 = vsel %vm6032, %v6017, 0.0
        %6037 = vadd.xlane.f32.xlu0 %v6036
        %v6038 = vpop.xlane.xlu0 %6037
        %v6039 = vsel %vm6032, %v6018, 0.0
        %6040 = vadd.xlane.f32.xlu0 %v6039
        %v6041 = vpop.xlane.xlu0 %6040
        %v6042 = vsel %vm6032, %v6019, 0.0
        %6043 = vadd.xlane.f32.xlu0 %v6042
        %v6044 = vpop.xlane.xlu0 %6043
        %v6045 = vsel %vm6032, %v6020, 0.0
        %6046 = vadd.xlane.f32.xlu0 %v6045
        %v6047 = vpop.xlane.xlu0 %6046
        %v6048 = vsel %vm6032, %v6021, 0.0
        %6049 = vadd.xlane.f32.xlu0 %v6048
        %v6050 = vpop.xlane.xlu0 %6049
        %v6051 = vsel %vm6032, %v6022, 0.0
        %6052 = vadd.xlane.f32.xlu0 %v6051
        %v6053 = vpop.xlane.xlu0 %6052
        %v6054 = vsel %vm6032, %v6023, 0.0
        %6055 = vadd.xlane.f32.xlu0 %v6054
        %v6056 = vpop.xlane.xlu0 %6055
        %v6057 = vsel %vm6032, %v6024, 0.0
        %6058 = vadd.xlane.f32.xlu0 %v6057
        %v6059 = vpop.xlane.xlu0 %6058
        %v6060 = vsel %vm6032, %v6025, 0.0
        %6061 = vadd.xlane.f32.xlu0 %v6060
        %v6062 = vpop.xlane.xlu0 %6061
        %v6063 = vsel %vm6032, %v6026, 0.0
        %6064 = vadd.xlane.f32.xlu0 %v6063
        %v6065 = vpop.xlane.xlu0 %6064
        %v6066 = vsel %vm6032, %v6027, 0.0
        %6067 = vadd.xlane.f32.xlu0 %v6066
        %v6068 = vpop.xlane.xlu0 %6067
        %v6069 = vsel %vm6032, %v6028, 0.0
        %6070 = vadd.xlane.f32.xlu0 %v6069
        %v6071 = vpop.xlane.xlu0 %6070
        %v6072 = vsel %vm6032, %v6029, 0.0
        %6073 = vadd.xlane.f32.xlu0 %v6072
        %v6074 = vpop.xlane.xlu0 %6073
        %v6075 = vsel %vm6032, %v6030, 0.0
        %6076 = vadd.xlane.f32.xlu0 %v6075
        %v6077 = vpop.xlane.xlu0 %6076
        %v6078 = vsel %vm6032, %v6031, 0.0
        %6079 = vadd.xlane.f32.xlu0 %v6078
        %v6080 = vpop.xlane.xlu0 %6079
        %v6081 = vrcp.pop 32.0
        %v6082 = vmul.f32 %v6035, %v6081
        %v6083 = vmul.f32 %v6038, %v6081
        %v6084 = vmul.f32 %v6041, %v6081
        %v6085 = vmul.f32 %v6044, %v6081
        %v6086 = vmul.f32 %v6047, %v6081
        %v6087 = vmul.f32 %v6050, %v6081
        %v6088 = vmul.f32 %v6053, %v6081
        %v6089 = vmul.f32 %v6056, %v6081
        %v6090 = vmul.f32 %v6059, %v6081
        %v6091 = vmul.f32 %v6062, %v6081
        %v6092 = vmul.f32 %v6065, %v6081
        %v6093 = vmul.f32 %v6068, %v6081
        %v6094 = vmul.f32 %v6071, %v6081
        %v6095 = vmul.f32 %v6074, %v6081
        %v6096 = vmul.f32 %v6077, %v6081
        %v6097 = vmul.f32 %v6080, %v6081
        %v6098 = vsub.f32 %v6016, %v6082
        %v6099 = vsub.f32 %v6017, %v6083
        %v6100 = vsub.f32 %v6018, %v6084
        %v6101 = vsub.f32 %v6019, %v6085
        %v6102 = vsub.f32 %v6020, %v6086
        %v6103 = vsub.f32 %v6021, %v6087
        %v6104 = vsub.f32 %v6022, %v6088
        %v6105 = vsub.f32 %v6023, %v6089
        %v6106 = vsub.f32 %v6024, %v6090
        %v6107 = vsub.f32 %v6025, %v6091
        %v6108 = vsub.f32 %v6026, %v6092
        %v6109 = vsub.f32 %v6027, %v6093
        %v6110 = vsub.f32 %v6028, %v6094
        %v6111 = vsub.f32 %v6029, %v6095
        %v6112 = vsub.f32 %v6030, %v6096
        %v6113 = vsub.f32 %v6031, %v6097
        %v6114 = vmul.f32 %v6098, %v6098
        %v6115 = vmul.f32 %v6099, %v6099
        %v6116 = vmul.f32 %v6100, %v6100
        %v6117 = vmul.f32 %v6101, %v6101
        %v6118 = vmul.f32 %v6102, %v6102
        %v6119 = vmul.f32 %v6103, %v6103
        %v6120 = vmul.f32 %v6104, %v6104
        %v6121 = vmul.f32 %v6105, %v6105
        %v6122 = vmul.f32 %v6106, %v6106
        %v6123 = vmul.f32 %v6107, %v6107
        %v6124 = vmul.f32 %v6108, %v6108
        %v6125 = vmul.f32 %v6109, %v6109
        %v6126 = vmul.f32 %v6110, %v6110
        %v6127 = vmul.f32 %v6111, %v6111
        %v6128 = vmul.f32 %v6112, %v6112
        %v6129 = vmul.f32 %v6113, %v6113
        %v6130 = vsel %vm6032, %v6114, 0.0
        %6131 = vadd.xlane.f32.xlu0 %v6130
        %v6132 = vpop.xlane.xlu0 %6131
        %v6133 = vsel %vm6032, %v6115, 0.0
        %6134 = vadd.xlane.f32.xlu0 %v6133
        %v6135 = vpop.xlane.xlu0 %6134
        %v6136 = vsel %vm6032, %v6116, 0.0
        %6137 = vadd.xlane.f32.xlu0 %v6136
        %v6138 = vpop.xlane.xlu0 %6137
        %v6139 = vsel %vm6032, %v6117, 0.0
        %6140 = vadd.xlane.f32.xlu0 %v6139
        %v6141 = vpop.xlane.xlu0 %6140
        %v6142 = vsel %vm6032, %v6118, 0.0
        %6143 = vadd.xlane.f32.xlu0 %v6142
        %v6144 = vpop.xlane.xlu0 %6143
        %v6145 = vsel %vm6032, %v6119, 0.0
        %6146 = vadd.xlane.f32.xlu0 %v6145
        %v6147 = vpop.xlane.xlu0 %6146
        %v6148 = vsel %vm6032, %v6120, 0.0
        %6149 = vadd.xlane.f32.xlu0 %v6148
        %v6150 = vpop.xlane.xlu0 %6149
        %v6151 = vsel %vm6032, %v6121, 0.0
        %6152 = vadd.xlane.f32.xlu0 %v6151
        %v6153 = vpop.xlane.xlu0 %6152
        %v6154 = vsel %vm6032, %v6122, 0.0
        %6155 = vadd.xlane.f32.xlu0 %v6154
        %v6156 = vpop.xlane.xlu0 %6155
        %v6157 = vsel %vm6032, %v6123, 0.0
        %6158 = vadd.xlane.f32.xlu0 %v6157
        %v6159 = vpop.xlane.xlu0 %6158
        %v6160 = vsel %vm6032, %v6124, 0.0
        %6161 = vadd.xlane.f32.xlu0 %v6160
        %v6162 = vpop.xlane.xlu0 %6161
        %v6163 = vsel %vm6032, %v6125, 0.0
        %6164 = vadd.xlane.f32.xlu0 %v6163
        %v6165 = vpop.xlane.xlu0 %6164
        %v6166 = vsel %vm6032, %v6126, 0.0
        %6167 = vadd.xlane.f32.xlu0 %v6166
        %v6168 = vpop.xlane.xlu0 %6167
        %v6169 = vsel %vm6032, %v6127, 0.0
        %6170 = vadd.xlane.f32.xlu0 %v6169
        %v6171 = vpop.xlane.xlu0 %6170
        %v6172 = vsel %vm6032, %v6128, 0.0
        %6173 = vadd.xlane.f32.xlu0 %v6172
        %v6174 = vpop.xlane.xlu0 %6173
        %v6175 = vsel %vm6032, %v6129, 0.0
        %6176 = vadd.xlane.f32.xlu0 %v6175
        %v6177 = vpop.xlane.xlu0 %6176
        %v6178 = vmul.f32 %v6132, %v6081
        %v6179 = vmul.f32 %v6135, %v6081
        %v6180 = vmul.f32 %v6138, %v6081
        %v6181 = vmul.f32 %v6141, %v6081
        %v6182 = vmul.f32 %v6144, %v6081
        %v6183 = vmul.f32 %v6147, %v6081
        %v6184 = vmul.f32 %v6150, %v6081
        %v6185 = vmul.f32 %v6153, %v6081
        %v6186 = vmul.f32 %v6156, %v6081
        %v6187 = vmul.f32 %v6159, %v6081
        %v6188 = vmul.f32 %v6162, %v6081
        %v6189 = vmul.f32 %v6165, %v6081
        %v6190 = vmul.f32 %v6168, %v6081
        %v6191 = vmul.f32 %v6171, %v6081
        %v6192 = vmul.f32 %v6174, %v6081
        %v6193 = vmul.f32 %v6177, %v6081
        %v6194 = vadd.f32 %v6178, 1e-06
        %v6195 = vadd.f32 %v6179, 1e-06
        %v6196 = vadd.f32 %v6180, 1e-06
        %v6197 = vadd.f32 %v6181, 1e-06
        %v6198 = vadd.f32 %v6182, 1e-06
        %v6199 = vadd.f32 %v6183, 1e-06
        %v6200 = vadd.f32 %v6184, 1e-06
        %v6201 = vadd.f32 %v6185, 1e-06
        %v6202 = vadd.f32 %v6186, 1e-06
        %v6203 = vadd.f32 %v6187, 1e-06
        %v6204 = vadd.f32 %v6188, 1e-06
        %v6205 = vadd.f32 %v6189, 1e-06
        %v6206 = vadd.f32 %v6190, 1e-06
        %v6207 = vadd.f32 %v6191, 1e-06
        %v6208 = vadd.f32 %v6192, 1e-06
        %v6209 = vadd.f32 %v6193, 1e-06
        %v6210 = vrsqrt.pop %v6194
        %v6211 = vrsqrt.pop %v6195
        %v6212 = vrsqrt.pop %v6196
        %v6213 = vrsqrt.pop %v6197
        %v6214 = vrsqrt.pop %v6198
        %v6215 = vrsqrt.pop %v6199
        %v6216 = vrsqrt.pop %v6200
        %v6217 = vrsqrt.pop %v6201
        %v6218 = vrsqrt.pop %v6202
        %v6219 = vrsqrt.pop %v6203
        %v6220 = vrsqrt.pop %v6204
        %v6221 = vrsqrt.pop %v6205
        %v6222 = vrsqrt.pop %v6206
        %v6223 = vrsqrt.pop %v6207
        %v6224 = vrsqrt.pop %v6208
        %v6225 = vrsqrt.pop %v6209
        %v6226 = vmul.f32 %v6098, %v6210
        %v6227 = vmul.f32 %v6099, %v6211
        %v6228 = vmul.f32 %v6100, %v6212
        %v6229 = vmul.f32 %v6101, %v6213
        %v6230 = vmul.f32 %v6102, %v6214
        %v6231 = vmul.f32 %v6103, %v6215
        %v6232 = vmul.f32 %v6104, %v6216
        %v6233 = vmul.f32 %v6105, %v6217
        %v6234 = vmul.f32 %v6106, %v6218
        %v6235 = vmul.f32 %v6107, %v6219
        %v6236 = vmul.f32 %v6108, %v6220
        %v6237 = vmul.f32 %v6109, %v6221
        %v6238 = vmul.f32 %v6110, %v6222
        %v6239 = vmul.f32 %v6111, %v6223
        %v6240 = vmul.f32 %v6112, %v6224
        %v6241 = vmul.f32 %v6113, %v6225
        %v6242 = vld [vmem:[%s3] sm:$0x1]
        %v6244 = vlaneseq
        %v6245 = vshrl.u32 %v6244, 7
        %v6246 = vsub.s32 0, %v6245
        %v6247 = vrot.slane %v6242, %v6246
        %v6249 = vmul.f32 %v6226, %v6247
        %v6250 = vmul.f32 %v6227, %v6247
        %v6251 = vmul.f32 %v6228, %v6247
        %v6252 = vmul.f32 %v6229, %v6247
        %v6253 = vmul.f32 %v6230, %v6247
        %v6254 = vmul.f32 %v6231, %v6247
        %v6255 = vmul.f32 %v6232, %v6247
        %v6256 = vmul.f32 %v6233, %v6247
        %v6257 = vmul.f32 %v6234, %v6247
        %v6258 = vmul.f32 %v6235, %v6247
        %v6259 = vmul.f32 %v6236, %v6247
        %v6260 = vmul.f32 %v6237, %v6247
        %v6261 = vmul.f32 %v6238, %v6247
        %v6262 = vmul.f32 %v6239, %v6247
        %v6263 = vmul.f32 %v6240, %v6247
        %v6264 = vmul.f32 %v6241, %v6247
        %v6265 = vld [vmem:[%s4] sm:$0x1]
        %v6267 = vlaneseq
        %v6268 = vshrl.u32 %v6267, 7
        %v6269 = vsub.s32 0, %v6268
        %v6270 = vrot.slane %v6265, %v6269
        %v6272 = vadd.f32 %v6249, %v6270
        %v6273 = vadd.f32 %v6250, %v6270
        %v6274 = vadd.f32 %v6251, %v6270
        %v6275 = vadd.f32 %v6252, %v6270
        %v6276 = vadd.f32 %v6253, %v6270
        %v6277 = vadd.f32 %v6254, %v6270
        %v6278 = vadd.f32 %v6255, %v6270
        %v6279 = vadd.f32 %v6256, %v6270
        %v6280 = vadd.f32 %v6257, %v6270
        %v6281 = vadd.f32 %v6258, %v6270
        %v6282 = vadd.f32 %v6259, %v6270
        %v6283 = vadd.f32 %v6260, %v6270
        %v6284 = vadd.f32 %v6261, %v6270
        %v6285 = vadd.f32 %v6262, %v6270
        %v6286 = vadd.f32 %v6263, %v6270
        %v6287 = vadd.f32 %v6264, %v6270
        %v6288 = vpack.c.bf16 %v6273, %v6272
        %v6289 = vpack.c.bf16 %v6275, %v6274
        %v6290 = vpack.c.bf16 %v6277, %v6276
        %v6291 = vpack.c.bf16 %v6279, %v6278
        %v6292 = vpack.c.bf16 %v6281, %v6280
        %v6293 = vpack.c.bf16 %v6283, %v6282
        %v6294 = vpack.c.bf16 %v6285, %v6284
        %v6295 = vpack.c.bf16 %v6287, %v6286
        %v6296 = vld [vmem:[%s5] sm:$0xf]
        %v6297 = vld [vmem:[%s5 + $0x4] sm:$0xf]
        %v6298 = vld [vmem:[%s5 + $0x8] sm:$0xf]
        %v6299 = vld [vmem:[%s5 + $0xc] sm:$0xf]
        %v6300 = vld [vmem:[%s6] sm:$0x1]
        %v6302 = vlaneseq
        %v6303 = vshrl.u32 %v6302, 7
        %v6304 = vsub.s32 0, %v6303
        %v6305 = vrot.slane %v6300, %v6304
        %v6311 = vunpack.c.l.b16 %v6296
        %v6312 = vunpack.c.l.b16 %v6297
        %v6313 = vunpack.c.l.b16 %v6298
        %v6314 = vunpack.c.l.b16 %v6299
        %v6315 = vpack.c.b16 %v6312, %v6311
        %v6316 = vpack.c.b16 %v6314, %v6313
        %v6320 = vsel %vm6032, %v6288, 0
        %v6323 = vsel %vm6032, %v6289, 0
        %v6326 = vsel %vm6032, %v6290, 0
        %v6329 = vsel %vm6032, %v6291, 0
        %v6332 = vsel %vm6032, %v6292, 0
        %v6335 = vsel %vm6032, %v6293, 0
        %v6338 = vsel %vm6032, %v6294, 0
        %v6341 = vsel %vm6032, %v6295, 0
        %6343 = vmatprep.subr.bf16.mxu0 0
        %6344 = vmatpush1.bf16.msra.mxu0 0
        %6345 = vmatprep.subr.bf16.mxu0 0
        %6346 = vmatpush1.bf16.msra.mxu0 0
        %6347 = vmatprep.subr.bf16.mxu0 0
        %6348 = vmatpush1.bf16.msra.mxu0 0
        %6349 = vmatprep.subr.bf16.mxu0 0
        %6350 = vmatpush1.bf16.msra.mxu0 0
        %6351 = vmatprep.subr.bf16.mxu0 0
        %6352 = vmatpush1.bf16.msra.mxu0 0
        %6353 = vmatprep.subr.bf16.mxu0 0
        %6354 = vmatpush1.bf16.msra.mxu0 0
        %6355 = vmatprep.subr.bf16.mxu0 0
        %6356 = vmatpush1.bf16.msra.mxu0 %v6316
        %6357 = vmatprep.subr.bf16.mxu0 0
        %6358 = vmatpush1.bf16.msra.mxu0 %v6315
        %6359 = vmatprep.subr.bf16.mxu0 0
        %6360 = vmatpush2.bf16.msra.mxu0 0
        %6361 = vmatprep.subr.bf16.mxu0 0
        %6362 = vmatpush2.bf16.msra.mxu0 0
        %6363 = vmatprep.subr.bf16.mxu0 0
        %6364 = vmatpush2.bf16.msra.mxu0 0
        %6365 = vmatprep.subr.bf16.mxu0 0
        %6366 = vmatpush2.bf16.msra.mxu0 0
        %6367 = vmatprep.subr.bf16.mxu0 0
        %6368 = vmatpush2.bf16.msra.mxu0 0
        %6369 = vmatprep.subr.bf16.mxu0 0
        %6370 = vmatpush2.bf16.msra.mxu0 0
        %6371 = vmatprep.subr.bf16.mxu0 0
        %6372 = vmatpush2.bf16.msra.mxu0 0
        %6373 = vmatprep.subr.bf16.mxu0 0
        %6374 = vmatpush2.bf16.msra.mxu0 0
        %6375 = vmatprep.mubr.bf16.mxu0 0
        %6376 = vmatmul.mubr.bf16.gmra.mxu0 %v6320
        %v6377 = vpop.f32.mrf.mxu0
        %v6378 = vadd.f32 %v6305, %v6377
        %v6379 = vpop.f32.mrf.mxu0
        %v6380 = vpop.f32.mrf.mxu0
        %v6381 = vadd.f32 %v6305, %v6380
        %v6382 = vpop.f32.mrf.mxu0
        %6383 = vmatprep.mubr.bf16.mxu0 0
        %6384 = vmatmul.mubr.bf16.gmra.mxu0 %v6323
        %v6385 = vpop.f32.mrf.mxu0
        %v6386 = vadd.f32 %v6305, %v6385
        %v6387 = vpop.f32.mrf.mxu0
        %v6388 = vpop.f32.mrf.mxu0
        %v6389 = vadd.f32 %v6305, %v6388
        %v6390 = vpop.f32.mrf.mxu0
        %6391 = vmatprep.mubr.bf16.mxu0 0
        %6392 = vmatmul.mubr.bf16.gmra.mxu0 %v6326
        %v6393 = vpop.f32.mrf.mxu0
        %v6394 = vadd.f32 %v6305, %v6393
        %v6395 = vpop.f32.mrf.mxu0
        %v6396 = vpop.f32.mrf.mxu0
        %v6397 = vadd.f32 %v6305, %v6396
        %v6398 = vpop.f32.mrf.mxu0
        %6399 = vmatprep.mubr.bf16.mxu0 0
        %6400 = vmatmul.mubr.bf16.gmra.mxu0 %v6329
        %v6401 = vpop.f32.mrf.mxu0
        %v6402 = vadd.f32 %v6305, %v6401
        %v6403 = vpop.f32.mrf.mxu0
        %v6404 = vpop.f32.mrf.mxu0
        %v6405 = vadd.f32 %v6305, %v6404
        %v6406 = vpop.f32.mrf.mxu0
        %6407 = vmatprep.mubr.bf16.mxu0 0
        %6408 = vmatmul.mubr.bf16.gmra.mxu0 %v6332
        %v6409 = vpop.f32.mrf.mxu0
        %v6410 = vadd.f32 %v6305, %v6409
        %v6411 = vpop.f32.mrf.mxu0
        %v6412 = vpop.f32.mrf.mxu0
        %v6413 = vadd.f32 %v6305, %v6412
        %v6414 = vpop.f32.mrf.mxu0
        %6415 = vmatprep.mubr.bf16.mxu0 0
        %6416 = vmatmul.mubr.bf16.gmra.mxu0 %v6335
        %v6417 = vpop.f32.mrf.mxu0
        %v6418 = vadd.f32 %v6305, %v6417
        %v6419 = vpop.f32.mrf.mxu0
        %v6420 = vpop.f32.mrf.mxu0
        %v6421 = vadd.f32 %v6305, %v6420
        %v6422 = vpop.f32.mrf.mxu0
        %6423 = vmatprep.mubr.bf16.mxu0 0
        %6424 = vmatmul.mubr.bf16.gmra.mxu0 %v6338
        %v6425 = vpop.f32.mrf.mxu0
        %v6426 = vadd.f32 %v6305, %v6425
        %v6427 = vpop.f32.mrf.mxu0
        %v6428 = vpop.f32.mrf.mxu0
        %v6429 = vadd.f32 %v6305, %v6428
        %v6430 = vpop.f32.mrf.mxu0
        %6431 = vmatprep.mubr.bf16.mxu0 0
        %6432 = vmatmul.mubr.bf16.gmra.mxu0 %v6341
        %v6433 = vpop.f32.mrf.mxu0
        %v6434 = vadd.f32 %v6305, %v6433
        %v6435 = vpop.f32.mrf.mxu0
        %v6436 = vpop.f32.mrf.mxu0
        %v6437 = vadd.f32 %v6305, %v6436
        %v6438 = vpop.f32.mrf.mxu0
        %6439 = vdwg.mxu0
        %v6440 = vmul.f32 %v6378, 0.5
        %v6441 = vmul.f32 %v6381, 0.5
        %v6442 = vmul.f32 %v6386, 0.5
        %v6443 = vmul.f32 %v6389, 0.5
        %v6444 = vmul.f32 %v6394, 0.5
        %v6445 = vmul.f32 %v6397, 0.5
        %v6446 = vmul.f32 %v6402, 0.5
        %v6447 = vmul.f32 %v6405, 0.5
        %v6448 = vmul.f32 %v6410, 0.5
        %v6449 = vmul.f32 %v6413, 0.5
        %v6450 = vmul.f32 %v6418, 0.5
        %v6451 = vmul.f32 %v6421, 0.5
        %v6452 = vmul.f32 %v6426, 0.5
        %v6453 = vmul.f32 %v6429, 0.5
        %v6454 = vmul.f32 %v6434, 0.5
        %v6455 = vmul.f32 %v6437, 0.5
        %v6456 = vmul.f32 %v6378, 0.70710677
        %v6457 = vmul.f32 %v6381, 0.70710677
        %v6458 = vmul.f32 %v6386, 0.70710677
        %v6459 = vmul.f32 %v6389, 0.70710677
        %v6460 = vmul.f32 %v6394, 0.70710677
        %v6461 = vmul.f32 %v6397, 0.70710677
        %v6462 = vmul.f32 %v6402, 0.70710677
        %v6463 = vmul.f32 %v6405, 0.70710677
        %v6464 = vmul.f32 %v6410, 0.70710677
        %v6465 = vmul.f32 %v6413, 0.70710677
        %v6466 = vmul.f32 %v6418, 0.70710677
        %v6467 = vmul.f32 %v6421, 0.70710677
        %v6468 = vmul.f32 %v6426, 0.70710677
        %v6469 = vmul.f32 %v6429, 0.70710677
        %v6470 = vmul.f32 %v6434, 0.70710677
        %v6471 = vmul.f32 %v6437, 0.70710677
        %v6472 = verf.f32.pop %v6456
        %v6473 = verf.f32.pop %v6457
        %v6474 = verf.f32.pop %v6458
        %v6475 = verf.f32.pop %v6459
        %v6476 = verf.f32.pop %v6460
        %v6477 = verf.f32.pop %v6461
        %v6478 = verf.f32.pop %v6462
        %v6479 = verf.f32.pop %v6463
        %v6480 = verf.f32.pop %v6464
        %v6481 = verf.f32.pop %v6465
        %v6482 = verf.f32.pop %v6466
        %v6483 = verf.f32.pop %v6467
        %v6484 = verf.f32.pop %v6468
        %v6485 = verf.f32.pop %v6469
        %v6486 = verf.f32.pop %v6470
        %v6487 = verf.f32.pop %v6471
        %v6488 = vadd.f32 %v6472, 1.0
        %v6489 = vadd.f32 %v6473, 1.0
        %v6490 = vadd.f32 %v6474, 1.0
        %v6491 = vadd.f32 %v6475, 1.0
        %v6492 = vadd.f32 %v6476, 1.0
        %v6493 = vadd.f32 %v6477, 1.0
        %v6494 = vadd.f32 %v6478, 1.0
        %v6495 = vadd.f32 %v6479, 1.0
        %v6496 = vadd.f32 %v6480, 1.0
        %v6497 = vadd.f32 %v6481, 1.0
        %v6498 = vadd.f32 %v6482, 1.0
        %v6499 = vadd.f32 %v6483, 1.0
        %v6500 = vadd.f32 %v6484, 1.0
        %v6501 = vadd.f32 %v6485, 1.0
        %v6502 = vadd.f32 %v6486, 1.0
        %v6503 = vadd.f32 %v6487, 1.0
        %v6504 = vmul.f32 %v6440, %v6488
        %v6505 = vmul.f32 %v6441, %v6489
        %v6506 = vmul.f32 %v6442, %v6490
        %v6507 = vmul.f32 %v6443, %v6491
        %v6508 = vmul.f32 %v6444, %v6492
        %v6509 = vmul.f32 %v6445, %v6493
        %v6510 = vmul.f32 %v6446, %v6494
        %v6511 = vmul.f32 %v6447, %v6495
        %v6512 = vmul.f32 %v6448, %v6496
        %v6513 = vmul.f32 %v6449, %v6497
        %v6514 = vmul.f32 %v6450, %v6498
        %v6515 = vmul.f32 %v6451, %v6499
        %v6516 = vmul.f32 %v6452, %v6500
        %v6517 = vmul.f32 %v6453, %v6501
        %v6518 = vmul.f32 %v6454, %v6502
        %v6519 = vmul.f32 %v6455, %v6503
        %v6520 = vpack.c.bf16 %v6505, %v6504
        %v6521 = vpack.c.bf16 %v6507, %v6506
        %v6522 = vpack.c.bf16 %v6509, %v6508
        %v6523 = vpack.c.bf16 %v6511, %v6510
        %v6524 = vpack.c.bf16 %v6513, %v6512
        %v6525 = vpack.c.bf16 %v6515, %v6514
        %v6526 = vpack.c.bf16 %v6517, %v6516
        %v6527 = vpack.c.bf16 %v6519, %v6518
        %v6528 = vld [vmem:[%s7] sm:$0xf]
        %v6529 = vld [vmem:[%s7 + $0x4] sm:$0xf]
        %v6530 = vld [vmem:[%s7 + $0x8] sm:$0xf]
        %v6531 = vld [vmem:[%s7 + $0xc] sm:$0xf]
        %v6532 = vld [vmem:[%s7 + $0x10] sm:$0xf]
        %v6533 = vld [vmem:[%s7 + $0x14] sm:$0xf]
        %v6534 = vld [vmem:[%s7 + $0x18] sm:$0xf]
        %v6535 = vld [vmem:[%s7 + $0x1c] sm:$0xf]
        %v6536 = vld [vmem:[%s7 + $0x20] sm:$0xf]
        %v6537 = vld [vmem:[%s7 + $0x24] sm:$0xf]
        %v6538 = vld [vmem:[%s7 + $0x28] sm:$0xf]
        %v6539 = vld [vmem:[%s7 + $0x2c] sm:$0xf]
        %v6540 = vld [vmem:[%s7 + $0x30] sm:$0xf]
        %v6541 = vld [vmem:[%s7 + $0x34] sm:$0xf]
        %v6542 = vld [vmem:[%s7 + $0x38] sm:$0xf]
        %v6543 = vld [vmem:[%s7 + $0x3c] sm:$0xf]
        %v6544 = vld [vmem:[%s8] sm:$0x1]
        %v6546 = vlaneseq
        %v6547 = vshrl.u32 %v6546, 7
        %v6548 = vsub.s32 0, %v6547
        %v6549 = vrot.slane %v6544, %v6548
        %v6567 = vunpack.c.l.b16 %v6528
        %v6568 = vunpack.c.l.b16 %v6529
        %v6569 = vunpack.c.l.b16 %v6530
        %v6570 = vunpack.c.l.b16 %v6531
        %v6571 = vunpack.c.l.b16 %v6532
        %v6572 = vunpack.c.l.b16 %v6533
        %v6573 = vunpack.c.l.b16 %v6534
        %v6574 = vunpack.c.l.b16 %v6535
        %v6575 = vunpack.c.l.b16 %v6536
        %v6576 = vunpack.c.l.b16 %v6537
        %v6577 = vunpack.c.l.b16 %v6538
        %v6578 = vunpack.c.l.b16 %v6539
        %v6579 = vunpack.c.l.b16 %v6540
        %v6580 = vunpack.c.l.b16 %v6541
        %v6581 = vunpack.c.l.b16 %v6542
        %v6582 = vunpack.c.l.b16 %v6543
        %v6583 = vpack.c.b16 %v6568, %v6567
        %v6584 = vpack.c.b16 %v6570, %v6569
        %v6585 = vpack.c.b16 %v6572, %v6571
        %v6586 = vpack.c.b16 %v6574, %v6573
        %v6587 = vpack.c.b16 %v6576, %v6575
        %v6588 = vpack.c.b16 %v6578, %v6577
        %v6589 = vpack.c.b16 %v6580, %v6579
        %v6590 = vpack.c.b16 %v6582, %v6581
        %6599 = vmatprep.subr.bf16.mxu0 0
        %6600 = vmatpush1.bf16.msra.mxu0 %v6590
        %6601 = vmatprep.subr.bf16.mxu0 0
        %6602 = vmatpush1.bf16.msra.mxu0 %v6589
        %6603 = vmatprep.subr.bf16.mxu0 0
        %6604 = vmatpush1.bf16.msra.mxu0 %v6588
        %6605 = vmatprep.subr.bf16.mxu0 0
        %6606 = vmatpush1.bf16.msra.mxu0 %v6587
        %6607 = vmatprep.subr.bf16.mxu0 0
        %6608 = vmatpush1.bf16.msra.mxu0 %v6586
        %6609 = vmatprep.subr.bf16.mxu0 0
        %6610 = vmatpush1.bf16.msra.mxu0 %v6585
        %6611 = vmatprep.subr.bf16.mxu0 0
        %6612 = vmatpush1.bf16.msra.mxu0 %v6584
        %6613 = vmatprep.subr.bf16.mxu0 0
        %6614 = vmatpush1.bf16.msra.mxu0 %v6583
        %6615 = vmatprep.subr.bf16.mxu0 0
        %6616 = vmatpush2.bf16.msra.mxu0 0
        %6617 = vmatprep.subr.bf16.mxu0 0
        %6618 = vmatpush2.bf16.msra.mxu0 0
        %6619 = vmatprep.subr.bf16.mxu0 0
        %6620 = vmatpush2.bf16.msra.mxu0 0
        %6621 = vmatprep.subr.bf16.mxu0 0
        %6622 = vmatpush2.bf16.msra.mxu0 0
        %6623 = vmatprep.subr.bf16.mxu0 0
        %6624 = vmatpush2.bf16.msra.mxu0 0
        %6625 = vmatprep.subr.bf16.mxu0 0
        %6626 = vmatpush2.bf16.msra.mxu0 0
        %6627 = vmatprep.subr.bf16.mxu0 0
        %6628 = vmatpush2.bf16.msra.mxu0 0
        %6629 = vmatprep.subr.bf16.mxu0 0
        %6630 = vmatpush2.bf16.msra.mxu0 0
        %6631 = vmatprep.mubr.bf16.mxu0 0
        %6632 = vmatmul.mubr.bf16.gmra.mxu0 %v6520
        %v6633 = vpop.f32.mrf.mxu0
        %v6634 = vadd.f32 %v6549, %v6633
        %v6635 = vpop.f32.mrf.mxu0
        %v6636 = vpop.f32.mrf.mxu0
        %v6637 = vadd.f32 %v6549, %v6636
        %v6638 = vpop.f32.mrf.mxu0
        %6639 = vmatprep.mubr.bf16.mxu0 0
        %6640 = vmatmul.mubr.bf16.gmra.mxu0 %v6521
        %v6641 = vpop.f32.mrf.mxu0
        %v6642 = vadd.f32 %v6549, %v6641
        %v6643 = vpop.f32.mrf.mxu0
        %v6644 = vpop.f32.mrf.mxu0
        %v6645 = vadd.f32 %v6549, %v6644
        %v6646 = vpop.f32.mrf.mxu0
        %6647 = vmatprep.mubr.bf16.mxu0 0
        %6648 = vmatmul.mubr.bf16.gmra.mxu0 %v6522
        %v6649 = vpop.f32.mrf.mxu0
        %v6650 = vadd.f32 %v6549, %v6649
        %v6651 = vpop.f32.mrf.mxu0
        %v6652 = vpop.f32.mrf.mxu0
        %v6653 = vadd.f32 %v6549, %v6652
        %v6654 = vpop.f32.mrf.mxu0
        %6655 = vmatprep.mubr.bf16.mxu0 0
        %6656 = vmatmul.mubr.bf16.gmra.mxu0 %v6523
        %v6657 = vpop.f32.mrf.mxu0
        %v6658 = vadd.f32 %v6549, %v6657
        %v6659 = vpop.f32.mrf.mxu0
        %v6660 = vpop.f32.mrf.mxu0
        %v6661 = vadd.f32 %v6549, %v6660
        %v6662 = vpop.f32.mrf.mxu0
        %6663 = vmatprep.mubr.bf16.mxu0 0
        %6664 = vmatmul.mubr.bf16.gmra.mxu0 %v6524
        %v6665 = vpop.f32.mrf.mxu0
        %v6666 = vadd.f32 %v6549, %v6665
        %v6667 = vpop.f32.mrf.mxu0
        %v6668 = vpop.f32.mrf.mxu0
        %v6669 = vadd.f32 %v6549, %v6668
        %v6670 = vpop.f32.mrf.mxu0
        %6671 = vmatprep.mubr.bf16.mxu0 0
        %6672 = vmatmul.mubr.bf16.gmra.mxu0 %v6525
        %v6673 = vpop.f32.mrf.mxu0
        %v6674 = vadd.f32 %v6549, %v6673
        %v6675 = vpop.f32.mrf.mxu0
        %v6676 = vpop.f32.mrf.mxu0
        %v6677 = vadd.f32 %v6549, %v6676
        %v6678 = vpop.f32.mrf.mxu0
        %6679 = vmatprep.mubr.bf16.mxu0 0
        %6680 = vmatmul.mubr.bf16.gmra.mxu0 %v6526
        %v6681 = vpop.f32.mrf.mxu0
        %v6682 = vadd.f32 %v6549, %v6681
        %v6683 = vpop.f32.mrf.mxu0
        %v6684 = vpop.f32.mrf.mxu0
        %v6685 = vadd.f32 %v6549, %v6684
        %v6686 = vpop.f32.mrf.mxu0
        %6687 = vmatprep.mubr.bf16.mxu0 0
        %6688 = vmatmul.mubr.bf16.gmra.mxu0 %v6527
        %v6689 = vpop.f32.mrf.mxu0
        %v6690 = vadd.f32 %v6549, %v6689
        %v6691 = vpop.f32.mrf.mxu0
        %v6692 = vpop.f32.mrf.mxu0
        %v6693 = vadd.f32 %v6549, %v6692
        %v6694 = vpop.f32.mrf.mxu0
        %6695 = vdwg.mxu0
        %v6712 = vrot.slane %v6634, 5
        %v6713 = vrot.slane %v6637, 5
        %v6714 = vsel %vm970, %v6712, %v6713
        %v6715 = vrot.slane %v6642, 5
        %v6716 = vrot.slane %v6645, 5
        %v6717 = vsel %vm970, %v6715, %v6716
        %v6718 = vrot.slane %v6650, 5
        %v6719 = vrot.slane %v6653, 5
        %v6720 = vsel %vm970, %v6718, %v6719
        %v6721 = vrot.slane %v6658, 5
        %v6722 = vrot.slane %v6661, 5
        %v6723 = vsel %vm970, %v6721, %v6722
        %v6724 = vrot.slane %v6666, 5
        %v6725 = vrot.slane %v6669, 5
        %v6726 = vsel %vm970, %v6724, %v6725
        %v6727 = vrot.slane %v6674, 5
        %v6728 = vrot.slane %v6677, 5
        %v6729 = vsel %vm970, %v6727, %v6728
        %v6730 = vrot.slane %v6682, 5
        %v6731 = vrot.slane %v6685, 5
        %v6732 = vsel %vm970, %v6730, %v6731
        %v6733 = vrot.slane %v6690, 5
        %v6734 = vrot.slane %v6693, 5
        %v6735 = vsel %vm970, %v6733, %v6734
        %v6760 = vadd.f32 %v2785, %v6712
        %v6761 = vadd.f32 %v2786, %v6714
        %v6762 = vadd.f32 %v2787, %v6713
        %v6763 = vadd.f32 %v2788, %v6715
        %v6764 = vadd.f32 %v2789, %v6717
        %v6765 = vadd.f32 %v2790, %v6716
        %v6766 = vadd.f32 %v2791, %v6718
        %v6767 = vadd.f32 %v2792, %v6720
        %v6768 = vadd.f32 %v2793, %v6719
        %v6769 = vadd.f32 %v2794, %v6721
        %v6770 = vadd.f32 %v2795, %v6723
        %v6771 = vadd.f32 %v2796, %v6722
        %v6772 = vadd.f32 %v2797, %v6724
        %v6773 = vadd.f32 %v2798, %v6726
        %v6774 = vadd.f32 %v2799, %v6725
        %v6775 = vadd.f32 %v2800, %v6727
        %v6776 = vadd.f32 %v2801, %v6729
        %v6777 = vadd.f32 %v2802, %v6728
        %v6778 = vadd.f32 %v2803, %v6730
        %v6779 = vadd.f32 %v2804, %v6732
        %v6780 = vadd.f32 %v2805, %v6731
        %v6781 = vadd.f32 %v2806, %v6733
        %v6782 = vadd.f32 %v2807, %v6735
        %v6783 = vadd.f32 %v2808, %v6734
        %vm6784 = vcmask 261123
        %6785 = vst.msk [vmem:[%s339 - $0x3] sm:$0xf8] %vm6784, %v6760
        %6786 = vst.msk [vmem:[%s339 + $0x5] sm:$0xff] %vm6032, %v6761
        %vm6787 = vcmask 256000
        %6788 = vst.msk [vmem:[%s339 + $0xd] sm:$0x7] %vm6787, %v6762
        %6789 = vst.msk [vmem:[%s339 + $0xd] sm:$0xf8] %vm6784, %v6763
        %6790 = vst.msk [vmem:[%s339 + $0x15] sm:$0xff] %vm6032, %v6764
        %6791 = vst.msk [vmem:[%s339 + $0x1d] sm:$0x7] %vm6787, %v6765
        %6792 = vst.msk [vmem:[%s339 + $0x1d] sm:$0xf8] %vm6784, %v6766
        %6793 = vst.msk [vmem:[%s339 + $0x25] sm:$0xff] %vm6032, %v6767
        %6794 = vst.msk [vmem:[%s339 + $0x2d] sm:$0x7] %vm6787, %v6768
        %6795 = vst.msk [vmem:[%s339 + $0x2d] sm:$0xf8] %vm6784, %v6769
        %6796 = vst.msk [vmem:[%s339 + $0x35] sm:$0xff] %vm6032, %v6770
        %6797 = vst.msk [vmem:[%s339 + $0x3d] sm:$0x7] %vm6787, %v6771
        %6798 = vst.msk [vmem:[%s339 + $0x3d] sm:$0xf8] %vm6784, %v6772
        %6799 = vst.msk [vmem:[%s339 + $0x45] sm:$0xff] %vm6032, %v6773
        %6800 = vst.msk [vmem:[%s339 + $0x4d] sm:$0x7] %vm6787, %v6774
        %6801 = vst.msk [vmem:[%s339 + $0x4d] sm:$0xf8] %vm6784, %v6775
        %6802 = vst.msk [vmem:[%s339 + $0x55] sm:$0xff] %vm6032, %v6776
        %6803 = vst.msk [vmem:[%s339 + $0x5d] sm:$0x7] %vm6787, %v6777
        %6804 = vst.msk [vmem:[%s339 + $0x5d] sm:$0xf8] %vm6784, %v6778
        %6805 = vst.msk [vmem:[%s339 + $0x65] sm:$0xff] %vm6032, %v6779
        %6806 = vst.msk [vmem:[%s339 + $0x6d] sm:$0x7] %vm6787, %v6780
        %6807 = vst.msk [vmem:[%s339 + $0x6d] sm:$0xf8] %vm6784, %v6781
        %6808 = vst.msk [vmem:[%s339 + $0x75] sm:$0xff] %vm6032, %v6782
        %6809 = vst.msk [vmem:[%s339 + $0x7d] sm:$0x7] %vm6787, %v6783
        %s6810 = sand.u32 %s239, 1
        %s6811 = scalar_lea.sflag [#allocation3], %s6810
        %s6812 = sand.u32 %s239, 1
        %s6813 = smul.addr %s6812, 128
        %s6814 = scalar_lea.vmem [#allocation2], %s6813
        // Predicated region
        $region57: #{tpu_custom_call.1} parent=55 // pred_check
          %p6815 = pneg %p249
        $region58: #{tpu_custom_call.1} parent=55 // pred_check_branch
          %6817 = sbr.rel (%p6815) target = $region60
        $region59: #{tpu_custom_call.1} parent=55 // pred_region
          %s6818 = smul.u32 8, %s28
          %s6820 = ssub.s32 2048, 2048
          %6821 = vsyncadd %s6811, %s6820
          %s6822 = smul.addr %s6818, 2
          %s6823 = smul.addr %s27, 32
          %s6824 = sadd.s32 %s6822, %s6823
          %s6825 = smul.addr %s6824, 128
          %s6826 = scalar_lea.hbm %s9, %s6825
          %s6827 = sshll.u32 %s6814, 4
          %s6828 = int_to_ptr.vmem [resolvable:$true] %s6827
          %6833 = dma.vmem_to_hbm [thread:$0]  %s6828, 2048, %s6826, %s6811, 128, 128, 8
        $region60: #{tpu_custom_call.1} parent=55 // pred_fallthru
          _
      $region56: #{tpu_custom_call.1} parent=5 // pred_fallthru
        _
      %p6834 = scmp.le.s32.totalorder 2, %s18
      // Predicated region
      $region61: #{tpu_custom_call.1} parent=5 // pred_check
        %p6835 = pneg %p6834
      $region62: #{tpu_custom_call.1} parent=5 // pred_check_branch
        %6837 = sbr.rel (%p6835) target = $region64
      $region63: #{tpu_custom_call.1} parent=5 // pred_region
        %s6838 = ssub.s32 %s18, 2
        // Predicated region
        $region65: #{tpu_custom_call.1} parent=63 // pred_check
          %p6839 = pneg %p255
        $region66: #{tpu_custom_call.1} parent=63 // pred_check_branch
          %6841 = sbr.rel (%p6839) target = $region68
        $region67: #{tpu_custom_call.1} parent=63 // pred_region
          %s6842 = sand.u32 %s240, 1
          %s6843 = scalar_lea.sflag [#allocation3], %s6842
          %s6844 = sand.u32 %s240, 1
          %s6845 = smul.addr %s6844, 128
          %s6846 = scalar_lea.vmem [#allocation2], %s6845
          %6847 = dma.done %s6843, 2048
        $region68: #{tpu_custom_call.1} parent=63 // pred_fallthru
          _
      $region64: #{tpu_custom_call.1} parent=5 // pred_fallthru
        _
    $region6: #{tpu_custom_call.1} parent=1 // loop_footer
      %s22 = sadd.s32 1, %s18
    $region7: #{tpu_custom_call.1} parent=1 // loop_footer_branch
      %17 = sbr.rel target = $region3
    $region8: #{tpu_custom_call.1} parent=1 // loop_exit
      _
    %6848 = vsyncpa [#allocation3], 1
    %s6849 = scalar_lea.sflag [#allocation3], 1
    %6850 = vsyncpa %s6849, 1

</llo_original>
